<compile_context>
chip_gen: v5e
topology: v5e:2x2
jax: 0.10.0
libtpu: 0.0.40
codegen_flags: <defaults>
</compile_context>

<pallas_src>
import functools

import numpy as np
import jax
import jax.numpy as jnp
from jax.experimental import pallas as pl
from jax.experimental.pallas import tpu as pltpu


def _round_up(x, m):
    return ((x + m - 1) // m) * m


# ----------------------------------------------------------------------------
# Kernel
# ----------------------------------------------------------------------------
def _window_attention_kernel(x_ref, bias_ref, wqkv_ref, bqkv_ref,
                             wproj_ref, bproj_ref, *rest,
                             num_heads, head_pad, mask_mode, n_win, has_pe):
    # Unpack optional refs (order fixed by the wrapper): [mask], [pe, wproj_full], out
    idx = 0
    mask_ref = None
    if mask_mode != "none":
        mask_ref = rest[idx]; idx += 1
    pe_ref = None
    wproj_full_ref = None
    if has_pe:
        pe_ref = rest[idx]; idx += 1
        wproj_full_ref = rest[idx]; idx += 1
    o_ref = rest[idx]

    TB, N, C = x_ref.shape
    H = num_heads
    P = head_pad                       # 128-aligned per-head slot width
    CP = o_ref.shape[-1]               # 128-aligned output width
    cdt = jnp.bfloat16                 # MXU operand dtype

    # Fused QKV projection: bf16 operands, f32 accumulation on the MXU.
    x2 = x_ref[...].reshape(TB * N, C).astype(cdt)
    qkv = jnp.dot(x2, wqkv_ref[...], preferred_element_type=jnp.float32)
    qkv = (qkv + bqkv_ref[...]).astype(cdt).reshape(TB, N, 3 * H * P)

    # Additive attention mask for this tile, hoisted out of the head loop.
    # Window layout contract: windows are ordered batch-major, window-minor,
    # i.e. global window w uses mask[w % nW] (matches PyTorch's view(B_//nW, nW, ...)).
    add_mask = None
    if mask_mode == "group":           # tile covers whole nW-window group(s)
        g = TB // n_win
        add_mask = jnp.broadcast_to(mask_ref[...][None],
                                    (g, n_win, N, N)).reshape(TB, N, N)
    elif mask_mode == "slice":         # tile is a sub-block of one nW group
        nblk = n_win // TB
        start = pl.multiple_of((pl.program_id(0) % nblk) * TB, TB)
        add_mask = mask_ref[pl.ds(start, TB)]

    acc = None
    for h in range(H):                 # H is small and static
        # 128-lane-aligned slices: no relayout copies.
        qh = qkv[:, :, h * P:(h + 1) * P]
        kh = qkv[:, :, (H + h) * P:(H + h + 1) * P]
        vh = qkv[:, :, (2 * H + h) * P:(2 * H + h + 1) * P]

        # scores in f32 (scale already folded into the q weights)
        s = jnp.einsum("bnd,bmd->bnm", qh, kh,
                       preferred_element_type=jnp.float32)    # (TB, N, N)
        s = s + bias_ref[h]
        if add_mask is not None:
            s = s + add_mask

        # softmax (f32 stats, EUP reciprocal instead of a divide)
        m = jnp.max(s, axis=-1, keepdims=True)
        p = jnp.exp(s - m)
        l = jnp.sum(p, axis=-1, keepdims=True)
        p = p * pl.reciprocal(l, approx=True)

        oh = jnp.einsum("bnm,bmd->bnd", p.astype(cdt), vh,
                        preferred_element_type=jnp.float32)   # (TB, N, P)

        # head-merge folded into per-head projection blocks (no concat)
        contrib = jnp.dot(oh.astype(cdt).reshape(TB * N, P), wproj_ref[h],
                          preferred_element_type=jnp.float32)  # (TB*N, CP)
        acc = contrib if acc is None else acc + contrib

    if has_pe:
        pe2 = pe_ref[...].reshape(TB * N, C).astype(cdt)
        acc = acc + jnp.dot(pe2, wproj_full_ref[...],
                            preferred_element_type=jnp.float32)

    acc = acc + bproj_ref[...]
    o_ref[...] = acc.reshape(TB, N, CP).astype(o_ref.dtype)


# ----------------------------------------------------------------------------
# Wrapper
# ----------------------------------------------------------------------------
def _pick_tb(B_, N, nW, requested):
    """Pick windows-per-grid-step: big tiles, but keep >=2 grid steps when
    possible (v7x has 2 TensorCores) and stay compatible with the (batch, nW)
    mask layout (tb multiple of nW, or divisor of nW)."""
    if requested is not None:
        tb = max(1, int(requested))
    else:
        tb = max(1, 4096 // max(int(N), 1))      # ~4K token rows per step
    tb = min(tb, int(B_)) if B_ > 0 else 1
    if B_ >= 2:
        tb = min(tb, (B_ + 1) // 2)              # leave >= 2 grid steps
    tb = max(tb, 1)
    if nW is not None:
        if tb >= nW:
            tb = (tb // nW) * nW
        else:
            while nW % tb:
                tb -= 1
    return max(tb, 1)


def _vmem_capacity():
    try:
        info = pltpu.get_tpu_info()
        for attr in ("vmem_capacity_bytes", "vmem_bytes"):
            v = getattr(info, attr, None)
            if v:
                return int(v)
    except Exception:
        pass
    return 128 * 1024 * 1024


@functools.partial(jax.jit, static_argnames=("num_heads", "tb"))
def window_attention(x, qkv_w, qkv_b, proj_w, proj_b,
                     rel_pos_table, rel_pos_index, *,
                     num_heads, mask=None, pos_embed=None, tb=None):
    """Fused WindowAttention forward.

    x:               (B_, N, C)
    qkv_w, qkv_b:    (3C, C), (3C,)       PyTorch nn.Linear layout
    proj_w, proj_b:  (C, C), (C,)
    rel_pos_table:   ((2ws0-1)(2ws1-1)(2ws2-1), H)
    rel_pos_index:   (N, N) int32
    mask:            optional (nW, N, N)   (windows ordered batch-major)
    pos_embed:       optional (B_, N, C)
    """
    B_, N, C = x.shape
    H = num_heads
    assert C % H == 0
    hd = C // H
    scale = float(hd) ** -0.5
    P = _round_up(hd, 128)                 # lane-aligned per-head slot
    CP = _round_up(C, 128)                 # lane-dense output width
    wdt = jnp.bfloat16

    nW = None if mask is None else mask.shape[0]
    tb = _pick_tb(B_, N, nW, tb)
    B_pad = _round_up(B_, tb)
    grid = (B_pad // tb,)

    # ---- pad batch of windows so every tile is full ----
    x_in = x if B_pad == B_ else jnp.pad(x, ((0, B_pad - B_), (0, 0), (0, 0)))
    pe_in = None
    if pos_embed is not None:
        pe_in = pos_embed if B_pad == B_ else \
            jnp.pad(pos_embed, ((0, B_pad - B_), (0, 0), (0, 0)))

    # ---- weight prep: per-head, 128-lane padded, bf16, scale folded into q ----
    def split_pad(w_t, b, do_scale):
        # w_t: (C_in, C_out) columns grouped per head; b: (C_out,)
        w_t = w_t.reshape(C, H, hd)
        b = b.reshape(H, hd)
        if do_scale:
            w_t = w_t * scale
            b = b * scale
        w_t = jnp.pad(w_t, ((0, 0), (0, 0), (0, P - hd)))
        b = jnp.pad(b, ((0, 0), (0, P - hd)))
        return w_t.reshape(C, H * P), b.reshape(H * P)

    wq, bq = split_pad(qkv_w[:C].T, qkv_b[:C], True)
    wk, bk = split_pad(qkv_w[C:2 * C].T, qkv_b[C:2 * C], False)
    wv, bv = split_pad(qkv_w[2 * C:].T, qkv_b[2 * C:], False)
    wqkv_p = jnp.concatenate([wq, wk, wv], axis=1).astype(wdt)          # (C, 3HP)
    bqkv_p = jnp.concatenate([bq, bk, bv]).reshape(1, 3 * H * P).astype(jnp.float32)

    wp = proj_w.T.reshape(H, hd, C)                                     # rows per head
    wproj_h = jnp.pad(wp, ((0, 0), (0, P - hd), (0, CP - C))).astype(wdt)   # (H, P, CP)
    bproj_p = jnp.pad(proj_b, (0, CP - C)).reshape(1, CP).astype(jnp.float32)
    wproj_full = jnp.pad(proj_w.T, ((0, 0), (0, CP - C))).astype(wdt)   # (C, CP)

    # relative position bias (parameter-only gather) precomputed once
    rel_bias = jnp.take(rel_pos_table, rel_pos_index.reshape(-1), axis=0)
    rel_bias = rel_bias.reshape(N, N, H).transpose(2, 0, 1).astype(jnp.float32)

    if mask is None:
        mask_mode = "none"
    elif tb % nW == 0:
        mask_mode = "group"
    else:
        mask_mode = "slice"            # nW % tb == 0 guaranteed by _pick_tb

    # ---- operands / specs ----
    in_specs = [
        pl.BlockSpec((tb, N, C), lambda i: (i, 0, 0)),        # x tile
        pl.BlockSpec((H, N, N), lambda i: (0, 0, 0)),         # rel-pos bias (resident)
        pl.BlockSpec((C, 3 * H * P), lambda i: (0, 0)),       # Wqkv (padded, bf16)
        pl.BlockSpec((1, 3 * H * P), lambda i: (0, 0)),       # bqkv (f32)
        pl.BlockSpec((H, P, CP), lambda i: (0, 0, 0)),        # per-head Wproj blocks
        pl.BlockSpec((1, CP), lambda i: (0, 0)),              # bproj
    ]
    operands = [x_in, rel_bias, wqkv_p, bqkv_p, wproj_h, bproj_p]
    if mask is not None:
        in_specs.append(pl.BlockSpec((nW, N, N), lambda i: (0, 0, 0)))  # resident mask
        operands.append(mask.astype(jnp.float32))
    if pos_embed is not None:
        in_specs.append(pl.BlockSpec((tb, N, C), lambda i: (i, 0, 0)))  # pos_embed tile
        operands.append(pe_in)
        in_specs.append(pl.BlockSpec((C, CP), lambda i: (0, 0)))        # full Wproj for pe
        operands.append(wproj_full)
    out_specs = pl.BlockSpec((tb, N, CP), lambda i: (i, 0, 0))          # lane-dense store

    kernel = functools.partial(
        _window_attention_kernel,
        num_heads=H, head_pad=P, mask_mode=mask_mode,
        n_win=(nW or 0), has_pe=pos_embed is not None)

    # ---- generation-aware VMEM budget & cost hint ----
    itemsize = jnp.dtype(x.dtype).itemsize
    rows = tb * N
    x_tile = rows * C * itemsize
    o_tile = rows * CP * itemsize
    pe_tile = x_tile if pos_embed is not None else 0
    const_bytes = (C * 3 * H * P + H * P * CP
                   + (C * CP if pos_embed is not None else 0)) * 2
    const_bytes += (3 * H * P + CP) * 4 + H * N * N * 4
    const_bytes += (nW * N * N * 4) if mask is not None else 0
    interm = rows * 3 * H * P * 6                       # qkv f32 + bf16 copy
    interm += tb * N * _round_up(N, 128) * 4 * 3        # score / exp transients
    interm += rows * CP * 8                             # acc + head contribution
    vmem_need = 2 * (x_tile + o_tile + pe_tile) + 2 * const_bytes + interm + (4 << 20)
    vmem_limit = int(min(max(vmem_need, 16 << 20), int(0.45 * _vmem_capacity())))

    flops = B_pad * N * (2 * C * 3 * H * P
                         + H * (2 * N * P + 2 * N * P)
                         + H * 2 * P * CP
                         + (2 * C * CP if pos_embed is not None else 0))
    bytes_accessed = (B_pad * N * (C + CP)) * itemsize + const_bytes
    if pos_embed is not None:
        bytes_accessed += B_pad * N * C * itemsize
    cost = pl.CostEstimate(flops=int(flops),
                           transcendentals=int(B_pad * H * N * N),
                           bytes_accessed=int(bytes_accessed))

    out = pl.pallas_call(
        kernel,
        out_shape=jax.ShapeDtypeStruct((B_pad, N, CP), x.dtype),
        grid_spec=pltpu.PrefetchScalarGridSpec(
            num_scalar_prefetch=0,
            grid=grid,
            in_specs=in_specs,
            out_specs=out_specs),
        compiler_params=pltpu.CompilerParams(
            dimension_semantics=("parallel",),
            vmem_limit_bytes=vmem_limit),
        cost_estimate=cost,
    )(*operands)

    if B_pad != B_ or CP != C:
        out = out[:B_, :, :C]
    return out


# ----------------------------------------------------------------------------
# Helpers / reference
# ----------------------------------------------------------------------------
def _make_relative_position_index(window_size):
    """Exactly mirrors the PyTorch buffer construction (incl. its multipliers)."""
    ws0, ws1, ws2 = window_size
    coords = np.stack(np.meshgrid(np.arange(ws0), np.arange(ws1),
                                  np.arange(ws2), indexing="ij"))
    coords_flatten = coords.reshape(3, -1)
    rel = coords_flatten[:, :, None] - coords_flatten[:, None, :]
    rel = rel.transpose(1, 2, 0).astype(np.int64)
    rel[:, :, 0] += ws0 - 1
    rel[:, :, 1] += ws1 - 1
    rel[:, :, 2] += ws2 - 1
    rel[:, :, 0] *= 3 * ws1 - 1
    rel[:, :, 1] *= 2 * ws1 - 1
    return jnp.asarray(rel.sum(-1), dtype=jnp.int32)


def _reference(x, qkv_w, qkv_b, proj_w, proj_b, rel_table, rel_index,
               num_heads, mask=None, pos_embed=None):
    """Pure-JAX f32 reference mirroring the PyTorch forward (eval mode)."""
    B_, N, C = x.shape
    H = num_heads
    hd = C // H
    scale = hd ** (-0.5)
    xf = x.astype(jnp.float32)
    qkv = jnp.einsum("bnc,oc->bno", xf, qkv_w.astype(jnp.float32)) + qkv_b
    qkv = qkv.reshape(B_, N, 3, H, hd).transpose(2, 0, 3, 1, 4)
    q, k, v = qkv[0] * scale, qkv[1], qkv[2]
    attn = jnp.einsum("bhnd,bhmd->bhnm", q, k)
    rel_bias = rel_table[rel_index.reshape(-1)].reshape(N, N, H).transpose(2, 0, 1)
    attn = attn + rel_bias[None].astype(jnp.float32)
    if mask is not None:
        nW = mask.shape[0]
        attn = attn.reshape(B_ // nW, nW, H, N, N) \
            + mask[None, :, None].astype(jnp.float32)
        attn = attn.reshape(B_, H, N, N)
    attn = jax.nn.softmax(attn, axis=-1)
    out = jnp.einsum("bhnm,bhmd->bhnd", attn, v)
    out = out.transpose(0, 2, 1, 3).reshape(B_, N, C)
    if pos_embed is not None:
        out = out + pos_embed.astype(jnp.float32)
    out = jnp.einsum("bnc,oc->bno", out, proj_w.astype(jnp.float32)) + proj_b
    return out.astype(x.dtype)


# ----------------------------------------------------------------------------
# Demo / self-test
# ----------------------------------------------------------------------------
if __name__ == "__main__":
    key = jax.random.PRNGKey(0)
    window_size = (4, 4, 4)
    N = window_size[0] * window_size[1] * window_size[2]   # 64 tokens / window
    C = 96
    num_heads = 3
    batch = 2
    nW = 4                                                  # windows per batch
    B_ = batch * nW                                         # 8 windows total

    ks = jax.random.split(key, 8)
    x = jax.random.normal(ks[0], (B_, N, C), dtype=jnp.float32)
    qkv_w = 0.05 * jax.random.normal(ks[1], (3 * C, C), dtype=jnp.float32)
    qkv_b = 0.05 * jax.random.normal(ks[2], (3 * C,), dtype=jnp.float32)
    proj_w = 0.05 * jax.random.normal(ks[3], (C, C), dtype=jnp.float32)
    proj_b = 0.05 * jax.random.normal(ks[4], (C,), dtype=jnp.float32)
    n_rel = ((2 * window_size[0] - 1) * (2 * window_size[1] - 1)
             * (2 * window_size[2] - 1))
    rel_table = 0.02 * jax.random.normal(ks[5], (n_rel, num_heads),
                                         dtype=jnp.float32)
    rel_index = _make_relative_position_index(window_size)
    # shifted-window style additive mask (0 / -100)
    mask = jnp.where(jax.random.bernoulli(ks[6], 0.25, (nW, N, N)),
                     -100.0, 0.0).astype(jnp.float32)
    pos_embed = 0.1 * jax.random.normal(ks[7], (B_, N, C), dtype=jnp.float32)

    # bf16 MXU operands (f32 accumulation) + approx reciprocal -> loosened tols
    ATOL = RTOL = 5e-2

    # --- 1) shifted-window path: mask + pos_embed (group-mask mode) ---
    out = jax.block_until_ready(
        window_attention(x, qkv_w, qkv_b, proj_w, proj_b, rel_table,
                         rel_index, num_heads=num_heads,
                         mask=mask, pos_embed=pos_embed))
    ref = _reference(x, qkv_w, qkv_b, proj_w, proj_b, rel_table, rel_index,
                     num_heads, mask=mask, pos_embed=pos_embed)
    assert out.shape == (B_, N, C), out.shape
    assert jnp.allclose(out, ref, atol=ATOL, rtol=RTOL), \
        float(jnp.max(jnp.abs(out - ref)))

    # --- 2) plain path: no mask, no pos_embed ---
    out2 = jax.block_until_ready(
        window_attention(x, qkv_w, qkv_b, proj_w, proj_b, rel_table,
                         rel_index, num_heads=num_heads))
    ref2 = _reference(x, qkv_w, qkv_b, proj_w, proj_b, rel_table, rel_index,
                      num_heads)
    assert jnp.allclose(out2, ref2, atol=ATOL, rtol=RTOL), \
        float(jnp.max(jnp.abs(out2 - ref2)))

    # --- 3) mask with a tile smaller than nW (slice-mask mode) ---
    out3 = jax.block_until_ready(
        window_attention(x, qkv_w, qkv_b, proj_w, proj_b, rel_table,
                         rel_index, num_heads=num_heads, mask=mask, tb=2))
    ref3 = _reference(x, qkv_w, qkv_b, proj_w, proj_b, rel_table, rel_index,
                      num_heads, mask=mask)
    assert jnp.allclose(out3, ref3, atol=ATOL, rtol=RTOL), \
        float(jnp.max(jnp.abs(out3 - ref3)))

    print("KERNEL_OK")
</pallas_src>

<mosaic_0001>
module attributes {stable_mosaic.version = 11 : i64} {
  func.func @_window_attention_kernel(%arg0: i32, %arg1: memref<4x64x96xf32, #tpu.memory_space<vmem>>, %arg2: memref<3x64x64xf32, #tpu.memory_space<vmem>>, %arg3: memref<96x1152xbf16, #tpu.memory_space<vmem>>, %arg4: memref<1x1152xf32, #tpu.memory_space<vmem>>, %arg5: memref<3x128x128xbf16, #tpu.memory_space<vmem>>, %arg6: memref<1x128xf32, #tpu.memory_space<vmem>>, %arg7: memref<4x64x64xf32, #tpu.memory_space<vmem>>, %arg8: memref<4x64x96xf32, #tpu.memory_space<vmem>>, %arg9: memref<96x128xbf16, #tpu.memory_space<vmem>>, %arg10: memref<4x64x128xf32, #tpu.memory_space<vmem>>) attributes {dimension_semantics = [#tpu.dimension_semantics<parallel>], iteration_bounds = array<i64: 2>, scalar_prefetch = 0 : i64, scratch_operands = 0 : i64, tpu.core_type = #tpu.core_type<tc>, window_params = [{transform_indices = @transform_0, window_bounds = array<i64: 4, 64, 96>}, {pipeline_mode = #tpu.pipeline_mode<synchronous>, transform_indices = @transform_1, window_bounds = array<i64: 3, 64, 64>}, {pipeline_mode = #tpu.pipeline_mode<synchronous>, transform_indices = @transform_2, window_bounds = array<i64: 96, 1152>}, {pipeline_mode = #tpu.pipeline_mode<synchronous>, transform_indices = @transform_3, window_bounds = array<i64: 1, 1152>}, {pipeline_mode = #tpu.pipeline_mode<synchronous>, transform_indices = @transform_4, window_bounds = array<i64: 3, 128, 128>}, {pipeline_mode = #tpu.pipeline_mode<synchronous>, transform_indices = @transform_5, window_bounds = array<i64: 1, 128>}, {pipeline_mode = #tpu.pipeline_mode<synchronous>, transform_indices = @transform_6, window_bounds = array<i64: 4, 64, 64>}, {transform_indices = @transform_7, window_bounds = array<i64: 4, 64, 96>}, {pipeline_mode = #tpu.pipeline_mode<synchronous>, transform_indices = @transform_8, window_bounds = array<i64: 96, 128>}, {transform_indices = @transform_9, window_bounds = array<i64: 4, 64, 128>}]} {
    %c0 = arith.constant 0 : index
    %c0_0 = arith.constant 0 : index
    %c0_1 = arith.constant 0 : index
    %0 = vector.load %arg1[%c0, %c0_0, %c0_1] : memref<4x64x96xf32, #tpu.memory_space<vmem>>, vector<4x64x96xf32>
    %1 = vector.shape_cast %0 : vector<4x64x96xf32> to vector<256x96xf32>
    %2 = arith.truncf %1 : vector<256x96xf32> to vector<256x96xbf16>
    %c0_2 = arith.constant 0 : index
    %c0_3 = arith.constant 0 : index
    %3 = vector.load %arg3[%c0_2, %c0_3] : memref<96x1152xbf16, #tpu.memory_space<vmem>>, vector<96x1152xbf16>
    %cst = arith.constant dense<0.000000e+00> : vector<256x1152xf32>
    %4 = tpu.matmul %2, %3, %cst {dimension_numbers = #tpu.dot_dimension_numbers<[1], [0], [0], [1], [0, 0, 1, 1], [], []>} : vector<256x96xbf16>, vector<96x1152xbf16>, vector<256x1152xf32> -> vector<256x1152xf32>
    %c0_4 = arith.constant 0 : index
    %c0_5 = arith.constant 0 : index
    %5 = vector.load %arg4[%c0_4, %c0_5] : memref<1x1152xf32, #tpu.memory_space<vmem>>, vector<1x1152xf32>
    %6 = vector.broadcast %5 : vector<1x1152xf32> to vector<256x1152xf32>
    %7 = arith.addf %4, %6 : vector<256x1152xf32>
    %8 = arith.truncf %7 : vector<256x1152xf32> to vector<256x1152xbf16>
    %9 = vector.shape_cast %8 : vector<256x1152xbf16> to vector<4x64x1152xbf16>
    %c0_6 = arith.constant 0 : index
    %c0_7 = arith.constant 0 : index
    %c0_8 = arith.constant 0 : index
    %10 = vector.load %arg7[%c0_6, %c0_7, %c0_8] : memref<4x64x64xf32, #tpu.memory_space<vmem>>, vector<4x64x64xf32>
    %11 = vector.shape_cast %10 : vector<4x64x64xf32> to vector<1x4x64x64xf32>
    %12 = vector.shape_cast %11 : vector<1x4x64x64xf32> to vector<4x64x64xf32>
    %13 = vector.extract_strided_slice %9 {offsets = [0, 0, 0], sizes = [4, 64, 128], strides = [1, 1, 1]} : vector<4x64x1152xbf16> to vector<4x64x128xbf16>
    %14 = vector.extract_strided_slice %9 {offsets = [0, 0, 384], sizes = [4, 64, 128], strides = [1, 1, 1]} : vector<4x64x1152xbf16> to vector<4x64x128xbf16>
    %15 = vector.extract_strided_slice %9 {offsets = [0, 0, 768], sizes = [4, 64, 128], strides = [1, 1, 1]} : vector<4x64x1152xbf16> to vector<4x64x128xbf16>
    "tpu.trace_start"() <{level = 10 : i32, message = "bnd,bmd->bnm"}> : () -> ()
    %cst_9 = arith.constant dense<0.000000e+00> : vector<4x64x64xf32>
    %16 = tpu.matmul %13, %14, %cst_9 {dimension_numbers = #tpu.dot_dimension_numbers<[2], [2], [1], [1], [0, 0, 0, 1, 1, 1], [0], [0]>} : vector<4x64x128xbf16>, vector<4x64x128xbf16>, vector<4x64x64xf32> -> vector<4x64x64xf32>
    "tpu.trace_stop"() : () -> ()
    %c0_10 = arith.constant 0 : index
    %c0_11 = arith.constant 0 : index
    %c0_12 = arith.constant 0 : index
    %17 = vector.load %arg2[%c0_10, %c0_11, %c0_12] : memref<3x64x64xf32, #tpu.memory_space<vmem>>, vector<1x64x64xf32>
    %18 = vector.shape_cast %17 : vector<1x64x64xf32> to vector<64x64xf32>
    %19 = vector.shape_cast %18 : vector<64x64xf32> to vector<1x64x64xf32>
    %20 = vector.broadcast %19 : vector<1x64x64xf32> to vector<4x64x64xf32>
    %21 = arith.addf %16, %20 : vector<4x64x64xf32>
    %22 = arith.addf %21, %12 : vector<4x64x64xf32>
    %cst_13 = arith.constant dense<0xFF800000> : vector<4x64xf32>
    %23 = vector.multi_reduction <maximumf>, %22, %cst_13 [2] : vector<4x64x64xf32> to vector<4x64xf32>
    %24 = vector.shape_cast %23 : vector<4x64xf32> to vector<4x64x1xf32>
    %25 = vector.broadcast %24 : vector<4x64x1xf32> to vector<4x64x64xf32>
    %26 = arith.subf %22, %25 : vector<4x64x64xf32>
    %27 = math.exp %26 : vector<4x64x64xf32>
    %cst_14 = arith.constant dense<0.000000e+00> : vector<4x64xf32>
    %28 = vector.multi_reduction <add>, %27, %cst_14 [2] : vector<4x64x64xf32> to vector<4x64xf32>
    %29 = vector.shape_cast %28 : vector<4x64xf32> to vector<4x64x1xf32>
    %30 = tpu.reciprocal %29 {approx = true} : vector<4x64x1xf32> -> vector<4x64x1xf32>
    %31 = vector.broadcast %30 : vector<4x64x1xf32> to vector<4x64x64xf32>
    %32 = arith.mulf %27, %31 : vector<4x64x64xf32>
    %33 = arith.truncf %32 : vector<4x64x64xf32> to vector<4x64x64xbf16>
    "tpu.trace_start"() <{level = 10 : i32, message = "bnm,bmd->bnd"}> : () -> ()
    %cst_15 = arith.constant dense<0.000000e+00> : vector<4x64x128xf32>
    %34 = tpu.matmul %33, %15, %cst_15 {dimension_numbers = #tpu.dot_dimension_numbers<[2], [1], [1], [2], [0, 0, 0, 1, 1, 2], [0], [0]>} : vector<4x64x64xbf16>, vector<4x64x128xbf16>, vector<4x64x128xf32> -> vector<4x64x128xf32>
    "tpu.trace_stop"() : () -> ()
    %35 = arith.truncf %34 : vector<4x64x128xf32> to vector<4x64x128xbf16>
    %36 = vector.shape_cast %35 : vector<4x64x128xbf16> to vector<256x128xbf16>
    %c0_16 = arith.constant 0 : index
    %c0_17 = arith.constant 0 : index
    %c0_18 = arith.constant 0 : index
    %37 = vector.load %arg5[%c0_16, %c0_17, %c0_18] : memref<3x128x128xbf16, #tpu.memory_space<vmem>>, vector<1x128x128xbf16>
    %38 = vector.shape_cast %37 : vector<1x128x128xbf16> to vector<128x128xbf16>
    %cst_19 = arith.constant dense<0.000000e+00> : vector<256x128xf32>
    %39 = tpu.matmul %36, %38, %cst_19 {dimension_numbers = #tpu.dot_dimension_numbers<[1], [0], [0], [1], [0, 0, 1, 1], [], []>} : vector<256x128xbf16>, vector<128x128xbf16>, vector<256x128xf32> -> vector<256x128xf32>
    %40 = vector.extract_strided_slice %9 {offsets = [0, 0, 128], sizes = [4, 64, 128], strides = [1, 1, 1]} : vector<4x64x1152xbf16> to vector<4x64x128xbf16>
    %41 = vector.extract_strided_slice %9 {offsets = [0, 0, 512], sizes = [4, 64, 128], strides = [1, 1, 1]} : vector<4x64x1152xbf16> to vector<4x64x128xbf16>
    %42 = vector.extract_strided_slice %9 {offsets = [0, 0, 896], sizes = [4, 64, 128], strides = [1, 1, 1]} : vector<4x64x1152xbf16> to vector<4x64x128xbf16>
    "tpu.trace_start"() <{level = 10 : i32, message = "bnd,bmd->bnm"}> : () -> ()
    %cst_20 = arith.constant dense<0.000000e+00> : vector<4x64x64xf32>
    %43 = tpu.matmul %40, %41, %cst_20 {dimension_numbers = #tpu.dot_dimension_numbers<[2], [2], [1], [1], [0, 0, 0, 1, 1, 1], [0], [0]>} : vector<4x64x128xbf16>, vector<4x64x128xbf16>, vector<4x64x64xf32> -> vector<4x64x64xf32>
    "tpu.trace_stop"() : () -> ()
    %c1 = arith.constant 1 : index
    %c0_21 = arith.constant 0 : index
    %c0_22 = arith.constant 0 : index
    %44 = vector.load %arg2[%c1, %c0_21, %c0_22] : memref<3x64x64xf32, #tpu.memory_space<vmem>>, vector<1x64x64xf32>
    %45 = vector.shape_cast %44 : vector<1x64x64xf32> to vector<64x64xf32>
    %46 = vector.shape_cast %45 : vector<64x64xf32> to vector<1x64x64xf32>
    %47 = vector.broadcast %46 : vector<1x64x64xf32> to vector<4x64x64xf32>
    %48 = arith.addf %43, %47 : vector<4x64x64xf32>
    %49 = arith.addf %48, %12 : vector<4x64x64xf32>
    %cst_23 = arith.constant dense<0xFF800000> : vector<4x64xf32>
    %50 = vector.multi_reduction <maximumf>, %49, %cst_23 [2] : vector<4x64x64xf32> to vector<4x64xf32>
    %51 = vector.shape_cast %50 : vector<4x64xf32> to vector<4x64x1xf32>
    %52 = vector.broadcast %51 : vector<4x64x1xf32> to vector<4x64x64xf32>
    %53 = arith.subf %49, %52 : vector<4x64x64xf32>
    %54 = math.exp %53 : vector<4x64x64xf32>
    %cst_24 = arith.constant dense<0.000000e+00> : vector<4x64xf32>
    %55 = vector.multi_reduction <add>, %54, %cst_24 [2] : vector<4x64x64xf32> to vector<4x64xf32>
    %56 = vector.shape_cast %55 : vector<4x64xf32> to vector<4x64x1xf32>
    %57 = tpu.reciprocal %56 {approx = true} : vector<4x64x1xf32> -> vector<4x64x1xf32>
    %58 = vector.broadcast %57 : vector<4x64x1xf32> to vector<4x64x64xf32>
    %59 = arith.mulf %54, %58 : vector<4x64x64xf32>
    %60 = arith.truncf %59 : vector<4x64x64xf32> to vector<4x64x64xbf16>
    "tpu.trace_start"() <{level = 10 : i32, message = "bnm,bmd->bnd"}> : () -> ()
    %cst_25 = arith.constant dense<0.000000e+00> : vector<4x64x128xf32>
    %61 = tpu.matmul %60, %42, %cst_25 {dimension_numbers = #tpu.dot_dimension_numbers<[2], [1], [1], [2], [0, 0, 0, 1, 1, 2], [0], [0]>} : vector<4x64x64xbf16>, vector<4x64x128xbf16>, vector<4x64x128xf32> -> vector<4x64x128xf32>
    "tpu.trace_stop"() : () -> ()
    %62 = arith.truncf %61 : vector<4x64x128xf32> to vector<4x64x128xbf16>
    %63 = vector.shape_cast %62 : vector<4x64x128xbf16> to vector<256x128xbf16>
    %c1_26 = arith.constant 1 : index
    %c0_27 = arith.constant 0 : index
    %c0_28 = arith.constant 0 : index
    %64 = vector.load %arg5[%c1_26, %c0_27, %c0_28] : memref<3x128x128xbf16, #tpu.memory_space<vmem>>, vector<1x128x128xbf16>
    %65 = vector.shape_cast %64 : vector<1x128x128xbf16> to vector<128x128xbf16>
    %cst_29 = arith.constant dense<0.000000e+00> : vector<256x128xf32>
    %66 = tpu.matmul %63, %65, %cst_29 {dimension_numbers = #tpu.dot_dimension_numbers<[1], [0], [0], [1], [0, 0, 1, 1], [], []>} : vector<256x128xbf16>, vector<128x128xbf16>, vector<256x128xf32> -> vector<256x128xf32>
    %67 = arith.addf %39, %66 : vector<256x128xf32>
    %68 = vector.extract_strided_slice %9 {offsets = [0, 0, 256], sizes = [4, 64, 128], strides = [1, 1, 1]} : vector<4x64x1152xbf16> to vector<4x64x128xbf16>
    %69 = vector.extract_strided_slice %9 {offsets = [0, 0, 640], sizes = [4, 64, 128], strides = [1, 1, 1]} : vector<4x64x1152xbf16> to vector<4x64x128xbf16>
    %70 = vector.extract_strided_slice %9 {offsets = [0, 0, 1024], sizes = [4, 64, 128], strides = [1, 1, 1]} : vector<4x64x1152xbf16> to vector<4x64x128xbf16>
    "tpu.trace_start"() <{level = 10 : i32, message = "bnd,bmd->bnm"}> : () -> ()
    %cst_30 = arith.constant dense<0.000000e+00> : vector<4x64x64xf32>
    %71 = tpu.matmul %68, %69, %cst_30 {dimension_numbers = #tpu.dot_dimension_numbers<[2], [2], [1], [1], [0, 0, 0, 1, 1, 1], [0], [0]>} : vector<4x64x128xbf16>, vector<4x64x128xbf16>, vector<4x64x64xf32> -> vector<4x64x64xf32>
    "tpu.trace_stop"() : () -> ()
    %c2 = arith.constant 2 : index
    %c0_31 = arith.constant 0 : index
    %c0_32 = arith.constant 0 : index
    %72 = vector.load %arg2[%c2, %c0_31, %c0_32] : memref<3x64x64xf32, #tpu.memory_space<vmem>>, vector<1x64x64xf32>
    %73 = vector.shape_cast %72 : vector<1x64x64xf32> to vector<64x64xf32>
    %74 = vector.shape_cast %73 : vector<64x64xf32> to vector<1x64x64xf32>
    %75 = vector.broadcast %74 : vector<1x64x64xf32> to vector<4x64x64xf32>
    %76 = arith.addf %71, %75 : vector<4x64x64xf32>
    %77 = arith.addf %76, %12 : vector<4x64x64xf32>
    %cst_33 = arith.constant dense<0xFF800000> : vector<4x64xf32>
    %78 = vector.multi_reduction <maximumf>, %77, %cst_33 [2] : vector<4x64x64xf32> to vector<4x64xf32>
    %79 = vector.shape_cast %78 : vector<4x64xf32> to vector<4x64x1xf32>
    %80 = vector.broadcast %79 : vector<4x64x1xf32> to vector<4x64x64xf32>
    %81 = arith.subf %77, %80 : vector<4x64x64xf32>
    %82 = math.exp %81 : vector<4x64x64xf32>
    %cst_34 = arith.constant dense<0.000000e+00> : vector<4x64xf32>
    %83 = vector.multi_reduction <add>, %82, %cst_34 [2] : vector<4x64x64xf32> to vector<4x64xf32>
    %84 = vector.shape_cast %83 : vector<4x64xf32> to vector<4x64x1xf32>
    %85 = tpu.reciprocal %84 {approx = true} : vector<4x64x1xf32> -> vector<4x64x1xf32>
    %86 = vector.broadcast %85 : vector<4x64x1xf32> to vector<4x64x64xf32>
    %87 = arith.mulf %82, %86 : vector<4x64x64xf32>
    %88 = arith.truncf %87 : vector<4x64x64xf32> to vector<4x64x64xbf16>
    "tpu.trace_start"() <{level = 10 : i32, message = "bnm,bmd->bnd"}> : () -> ()
    %cst_35 = arith.constant dense<0.000000e+00> : vector<4x64x128xf32>
    %89 = tpu.matmul %88, %70, %cst_35 {dimension_numbers = #tpu.dot_dimension_numbers<[2], [1], [1], [2], [0, 0, 0, 1, 1, 2], [0], [0]>} : vector<4x64x64xbf16>, vector<4x64x128xbf16>, vector<4x64x128xf32> -> vector<4x64x128xf32>
    "tpu.trace_stop"() : () -> ()
    %90 = arith.truncf %89 : vector<4x64x128xf32> to vector<4x64x128xbf16>
    %91 = vector.shape_cast %90 : vector<4x64x128xbf16> to vector<256x128xbf16>
    %c2_36 = arith.constant 2 : index
    %c0_37 = arith.constant 0 : index
    %c0_38 = arith.constant 0 : index
    %92 = vector.load %arg5[%c2_36, %c0_37, %c0_38] : memref<3x128x128xbf16, #tpu.memory_space<vmem>>, vector<1x128x128xbf16>
    %93 = vector.shape_cast %92 : vector<1x128x128xbf16> to vector<128x128xbf16>
    %cst_39 = arith.constant dense<0.000000e+00> : vector<256x128xf32>
    %94 = tpu.matmul %91, %93, %cst_39 {dimension_numbers = #tpu.dot_dimension_numbers<[1], [0], [0], [1], [0, 0, 1, 1], [], []>} : vector<256x128xbf16>, vector<128x128xbf16>, vector<256x128xf32> -> vector<256x128xf32>
    %95 = arith.addf %67, %94 : vector<256x128xf32>
    %c0_40 = arith.constant 0 : index
    %c0_41 = arith.constant 0 : index
    %c0_42 = arith.constant 0 : index
    %96 = vector.load %arg8[%c0_40, %c0_41, %c0_42] : memref<4x64x96xf32, #tpu.memory_space<vmem>>, vector<4x64x96xf32>
    %97 = vector.shape_cast %96 : vector<4x64x96xf32> to vector<256x96xf32>
    %98 = arith.truncf %97 : vector<256x96xf32> to vector<256x96xbf16>
    %c0_43 = arith.constant 0 : index
    %c0_44 = arith.constant 0 : index
    %99 = vector.load %arg9[%c0_43, %c0_44] : memref<96x128xbf16, #tpu.memory_space<vmem>>, vector<96x128xbf16>
    %cst_45 = arith.constant dense<0.000000e+00> : vector<256x128xf32>
    %100 = tpu.matmul %98, %99, %cst_45 {dimension_numbers = #tpu.dot_dimension_numbers<[1], [0], [0], [1], [0, 0, 1, 1], [], []>} : vector<256x96xbf16>, vector<96x128xbf16>, vector<256x128xf32> -> vector<256x128xf32>
    %101 = arith.addf %95, %100 : vector<256x128xf32>
    %c0_46 = arith.constant 0 : index
    %c0_47 = arith.constant 0 : index
    %102 = vector.load %arg6[%c0_46, %c0_47] : memref<1x128xf32, #tpu.memory_space<vmem>>, vector<1x128xf32>
    %103 = vector.broadcast %102 : vector<1x128xf32> to vector<256x128xf32>
    %104 = arith.addf %101, %103 : vector<256x128xf32>
    %105 = vector.shape_cast %104 : vector<256x128xf32> to vector<4x64x128xf32>
    %c0_48 = arith.constant 0 : index
    %c0_49 = arith.constant 0 : index
    %c0_50 = arith.constant 0 : index
    %106 = vector.load %arg10[%c0_48, %c0_49, %c0_50] : memref<4x64x128xf32, #tpu.memory_space<vmem>>, vector<4x64x128xf32>
    tpu.vector_store %arg10[%c0_48, %c0_49, %c0_50], %105 {strides = array<i32>} : memref<4x64x128xf32, #tpu.memory_space<vmem>>, vector<4x64x128xf32>,
    return
  }
  func.func @transform_0(%arg0: i32) -> (i32, i32, i32) {
    %c0_i32 = arith.constant 0 : i32
    %c0_i32_0 = arith.constant 0 : i32
    %c0_i32_1 = arith.constant 0 : i32
    return %arg0, %c0_i32, %c0_i32_0 : i32, i32, i32
  }
  func.func @transform_1(%arg0: i32) -> (i32, i32, i32) {
    %c0_i32 = arith.constant 0 : i32
    %c0_i32_0 = arith.constant 0 : i32
    %c0_i32_1 = arith.constant 0 : i32
    %c0_i32_2 = arith.constant 0 : i32
    return %c0_i32, %c0_i32_0, %c0_i32_1 : i32, i32, i32
  }
  func.func @transform_2(%arg0: i32) -> (i32, i32) {
    %c0_i32 = arith.constant 0 : i32
    %c0_i32_0 = arith.constant 0 : i32
    %c0_i32_1 = arith.constant 0 : i32
    return %c0_i32, %c0_i32_0 : i32, i32
  }
  func.func @transform_3(%arg0: i32) -> (i32, i32) {
    %c0_i32 = arith.constant 0 : i32
    %c0_i32_0 = arith.constant 0 : i32
    %c0_i32_1 = arith.constant 0 : i32
    return %c0_i32, %c0_i32_0 : i32, i32
  }
  func.func @transform_4(%arg0: i32) -> (i32, i32, i32) {
    %c0_i32 = arith.constant 0 : i32
    %c0_i32_0 = arith.constant 0 : i32
    %c0_i32_1 = arith.constant 0 : i32
    %c0_i32_2 = arith.constant 0 : i32
    return %c0_i32, %c0_i32_0, %c0_i32_1 : i32, i32, i32
  }
  func.func @transform_5(%arg0: i32) -> (i32, i32) {
    %c0_i32 = arith.constant 0 : i32
    %c0_i32_0 = arith.constant 0 : i32
    %c0_i32_1 = arith.constant 0 : i32
    return %c0_i32, %c0_i32_0 : i32, i32
  }
  func.func @transform_6(%arg0: i32) -> (i32, i32, i32) {
    %c0_i32 = arith.constant 0 : i32
    %c0_i32_0 = arith.constant 0 : i32
    %c0_i32_1 = arith.constant 0 : i32
    %c0_i32_2 = arith.constant 0 : i32
    return %c0_i32, %c0_i32_0, %c0_i32_1 : i32, i32, i32
  }
  func.func @transform_7(%arg0: i32) -> (i32, i32, i32) {
    %c0_i32 = arith.constant 0 : i32
    %c0_i32_0 = arith.constant 0 : i32
    %c0_i32_1 = arith.constant 0 : i32
    return %arg0, %c0_i32, %c0_i32_0 : i32, i32, i32
  }
  func.func @transform_8(%arg0: i32) -> (i32, i32) {
    %c0_i32 = arith.constant 0 : i32
    %c0_i32_0 = arith.constant 0 : i32
    %c0_i32_1 = arith.constant 0 : i32
    return %c0_i32, %c0_i32_0 : i32, i32
  }
  func.func @transform_9(%arg0: i32) -> (i32, i32, i32) {
    %c0_i32 = arith.constant 0 : i32
    %c0_i32_0 = arith.constant 0 : i32
    %c0_i32_1 = arith.constant 0 : i32
    return %arg0, %c0_i32, %c0_i32_0 : i32, i32, i32
  }
}

</mosaic_0001>

<llo_original>
// kernel: window_attention.1
$region0: #{window_attention.1}
  #allocation0 [shape = 'u32[]', space=smem, size = 0x4, offset = 0x4, fixed_abs, tag = 'smem constant byte address 0x4 - core index']
  #allocation1 [shape = 'u32[72,128]{1,0:T(1,128)}', space=vmem, size = 0x9000, scoped, tag = 'internal scratch']
  %s0 = inlined_call_operand.vmem [shape: f32[8,64,96], index: 0, kind: input, shape index: {}]
  %s1 = inlined_call_operand.vmem [shape: f32[3,64,64], index: 1, kind: input, shape index: {}]
  %s2 = inlined_call_operand.vmem [shape: bf16[96,1152], index: 2, kind: input, shape index: {}]
  %s3 = inlined_call_operand.vmem [shape: f32[1,1152], index: 3, kind: input, shape index: {}]
  %s4 = inlined_call_operand.vmem [shape: bf16[3,128,128], index: 4, kind: input, shape index: {}]
  %s5 = inlined_call_operand.vmem [shape: f32[1,128], index: 5, kind: input, shape index: {}]
  %s6 = inlined_call_operand.vmem [shape: f32[4,64,64], index: 6, kind: input, shape index: {}]
  %s7 = inlined_call_operand.vmem [shape: f32[8,64,96], index: 7, kind: input, shape index: {}]
  %s8 = inlined_call_operand.vmem [shape: bf16[96,128], index: 8, kind: input, shape index: {}]
  %s9 = inlined_call_operand.hbm [shape: f32[8,64,128], index: 9, kind: output, shape index: {}]
  %s10 = sld [smem:[#allocation0]]
  $region69: #{window_attention.1} parent=0
    _
  %s12 = ssub.s32 1, %s10
  %s13 = scalar_select 0, %s12, %s10
  $region1: #{window_attention.1} parent=0
    #allocation2 [shape = 'u8[262144]{0}', space=vmem, size = 0x40000, scoped, tag = 'output window, operand 0']
    #allocation3 [shape = 's32[2]{0}', space=sflag, size = 0x8, scoped, tag = 'scoped memory for window_attention.1']
    %14 = vsyncpa [#allocation3], 0
    %s15 = scalar_lea.sflag [#allocation3], 1
    %16 = vsyncpa %s15, 0
    loop: start=0, step=1, limit=4
    $region2: #{window_attention.1} parent=1 // loop_pre_header
      _
    $region3: #{window_attention.1} parent=1 // loop_header
      %s18 = sphi 0, %s22
      %p19 = scmp.ge.s32.totalorder %s18, 4
      %s28 = sphi 0, %s30
      %s31 = sphi 0, %s28
      %s32 = sphi 0, %s31
      %s48 = sphi 0, %s32
      %s52 = sphi 0, %s52
      %s54 = sphi 0, %s52
      %s55 = sphi 0, %s54
      %s69 = sphi 0, %s55
      %s73 = sphi 0, %s73
      %s75 = sphi 0, %s73
      %s76 = sphi 0, %s75
      %s90 = sphi 0, %s76
      %s94 = sphi 0, %s94
      %s96 = sphi 0, %s94
      %s97 = sphi 0, %s96
      %s111 = sphi 0, %s97
      %s115 = sphi 0, %s115
      %s117 = sphi 0, %s115
      %s118 = sphi 0, %s117
      %s132 = sphi 0, %s118
      %s136 = sphi 0, %s136
      %s138 = sphi 0, %s136
      %s139 = sphi 0, %s138
      %s153 = sphi 0, %s139
      %s157 = sphi 0, %s157
      %s159 = sphi 0, %s157
      %s160 = sphi 0, %s159
      %s174 = sphi 0, %s160
      %s180 = sphi 0, %s182
      %s183 = sphi 0, %s180
      %s184 = sphi 0, %s183
      %s200 = sphi 0, %s184
      %s204 = sphi 0, %s204
      %s206 = sphi 0, %s204
      %s207 = sphi 0, %s206
      %s221 = sphi 0, %s207
      %s227 = sphi 0, %s229
      %s230 = sphi 0, %s227
      %s231 = sphi 0, %s230
      %s247 = sphi 0, %s231
    $region4: #{window_attention.1} parent=1 // loop_header_branch
      %21 = sbr.rel (%p19) target = $region8
    $region5: #{window_attention.1} parent=1 // loop_body
      %s23 = ssub.s32 %s18, 1
      %s24 = ssub.s32 %s18, 2
      %s25 = sadd.s32 %s18, 1
      %s26 = ssub.s32 %s18, %s25
      %p27 = scmp.eq.s32.totalorder %s26, 0
      %s29 = sadd.s32 %s28, 1
      %s30 = scalar_select %p27, %s28, %s29
      %p33 = pneg %p27
      %p34 = scmp.eq.s32.totalorder %s18, 1
      %p35 = por %p33, %p34
      %p36 = scmp.ne.s32.totalorder %s28, %s31
      %p37 = scmp.eq.s32.totalorder %s18, 0
      %p38 = por %p36, %p37
      %p39 = scmp.ne.s32.totalorder %s28, %s31
      %p40 = scmp.eq.s32.totalorder %s23, 1
      %p41 = por %p39, %p40
      %p42 = scmp.ne.s32.totalorder %s31, %s32
      %p43 = scmp.eq.s32.totalorder %s23, 0
      %p44 = por %p42, %p43
      %p45 = scmp.ne.s32.totalorder %s31, %s32
      %p46 = scmp.eq.s32.totalorder %s24, 1
      %p47 = por %p45, %p46
      %p49 = scmp.ne.s32.totalorder %s32, %s48
      %p50 = scmp.eq.s32.totalorder %s24, 0
      %p51 = por %p49, %p50
      %s53 = sadd.s32 %s52, 1
      %p56 = scmp.eq.s32.totalorder %s18, 1
      %p57 = scmp.ne.s32.totalorder %s52, %s54
      %p58 = scmp.eq.s32.totalorder %s18, 0
      %p59 = por %p57, %p58
      %p60 = scmp.ne.s32.totalorder %s52, %s54
      %p61 = scmp.eq.s32.totalorder %s23, 1
      %p62 = por %p60, %p61
      %p63 = scmp.ne.s32.totalorder %s54, %s55
      %p64 = scmp.eq.s32.totalorder %s23, 0
      %p65 = por %p63, %p64
      %p66 = scmp.ne.s32.totalorder %s54, %s55
      %p67 = scmp.eq.s32.totalorder %s24, 1
      %p68 = por %p66, %p67
      %p70 = scmp.ne.s32.totalorder %s55, %s69
      %p71 = scmp.eq.s32.totalorder %s24, 0
      %p72 = por %p70, %p71
      %s74 = sadd.s32 %s73, 1
      %p77 = scmp.eq.s32.totalorder %s18, 1
      %p78 = scmp.ne.s32.totalorder %s73, %s75
      %p79 = scmp.eq.s32.totalorder %s18, 0
      %p80 = por %p78, %p79
      %p81 = scmp.ne.s32.totalorder %s73, %s75
      %p82 = scmp.eq.s32.totalorder %s23, 1
      %p83 = por %p81, %p82
      %p84 = scmp.ne.s32.totalorder %s75, %s76
      %p85 = scmp.eq.s32.totalorder %s23, 0
      %p86 = por %p84, %p85
      %p87 = scmp.ne.s32.totalorder %s75, %s76
      %p88 = scmp.eq.s32.totalorder %s24, 1
      %p89 = por %p87, %p88
      %p91 = scmp.ne.s32.totalorder %s76, %s90
      %p92 = scmp.eq.s32.totalorder %s24, 0
      %p93 = por %p91, %p92
      %s95 = sadd.s32 %s94, 1
      %p98 = scmp.eq.s32.totalorder %s18, 1
      %p99 = scmp.ne.s32.totalorder %s94, %s96
      %p100 = scmp.eq.s32.totalorder %s18, 0
      %p101 = por %p99, %p100
      %p102 = scmp.ne.s32.totalorder %s94, %s96
      %p103 = scmp.eq.s32.totalorder %s23, 1
      %p104 = por %p102, %p103
      %p105 = scmp.ne.s32.totalorder %s96, %s97
      %p106 = scmp.eq.s32.totalorder %s23, 0
      %p107 = por %p105, %p106
      %p108 = scmp.ne.s32.totalorder %s96, %s97
      %p109 = scmp.eq.s32.totalorder %s24, 1
      %p110 = por %p108, %p109
      %p112 = scmp.ne.s32.totalorder %s97, %s111
      %p113 = scmp.eq.s32.totalorder %s24, 0
      %p114 = por %p112, %p113
      %s116 = sadd.s32 %s115, 1
      %p119 = scmp.eq.s32.totalorder %s18, 1
      %p120 = scmp.ne.s32.totalorder %s115, %s117
      %p121 = scmp.eq.s32.totalorder %s18, 0
      %p122 = por %p120, %p121
      %p123 = scmp.ne.s32.totalorder %s115, %s117
      %p124 = scmp.eq.s32.totalorder %s23, 1
      %p125 = por %p123, %p124
      %p126 = scmp.ne.s32.totalorder %s117, %s118
      %p127 = scmp.eq.s32.totalorder %s23, 0
      %p128 = por %p126, %p127
      %p129 = scmp.ne.s32.totalorder %s117, %s118
      %p130 = scmp.eq.s32.totalorder %s24, 1
      %p131 = por %p129, %p130
      %p133 = scmp.ne.s32.totalorder %s118, %s132
      %p134 = scmp.eq.s32.totalorder %s24, 0
      %p135 = por %p133, %p134
      %s137 = sadd.s32 %s136, 1
      %p140 = scmp.eq.s32.totalorder %s18, 1
      %p141 = scmp.ne.s32.totalorder %s136, %s138
      %p142 = scmp.eq.s32.totalorder %s18, 0
      %p143 = por %p141, %p142
      %p144 = scmp.ne.s32.totalorder %s136, %s138
      %p145 = scmp.eq.s32.totalorder %s23, 1
      %p146 = por %p144, %p145
      %p147 = scmp.ne.s32.totalorder %s138, %s139
      %p148 = scmp.eq.s32.totalorder %s23, 0
      %p149 = por %p147, %p148
      %p150 = scmp.ne.s32.totalorder %s138, %s139
      %p151 = scmp.eq.s32.totalorder %s24, 1
      %p152 = por %p150, %p151
      %p154 = scmp.ne.s32.totalorder %s139, %s153
      %p155 = scmp.eq.s32.totalorder %s24, 0
      %p156 = por %p154, %p155
      %s158 = sadd.s32 %s157, 1
      %p161 = scmp.eq.s32.totalorder %s18, 1
      %p162 = scmp.ne.s32.totalorder %s157, %s159
      %p163 = scmp.eq.s32.totalorder %s18, 0
      %p164 = por %p162, %p163
      %p165 = scmp.ne.s32.totalorder %s157, %s159
      %p166 = scmp.eq.s32.totalorder %s23, 1
      %p167 = por %p165, %p166
      %p168 = scmp.ne.s32.totalorder %s159, %s160
      %p169 = scmp.eq.s32.totalorder %s23, 0
      %p170 = por %p168, %p169
      %p171 = scmp.ne.s32.totalorder %s159, %s160
      %p172 = scmp.eq.s32.totalorder %s24, 1
      %p173 = por %p171, %p172
      %p175 = scmp.ne.s32.totalorder %s160, %s174
      %p176 = scmp.eq.s32.totalorder %s24, 0
      %p177 = por %p175, %p176
      %s178 = ssub.s32 %s18, %s25
      %p179 = scmp.eq.s32.totalorder %s178, 0
      %s181 = sadd.s32 %s180, 1
      %s182 = scalar_select %p179, %s180, %s181
      %p185 = pneg %p179
      %p186 = scmp.eq.s32.totalorder %s18, 1
      %p187 = por %p185, %p186
      %p188 = scmp.ne.s32.totalorder %s180, %s183
      %p189 = scmp.eq.s32.totalorder %s18, 0
      %p190 = por %p188, %p189
      %p191 = scmp.ne.s32.totalorder %s180, %s183
      %p192 = scmp.eq.s32.totalorder %s23, 1
      %p193 = por %p191, %p192
      %p194 = scmp.ne.s32.totalorder %s183, %s184
      %p195 = scmp.eq.s32.totalorder %s23, 0
      %p196 = por %p194, %p195
      %p197 = scmp.ne.s32.totalorder %s183, %s184
      %p198 = scmp.eq.s32.totalorder %s24, 1
      %p199 = por %p197, %p198
      %p201 = scmp.ne.s32.totalorder %s184, %s200
      %p202 = scmp.eq.s32.totalorder %s24, 0
      %p203 = por %p201, %p202
      %s205 = sadd.s32 %s204, 1
      %p208 = scmp.eq.s32.totalorder %s18, 1
      %p209 = scmp.ne.s32.totalorder %s204, %s206
      %p210 = scmp.eq.s32.totalorder %s18, 0
      %p211 = por %p209, %p210
      %p212 = scmp.ne.s32.totalorder %s204, %s206
      %p213 = scmp.eq.s32.totalorder %s23, 1
      %p214 = por %p212, %p213
      %p215 = scmp.ne.s32.totalorder %s206, %s207
      %p216 = scmp.eq.s32.totalorder %s23, 0
      %p217 = por %p215, %p216
      %p218 = scmp.ne.s32.totalorder %s206, %s207
      %p219 = scmp.eq.s32.totalorder %s24, 1
      %p220 = por %p218, %p219
      %p222 = scmp.ne.s32.totalorder %s207, %s221
      %p223 = scmp.eq.s32.totalorder %s24, 0
      %p224 = por %p222, %p223
      %s225 = ssub.s32 %s18, %s25
      %p226 = scmp.eq.s32.totalorder %s225, 0
      %s228 = sadd.s32 %s227, 1
      %s229 = scalar_select %p226, %s227, %s228
      %p232 = pneg %p226
      %p233 = scmp.eq.s32.totalorder %s18, 1
      %p234 = por %p232, %p233
      %p235 = scmp.ne.s32.totalorder %s227, %s230
      %p236 = scmp.eq.s32.totalorder %s18, 0
      %p237 = por %p235, %p236
      %p238 = scmp.ne.s32.totalorder %s227, %s230
      %p239 = scmp.eq.s32.totalorder %s23, 1
      %p240 = por %p238, %p239
      %p241 = scmp.ne.s32.totalorder %s230, %s231
      %p242 = scmp.eq.s32.totalorder %s23, 0
      %p243 = por %p241, %p242
      %p244 = scmp.ne.s32.totalorder %s230, %s231
      %p245 = scmp.eq.s32.totalorder %s24, 1
      %p246 = por %p244, %p245
      %p248 = scmp.ne.s32.totalorder %s231, %s247
      %p249 = scmp.eq.s32.totalorder %s24, 0
      %p250 = por %p248, %p249
      %p251 = scmp.le.s32.totalorder 1, %s18
      %p252 = scmp.lt.s32.totalorder %s18, 3
      %p253 = pnand %p251, %p252
      %p254 = pneg %p253
      // Predicated region
      $region9: #{window_attention.1} parent=5 // pred_check
        _
      $region10: #{window_attention.1} parent=5 // pred_check_branch
        %256 = sbr.rel (%p253) target = $region12
      $region11: #{window_attention.1} parent=5 // pred_region
        %s257 = ssub.s32 %s18, 1
        // Predicated region
        $region13: #{window_attention.1} parent=11 // pred_check
          %p258 = pneg %p65
        $region14: #{window_attention.1} parent=11 // pred_check_branch
          %260 = sbr.rel (%p258) target = $region16
        $region15: #{window_attention.1} parent=11 // pred_region
          _
        $region16: #{window_attention.1} parent=11 // pred_fallthru
          _
        // Predicated region
        $region17: #{window_attention.1} parent=11 // pred_check
          %p261 = pneg %p86
        $region18: #{window_attention.1} parent=11 // pred_check_branch
          %263 = sbr.rel (%p261) target = $region20
        $region19: #{window_attention.1} parent=11 // pred_region
          _
        $region20: #{window_attention.1} parent=11 // pred_fallthru
          _
        // Predicated region
        $region21: #{window_attention.1} parent=11 // pred_check
          %p264 = pneg %p107
        $region22: #{window_attention.1} parent=11 // pred_check_branch
          %266 = sbr.rel (%p264) target = $region24
        $region23: #{window_attention.1} parent=11 // pred_region
          _
        $region24: #{window_attention.1} parent=11 // pred_fallthru
          _
        // Predicated region
        $region25: #{window_attention.1} parent=11 // pred_check
          %p267 = pneg %p128
        $region26: #{window_attention.1} parent=11 // pred_check_branch
          %269 = sbr.rel (%p267) target = $region28
        $region27: #{window_attention.1} parent=11 // pred_region
          _
        $region28: #{window_attention.1} parent=11 // pred_fallthru
          _
        // Predicated region
        $region29: #{window_attention.1} parent=11 // pred_check
          %p270 = pneg %p149
        $region30: #{window_attention.1} parent=11 // pred_check_branch
          %272 = sbr.rel (%p270) target = $region32
        $region31: #{window_attention.1} parent=11 // pred_region
          _
        $region32: #{window_attention.1} parent=11 // pred_fallthru
          _
        // Predicated region
        $region33: #{window_attention.1} parent=11 // pred_check
          %p273 = pneg %p170
        $region34: #{window_attention.1} parent=11 // pred_check_branch
          %275 = sbr.rel (%p273) target = $region36
        $region35: #{window_attention.1} parent=11 // pred_region
          _
        $region36: #{window_attention.1} parent=11 // pred_fallthru
          _
        // Predicated region
        $region37: #{window_attention.1} parent=11 // pred_check
          %p276 = pneg %p217
        $region38: #{window_attention.1} parent=11 // pred_check_branch
          %278 = sbr.rel (%p276) target = $region40
        $region39: #{window_attention.1} parent=11 // pred_region
          _
        $region40: #{window_attention.1} parent=11 // pred_fallthru
          _
      $region12: #{window_attention.1} parent=5 // pred_fallthru
        _
      %p279 = scmp.lt.s32.totalorder %s18, 2
      // Predicated region
      $region41: #{window_attention.1} parent=5 // pred_check
        %p280 = pneg %p279
      $region42: #{window_attention.1} parent=5 // pred_check_branch
        %282 = sbr.rel (%p280) target = $region44
      $region43: #{window_attention.1} parent=5 // pred_region
        // Predicated region
        $region45: #{window_attention.1} parent=43 // pred_check
          %p283 = pneg %p38
        $region46: #{window_attention.1} parent=43 // pred_check_branch
          %285 = sbr.rel (%p283) target = $region48
        $region47: #{window_attention.1} parent=43 // pred_region
          %s286 = smul.u32 4, %s18
          %p287 = scmp.lt.s32.totalorder %s286, 7
          %s288 = scalar_select %p287, %s286, 7
          %s289 = smul.addr %s288, 8
          %s290 = smul.addr %s289, 8
          %s291 = scalar_lea.vmem %s0, %s290
          %s292 = smul.u32 4, %s18
        $region48: #{window_attention.1} parent=43 // pred_fallthru
          _
        // Predicated region
        $region49: #{window_attention.1} parent=43 // pred_check
          %p293 = pneg %p190
        $region50: #{window_attention.1} parent=43 // pred_check_branch
          %295 = sbr.rel (%p293) target = $region52
        $region51: #{window_attention.1} parent=43 // pred_region
          %s296 = smul.u32 4, %s18
          %p297 = scmp.lt.s32.totalorder %s296, 7
          %s298 = scalar_select %p297, %s296, 7
          %s299 = smul.addr %s298, 8
          %s300 = smul.addr %s299, 8
          %s301 = scalar_lea.vmem %s7, %s300
          %s302 = smul.u32 4, %s18
        $region52: #{window_attention.1} parent=43 // pred_fallthru
          _
      $region44: #{window_attention.1} parent=5 // pred_fallthru
        _
      %p303 = scmp.le.s32.totalorder 1, %s18
      %p304 = scmp.lt.s32.totalorder %s18, 3
      %p305 = pnand %p303, %p304
      %p306 = pneg %p305
      // Predicated region
      $region53: #{window_attention.1} parent=5 // pred_check
        _
      $region54: #{window_attention.1} parent=5 // pred_check_branch
        %308 = sbr.rel (%p305) target = $region56
      $region55: #{window_attention.1} parent=5 // pred_region
        %s309 = ssub.s32 %s18, 1
        %s310 = smul.u32 4, %s23
        %p311 = scmp.lt.s32.totalorder %s310, 7
        %s312 = scalar_select %p311, %s310, 7
        %s313 = smul.addr %s312, 8
        %s314 = smul.addr %s313, 8
        %s315 = scalar_lea.vmem %s0, %s314
        %p316 = pneg %p44
        %p317 = pneg %p41
        %p318 = pneg %p65
        %p319 = pneg %p62
        %p320 = pneg %p86
        %p321 = pneg %p83
        %p322 = pneg %p107
        %p323 = pneg %p104
        %p324 = pneg %p128
        %p325 = pneg %p125
        %p326 = pneg %p149
        %p327 = pneg %p146
        %p328 = pneg %p170
        %p329 = pneg %p167
        %s330 = smul.u32 4, %s23
        %p331 = scmp.lt.s32.totalorder %s330, 7
        %s332 = scalar_select %p331, %s330, 7
        %s333 = smul.addr %s332, 8
        %s334 = smul.addr %s333, 8
        %s335 = scalar_lea.vmem %s7, %s334
        %p336 = pneg %p196
        %p337 = pneg %p193
        %p338 = pneg %p217
        %p339 = pneg %p214
        %p340 = pneg %p243
        %p341 = pneg %p240
        %s342 = sand.u32 %s230, 1
        %s343 = scalar_lea.sflag [#allocation3], %s342
        %s344 = sand.u32 %s230, 1
        %s345 = smul.addr %s344, 256
        %s346 = scalar_lea.vmem [#allocation2], %s345
        %s347 = smul.u32 4, %s23
        %p348 = scmp.lt.s32.totalorder %s347, 7
        %s349 = scalar_select %p348, %s347, 7
        %s350 = smul.addr %s349, 8
        %s351 = smul.addr %s350, 8
        %s352 = scalar_lea.vmem %s0, %s351
        %s353 = smul.u32 4, %s23
        %s354 = smul.u32 4, %s23
        %p355 = scmp.lt.s32.totalorder %s354, 7
        %s356 = scalar_select %p355, %s354, 7
        %s357 = smul.addr %s356, 8
        %s358 = smul.addr %s357, 8
        %s359 = scalar_lea.vmem %s7, %s358
        %s360 = smul.u32 4, %s23
        %s361 = smul.u32 4, %s23
        %v363 = vld [vmem:[%s352] sm:$0xff]
        %v364 = vld [vmem:[%s352 + $0x8] sm:$0xff]
        %v365 = vld [vmem:[%s352 + $0x10] sm:$0xff]
        %v366 = vld [vmem:[%s352 + $0x18] sm:$0xff]
        %v367 = vld [vmem:[%s352 + $0x20] sm:$0xff]
        %v368 = vld [vmem:[%s352 + $0x28] sm:$0xff]
        %v369 = vld [vmem:[%s352 + $0x30] sm:$0xff]
        %v370 = vld [vmem:[%s352 + $0x38] sm:$0xff]
        %v371 = vld [vmem:[%s352 + $0x40] sm:$0xff]
        %v372 = vld [vmem:[%s352 + $0x48] sm:$0xff]
        %v373 = vld [vmem:[%s352 + $0x50] sm:$0xff]
        %v374 = vld [vmem:[%s352 + $0x58] sm:$0xff]
        %v375 = vld [vmem:[%s352 + $0x60] sm:$0xff]
        %v376 = vld [vmem:[%s352 + $0x68] sm:$0xff]
        %v377 = vld [vmem:[%s352 + $0x70] sm:$0xff]
        %v378 = vld [vmem:[%s352 + $0x78] sm:$0xff]
        %v379 = vld [vmem:[%s352 + $0x80] sm:$0xff]
        %v380 = vld [vmem:[%s352 + $0x88] sm:$0xff]
        %v381 = vld [vmem:[%s352 + $0x90] sm:$0xff]
        %v382 = vld [vmem:[%s352 + $0x98] sm:$0xff]
        %v383 = vld [vmem:[%s352 + $0xa0] sm:$0xff]
        %v384 = vld [vmem:[%s352 + $0xa8] sm:$0xff]
        %v385 = vld [vmem:[%s352 + $0xb0] sm:$0xff]
        %v386 = vld [vmem:[%s352 + $0xb8] sm:$0xff]
        %v387 = vld [vmem:[%s352 + $0xc0] sm:$0xff]
        %v388 = vld [vmem:[%s352 + $0xc8] sm:$0xff]
        %v389 = vld [vmem:[%s352 + $0xd0] sm:$0xff]
        %v390 = vld [vmem:[%s352 + $0xd8] sm:$0xff]
        %v391 = vld [vmem:[%s352 + $0xe0] sm:$0xff]
        %v392 = vld [vmem:[%s352 + $0xe8] sm:$0xff]
        %v393 = vld [vmem:[%s352 + $0xf0] sm:$0xff]
        %v394 = vld [vmem:[%s352 + $0xf8] sm:$0xff]
        %v395 = vpack.c.bf16 %v364, %v363
        %v396 = vpack.c.bf16 %v366, %v365
        %v397 = vpack.c.bf16 %v368, %v367
        %v398 = vpack.c.bf16 %v370, %v369
        %v399 = vpack.c.bf16 %v372, %v371
        %v400 = vpack.c.bf16 %v374, %v373
        %v401 = vpack.c.bf16 %v376, %v375
        %v402 = vpack.c.bf16 %v378, %v377
        %v403 = vpack.c.bf16 %v380, %v379
        %v404 = vpack.c.bf16 %v382, %v381
        %v405 = vpack.c.bf16 %v384, %v383
        %v406 = vpack.c.bf16 %v386, %v385
        %v407 = vpack.c.bf16 %v388, %v387
        %v408 = vpack.c.bf16 %v390, %v389
        %v409 = vpack.c.bf16 %v392, %v391
        %v410 = vpack.c.bf16 %v394, %v393
        %v411 = vld [vmem:[%s2] sm:$0xff]
        %v412 = vld [vmem:[%s2 + $0x8] sm:$0xff]
        %v413 = vld [vmem:[%s2 + $0x10] sm:$0xff]
        %v414 = vld [vmem:[%s2 + $0x18] sm:$0xff]
        %v415 = vld [vmem:[%s2 + $0x20] sm:$0xf]
        %v416 = vld [vmem:[%s2 + $0x24] sm:$0xff]
        %v417 = vld [vmem:[%s2 + $0x2c] sm:$0xff]
        %v418 = vld [vmem:[%s2 + $0x34] sm:$0xff]
        %v419 = vld [vmem:[%s2 + $0x3c] sm:$0xff]
        %v420 = vld [vmem:[%s2 + $0x44] sm:$0xf]
        %v421 = vld [vmem:[%s2 + $0x48] sm:$0xff]
        %v422 = vld [vmem:[%s2 + $0x50] sm:$0xff]
        %v423 = vld [vmem:[%s2 + $0x58] sm:$0xff]
        %v424 = vld [vmem:[%s2 + $0x60] sm:$0xff]
        %v425 = vld [vmem:[%s2 + $0x68] sm:$0xf]
        %v426 = vld [vmem:[%s2 + $0x6c] sm:$0xff]
        %v427 = vld [vmem:[%s2 + $0x74] sm:$0xff]
        %v428 = vld [vmem:[%s2 + $0x7c] sm:$0xff]
        %v429 = vld [vmem:[%s2 + $0x84] sm:$0xff]
        %v430 = vld [vmem:[%s2 + $0x8c] sm:$0xf]
        %v431 = vld [vmem:[%s2 + $0x90] sm:$0xff]
        %v432 = vld [vmem:[%s2 + $0x98] sm:$0xff]
        %v433 = vld [vmem:[%s2 + $0xa0] sm:$0xff]
        %v434 = vld [vmem:[%s2 + $0xa8] sm:$0xff]
        %v435 = vld [vmem:[%s2 + $0xb0] sm:$0xf]
        %v436 = vld [vmem:[%s2 + $0xb4] sm:$0xff]
        %v437 = vld [vmem:[%s2 + $0xbc] sm:$0xff]
        %v438 = vld [vmem:[%s2 + $0xc4] sm:$0xff]
        %v439 = vld [vmem:[%s2 + $0xcc] sm:$0xff]
        %v440 = vld [vmem:[%s2 + $0xd4] sm:$0xf]
        %v441 = vld [vmem:[%s2 + $0xd8] sm:$0xff]
        %v442 = vld [vmem:[%s2 + $0xe0] sm:$0xff]
        %v443 = vld [vmem:[%s2 + $0xe8] sm:$0xff]
        %v444 = vld [vmem:[%s2 + $0xf0] sm:$0xff]
        %v445 = vld [vmem:[%s2 + $0xf8] sm:$0xf]
        %v446 = vld [vmem:[%s2 + $0xfc] sm:$0xff]
        %v447 = vld [vmem:[%s2 + $0x104] sm:$0xff]
        %v448 = vld [vmem:[%s2 + $0x10c] sm:$0xff]
        %v449 = vld [vmem:[%s2 + $0x114] sm:$0xff]
        %v450 = vld [vmem:[%s2 + $0x11c] sm:$0xf]
        %v451 = vld [vmem:[%s2 + $0x120] sm:$0xff]
        %v452 = vld [vmem:[%s2 + $0x128] sm:$0xff]
        %v453 = vld [vmem:[%s2 + $0x130] sm:$0xff]
        %v454 = vld [vmem:[%s2 + $0x138] sm:$0xff]
        %v455 = vld [vmem:[%s2 + $0x140] sm:$0xf]
        %v456 = vld [vmem:[%s2 + $0x144] sm:$0xff]
        %v457 = vld [vmem:[%s2 + $0x14c] sm:$0xff]
        %v458 = vld [vmem:[%s2 + $0x154] sm:$0xff]
        %v459 = vld [vmem:[%s2 + $0x15c] sm:$0xff]
        %v460 = vld [vmem:[%s2 + $0x164] sm:$0xf]
        %v461 = vld [vmem:[%s2 + $0x168] sm:$0xff]
        %v462 = vld [vmem:[%s2 + $0x170] sm:$0xff]
        %v463 = vld [vmem:[%s2 + $0x178] sm:$0xff]
        %v464 = vld [vmem:[%s2 + $0x180] sm:$0xff]
        %v465 = vld [vmem:[%s2 + $0x188] sm:$0xf]
        %v466 = vld [vmem:[%s2 + $0x18c] sm:$0xff]
        %v467 = vld [vmem:[%s2 + $0x194] sm:$0xff]
        %v468 = vld [vmem:[%s2 + $0x19c] sm:$0xff]
        %v469 = vld [vmem:[%s2 + $0x1a4] sm:$0xff]
        %v470 = vld [vmem:[%s2 + $0x1ac] sm:$0xf]
        %v471 = vld [vmem:[%s3] sm:$0xff]
        %v472 = vld [vmem:[%s3 + $0x8] sm:$0x1]
        %v475 = vperm.slane %v471, 0
        %v476 = vperm.slane %v471, 1
        %v477 = vperm.slane %v471, 2
        %v478 = vperm.slane %v471, 3
        %v479 = vperm.slane %v471, 4
        %v480 = vperm.slane %v471, 5
        %v481 = vperm.slane %v471, 6
        %v482 = vperm.slane %v471, 7
        %v483 = vperm.slane %v472, 0
        %v553 = vunpack.c.l.b16 %v411
        %v554 = vunpack.c.h.b16 %v411
        %v555 = vunpack.c.l.b16 %v412
        %v556 = vunpack.c.h.b16 %v412
        %v557 = vunpack.c.l.b16 %v413
        %v558 = vunpack.c.h.b16 %v413
        %v559 = vunpack.c.l.b16 %v414
        %v560 = vunpack.c.h.b16 %v414
        %v561 = vunpack.c.l.b16 %v415
        %v562 = vunpack.c.l.b16 %v416
        %v563 = vunpack.c.h.b16 %v416
        %v564 = vunpack.c.l.b16 %v417
        %v565 = vunpack.c.h.b16 %v417
        %v566 = vunpack.c.l.b16 %v418
        %v567 = vunpack.c.h.b16 %v418
        %v568 = vunpack.c.l.b16 %v419
        %v569 = vunpack.c.h.b16 %v419
        %v570 = vunpack.c.l.b16 %v420
        %v571 = vunpack.c.l.b16 %v421
        %v572 = vunpack.c.h.b16 %v421
        %v573 = vunpack.c.l.b16 %v422
        %v574 = vunpack.c.h.b16 %v422
        %v575 = vunpack.c.l.b16 %v423
        %v576 = vunpack.c.h.b16 %v423
        %v577 = vunpack.c.l.b16 %v424
        %v578 = vunpack.c.h.b16 %v424
        %v579 = vunpack.c.l.b16 %v425
        %v580 = vunpack.c.l.b16 %v426
        %v581 = vunpack.c.h.b16 %v426
        %v582 = vunpack.c.l.b16 %v427
        %v583 = vunpack.c.h.b16 %v427
        %v584 = vunpack.c.l.b16 %v428
        %v585 = vunpack.c.h.b16 %v428
        %v586 = vunpack.c.l.b16 %v429
        %v587 = vunpack.c.h.b16 %v429
        %v588 = vunpack.c.l.b16 %v430
        %v589 = vunpack.c.l.b16 %v431
        %v590 = vunpack.c.h.b16 %v431
        %v591 = vunpack.c.l.b16 %v432
        %v592 = vunpack.c.h.b16 %v432
        %v593 = vunpack.c.l.b16 %v433
        %v594 = vunpack.c.h.b16 %v433
        %v595 = vunpack.c.l.b16 %v434
        %v596 = vunpack.c.h.b16 %v434
        %v597 = vunpack.c.l.b16 %v435
        %v598 = vunpack.c.l.b16 %v436
        %v599 = vunpack.c.h.b16 %v436
        %v600 = vunpack.c.l.b16 %v437
        %v601 = vunpack.c.h.b16 %v437
        %v602 = vunpack.c.l.b16 %v438
        %v603 = vunpack.c.h.b16 %v438
        %v604 = vunpack.c.l.b16 %v439
        %v605 = vunpack.c.h.b16 %v439
        %v606 = vunpack.c.l.b16 %v440
        %v607 = vunpack.c.l.b16 %v441
        %v608 = vunpack.c.h.b16 %v441
        %v609 = vunpack.c.l.b16 %v442
        %v610 = vunpack.c.h.b16 %v442
        %v611 = vunpack.c.l.b16 %v443
        %v612 = vunpack.c.h.b16 %v443
        %v613 = vunpack.c.l.b16 %v444
        %v614 = vunpack.c.h.b16 %v444
        %v615 = vunpack.c.l.b16 %v445
        %v616 = vunpack.c.l.b16 %v446
        %v617 = vunpack.c.h.b16 %v446
        %v618 = vunpack.c.l.b16 %v447
        %v619 = vunpack.c.h.b16 %v447
        %v620 = vunpack.c.l.b16 %v448
        %v621 = vunpack.c.h.b16 %v448
        %v622 = vunpack.c.l.b16 %v449
        %v623 = vunpack.c.h.b16 %v449
        %v624 = vunpack.c.l.b16 %v450
        %v625 = vunpack.c.l.b16 %v451
        %v626 = vunpack.c.h.b16 %v451
        %v627 = vunpack.c.l.b16 %v452
        %v628 = vunpack.c.h.b16 %v452
        %v629 = vunpack.c.l.b16 %v453
        %v630 = vunpack.c.h.b16 %v453
        %v631 = vunpack.c.l.b16 %v454
        %v632 = vunpack.c.h.b16 %v454
        %v633 = vunpack.c.l.b16 %v455
        %v634 = vunpack.c.l.b16 %v456
        %v635 = vunpack.c.h.b16 %v456
        %v636 = vunpack.c.l.b16 %v457
        %v637 = vunpack.c.h.b16 %v457
        %v638 = vunpack.c.l.b16 %v458
        %v639 = vunpack.c.h.b16 %v458
        %v640 = vunpack.c.l.b16 %v459
        %v641 = vunpack.c.h.b16 %v459
        %v642 = vunpack.c.l.b16 %v460
        %v643 = vunpack.c.l.b16 %v461
        %v644 = vunpack.c.h.b16 %v461
        %v645 = vunpack.c.l.b16 %v462
        %v646 = vunpack.c.h.b16 %v462
        %v647 = vunpack.c.l.b16 %v463
        %v648 = vunpack.c.h.b16 %v463
        %v649 = vunpack.c.l.b16 %v464
        %v650 = vunpack.c.h.b16 %v464
        %v651 = vunpack.c.l.b16 %v465
        %v652 = vunpack.c.l.b16 %v466
        %v653 = vunpack.c.h.b16 %v466
        %v654 = vunpack.c.l.b16 %v467
        %v655 = vunpack.c.h.b16 %v467
        %v656 = vunpack.c.l.b16 %v468
        %v657 = vunpack.c.h.b16 %v468
        %v658 = vunpack.c.l.b16 %v469
        %v659 = vunpack.c.h.b16 %v469
        %v660 = vunpack.c.l.b16 %v470
        %v661 = vpack.c.b16 %v562, %v553
        %v662 = vpack.c.b16 %v563, %v554
        %v663 = vpack.c.b16 %v564, %v555
        %v664 = vpack.c.b16 %v565, %v556
        %v665 = vpack.c.b16 %v566, %v557
        %v666 = vpack.c.b16 %v567, %v558
        %v667 = vpack.c.b16 %v568, %v559
        %v668 = vpack.c.b16 %v569, %v560
        %v669 = vpack.c.b16 %v570, %v561
        %v670 = vpack.c.b16 %v580, %v571
        %v671 = vpack.c.b16 %v581, %v572
        %v672 = vpack.c.b16 %v582, %v573
        %v673 = vpack.c.b16 %v583, %v574
        %v674 = vpack.c.b16 %v584, %v575
        %v675 = vpack.c.b16 %v585, %v576
        %v676 = vpack.c.b16 %v586, %v577
        %v677 = vpack.c.b16 %v587, %v578
        %v678 = vpack.c.b16 %v588, %v579
        %v679 = vpack.c.b16 %v598, %v589
        %v680 = vpack.c.b16 %v599, %v590
        %v681 = vpack.c.b16 %v600, %v591
        %v682 = vpack.c.b16 %v601, %v592
        %v683 = vpack.c.b16 %v602, %v593
        %v684 = vpack.c.b16 %v603, %v594
        %v685 = vpack.c.b16 %v604, %v595
        %v686 = vpack.c.b16 %v605, %v596
        %v687 = vpack.c.b16 %v606, %v597
        %v688 = vpack.c.b16 %v616, %v607
        %v689 = vpack.c.b16 %v617, %v608
        %v690 = vpack.c.b16 %v618, %v609
        %v691 = vpack.c.b16 %v619, %v610
        %v692 = vpack.c.b16 %v620, %v611
        %v693 = vpack.c.b16 %v621, %v612
        %v694 = vpack.c.b16 %v622, %v613
        %v695 = vpack.c.b16 %v623, %v614
        %v696 = vpack.c.b16 %v624, %v615
        %v697 = vpack.c.b16 %v634, %v625
        %v698 = vpack.c.b16 %v635, %v626
        %v699 = vpack.c.b16 %v636, %v627
        %v700 = vpack.c.b16 %v637, %v628
        %v701 = vpack.c.b16 %v638, %v629
        %v702 = vpack.c.b16 %v639, %v630
        %v703 = vpack.c.b16 %v640, %v631
        %v704 = vpack.c.b16 %v641, %v632
        %v705 = vpack.c.b16 %v642, %v633
        %v706 = vpack.c.b16 %v652, %v643
        %v707 = vpack.c.b16 %v653, %v644
        %v708 = vpack.c.b16 %v654, %v645
        %v709 = vpack.c.b16 %v655, %v646
        %v710 = vpack.c.b16 %v656, %v647
        %v711 = vpack.c.b16 %v657, %v648
        %v712 = vpack.c.b16 %v658, %v649
        %v713 = vpack.c.b16 %v659, %v650
        %v714 = vpack.c.b16 %v660, %v651
        %vm769 = vcmask 785408
        %v771 = vsel %vm769, %v395, 0
        %v774 = vsel %vm769, %v396, 0
        %v777 = vsel %vm769, %v397, 0
        %v780 = vsel %vm769, %v398, 0
        %v783 = vsel %vm769, %v399, 0
        %v786 = vsel %vm769, %v400, 0
        %v789 = vsel %vm769, %v401, 0
        %v792 = vsel %vm769, %v402, 0
        %v795 = vsel %vm769, %v403, 0
        %v798 = vsel %vm769, %v404, 0
        %v801 = vsel %vm769, %v405, 0
        %v804 = vsel %vm769, %v406, 0
        %v807 = vsel %vm769, %v407, 0
        %v810 = vsel %vm769, %v408, 0
        %v813 = vsel %vm769, %v409, 0
        %v816 = vsel %vm769, %v410, 0
        %818 = vmatpush.bf16.msra.mxu0 0
        %819 = vmatpush.bf16.msra.mxu0 0
        %820 = vmatpush.bf16.msra.mxu0 %v706
        %821 = vmatpush.bf16.msra.mxu0 %v697
        %822 = vmatpush.bf16.msra.mxu0 %v688
        %823 = vmatpush.bf16.msra.mxu0 %v679
        %824 = vmatpush.bf16.msra.mxu0 %v670
        %825 = vmatpush.bf16.msra.mxu0 %v661
        %826 = vmatmul.bf16.gmra.mxu0 %v771
        %v827 = vpop.f32.mrf.mxu0
        %v828 = vadd.f32 %v475, %v827
        %v829 = vpop.f32.mrf.mxu0
        %v830 = vadd.f32 %v475, %v829
        %831 = vmatmul.bf16.gmra.mxu0 %v774
        %v832 = vpop.f32.mrf.mxu0
        %v833 = vadd.f32 %v475, %v832
        %v834 = vpop.f32.mrf.mxu0
        %v835 = vadd.f32 %v475, %v834
        %836 = vmatmul.bf16.gmra.mxu0 %v777
        %v837 = vpop.f32.mrf.mxu0
        %v838 = vadd.f32 %v475, %v837
        %v839 = vpop.f32.mrf.mxu0
        %v840 = vadd.f32 %v475, %v839
        %841 = vmatmul.bf16.gmra.mxu0 %v780
        %v842 = vpop.f32.mrf.mxu0
        %v843 = vadd.f32 %v475, %v842
        %v844 = vpop.f32.mrf.mxu0
        %v845 = vadd.f32 %v475, %v844
        %846 = vmatmul.bf16.gmra.mxu0 %v783
        %v847 = vpop.f32.mrf.mxu0
        %v848 = vadd.f32 %v475, %v847
        %v849 = vpop.f32.mrf.mxu0
        %v850 = vadd.f32 %v475, %v849
        %851 = vmatmul.bf16.gmra.mxu0 %v786
        %v852 = vpop.f32.mrf.mxu0
        %v853 = vadd.f32 %v475, %v852
        %v854 = vpop.f32.mrf.mxu0
        %v855 = vadd.f32 %v475, %v854
        %856 = vmatmul.bf16.gmra.mxu0 %v789
        %v857 = vpop.f32.mrf.mxu0
        %v858 = vadd.f32 %v475, %v857
        %v859 = vpop.f32.mrf.mxu0
        %v860 = vadd.f32 %v475, %v859
        %861 = vmatmul.bf16.gmra.mxu0 %v792
        %v862 = vpop.f32.mrf.mxu0
        %v863 = vadd.f32 %v475, %v862
        %v864 = vpop.f32.mrf.mxu0
        %v865 = vadd.f32 %v475, %v864
        %866 = vmatmul.bf16.gmra.mxu0 %v795
        %v867 = vpop.f32.mrf.mxu0
        %v868 = vadd.f32 %v475, %v867
        %v869 = vpop.f32.mrf.mxu0
        %v870 = vadd.f32 %v475, %v869
        %871 = vmatmul.bf16.gmra.mxu0 %v798
        %v872 = vpop.f32.mrf.mxu0
        %v873 = vadd.f32 %v475, %v872
        %v874 = vpop.f32.mrf.mxu0
        %v875 = vadd.f32 %v475, %v874
        %876 = vmatmul.bf16.gmra.mxu0 %v801
        %v877 = vpop.f32.mrf.mxu0
        %v878 = vadd.f32 %v475, %v877
        %v879 = vpop.f32.mrf.mxu0
        %v880 = vadd.f32 %v475, %v879
        %881 = vmatmul.bf16.gmra.mxu0 %v804
        %v882 = vpop.f32.mrf.mxu0
        %v883 = vadd.f32 %v475, %v882
        %v884 = vpop.f32.mrf.mxu0
        %v885 = vadd.f32 %v475, %v884
        %886 = vmatmul.bf16.gmra.mxu0 %v807
        %v887 = vpop.f32.mrf.mxu0
        %v888 = vadd.f32 %v475, %v887
        %v889 = vpop.f32.mrf.mxu0
        %v890 = vadd.f32 %v475, %v889
        %891 = vmatmul.bf16.gmra.mxu0 %v810
        %v892 = vpop.f32.mrf.mxu0
        %v893 = vadd.f32 %v475, %v892
        %v894 = vpop.f32.mrf.mxu0
        %v895 = vadd.f32 %v475, %v894
        %896 = vmatmul.bf16.gmra.mxu0 %v813
        %v897 = vpop.f32.mrf.mxu0
        %v898 = vadd.f32 %v475, %v897
        %v899 = vpop.f32.mrf.mxu0
        %v900 = vadd.f32 %v475, %v899
        %901 = vmatmul.bf16.gmra.mxu0 %v816
        %v902 = vpop.f32.mrf.mxu0
        %v903 = vadd.f32 %v475, %v902
        %v904 = vpop.f32.mrf.mxu0
        %v905 = vadd.f32 %v475, %v904
        %906 = vdwg.mxu0
        %907 = vmatpush.bf16.msra.mxu0 0
        %908 = vmatpush.bf16.msra.mxu0 0
        %909 = vmatpush.bf16.msra.mxu0 %v707
        %910 = vmatpush.bf16.msra.mxu0 %v698
        %911 = vmatpush.bf16.msra.mxu0 %v689
        %912 = vmatpush.bf16.msra.mxu0 %v680
        %913 = vmatpush.bf16.msra.mxu0 %v671
        %914 = vmatpush.bf16.msra.mxu0 %v662
        %915 = vmatmul.bf16.gmra.mxu0 %v771
        %v916 = vpop.f32.mrf.mxu0
        %v917 = vadd.f32 %v476, %v916
        %v918 = vpop.f32.mrf.mxu0
        %v919 = vadd.f32 %v476, %v918
        %920 = vmatmul.bf16.gmra.mxu0 %v774
        %v921 = vpop.f32.mrf.mxu0
        %v922 = vadd.f32 %v476, %v921
        %v923 = vpop.f32.mrf.mxu0
        %v924 = vadd.f32 %v476, %v923
        %925 = vmatmul.bf16.gmra.mxu0 %v777
        %v926 = vpop.f32.mrf.mxu0
        %v927 = vadd.f32 %v476, %v926
        %v928 = vpop.f32.mrf.mxu0
        %v929 = vadd.f32 %v476, %v928
        %930 = vmatmul.bf16.gmra.mxu0 %v780
        %v931 = vpop.f32.mrf.mxu0
        %v932 = vadd.f32 %v476, %v931
        %v933 = vpop.f32.mrf.mxu0
        %v934 = vadd.f32 %v476, %v933
        %935 = vmatmul.bf16.gmra.mxu0 %v783
        %v936 = vpop.f32.mrf.mxu0
        %v937 = vadd.f32 %v476, %v936
        %v938 = vpop.f32.mrf.mxu0
        %v939 = vadd.f32 %v476, %v938
        %940 = vmatmul.bf16.gmra.mxu0 %v786
        %v941 = vpop.f32.mrf.mxu0
        %v942 = vadd.f32 %v476, %v941
        %v943 = vpop.f32.mrf.mxu0
        %v944 = vadd.f32 %v476, %v943
        %945 = vmatmul.bf16.gmra.mxu0 %v789
        %v946 = vpop.f32.mrf.mxu0
        %v947 = vadd.f32 %v476, %v946
        %v948 = vpop.f32.mrf.mxu0
        %v949 = vadd.f32 %v476, %v948
        %950 = vmatmul.bf16.gmra.mxu0 %v792
        %v951 = vpop.f32.mrf.mxu0
        %v952 = vadd.f32 %v476, %v951
        %v953 = vpop.f32.mrf.mxu0
        %v954 = vadd.f32 %v476, %v953
        %955 = vmatmul.bf16.gmra.mxu0 %v795
        %v956 = vpop.f32.mrf.mxu0
        %v957 = vadd.f32 %v476, %v956
        %v958 = vpop.f32.mrf.mxu0
        %v959 = vadd.f32 %v476, %v958
        %960 = vmatmul.bf16.gmra.mxu0 %v798
        %v961 = vpop.f32.mrf.mxu0
        %v962 = vadd.f32 %v476, %v961
        %v963 = vpop.f32.mrf.mxu0
        %v964 = vadd.f32 %v476, %v963
        %965 = vmatmul.bf16.gmra.mxu0 %v801
        %v966 = vpop.f32.mrf.mxu0
        %v967 = vadd.f32 %v476, %v966
        %v968 = vpop.f32.mrf.mxu0
        %v969 = vadd.f32 %v476, %v968
        %970 = vmatmul.bf16.gmra.mxu0 %v804
        %v971 = vpop.f32.mrf.mxu0
        %v972 = vadd.f32 %v476, %v971
        %v973 = vpop.f32.mrf.mxu0
        %v974 = vadd.f32 %v476, %v973
        %975 = vmatmul.bf16.gmra.mxu0 %v807
        %v976 = vpop.f32.mrf.mxu0
        %v977 = vadd.f32 %v476, %v976
        %v978 = vpop.f32.mrf.mxu0
        %v979 = vadd.f32 %v476, %v978
        %980 = vmatmul.bf16.gmra.mxu0 %v810
        %v981 = vpop.f32.mrf.mxu0
        %v982 = vadd.f32 %v476, %v981
        %v983 = vpop.f32.mrf.mxu0
        %v984 = vadd.f32 %v476, %v983
        %985 = vmatmul.bf16.gmra.mxu0 %v813
        %v986 = vpop.f32.mrf.mxu0
        %v987 = vadd.f32 %v476, %v986
        %v988 = vpop.f32.mrf.mxu0
        %v989 = vadd.f32 %v476, %v988
        %990 = vmatmul.bf16.gmra.mxu0 %v816
        %v991 = vpop.f32.mrf.mxu0
        %v992 = vadd.f32 %v476, %v991
        %v993 = vpop.f32.mrf.mxu0
        %v994 = vadd.f32 %v476, %v993
        %995 = vdwg.mxu0
        %996 = vmatpush.bf16.msra.mxu0 0
        %997 = vmatpush.bf16.msra.mxu0 0
        %998 = vmatpush.bf16.msra.mxu0 %v708
        %999 = vmatpush.bf16.msra.mxu0 %v699
        %1000 = vmatpush.bf16.msra.mxu0 %v690
        %1001 = vmatpush.bf16.msra.mxu0 %v681
        %1002 = vmatpush.bf16.msra.mxu0 %v672
        %1003 = vmatpush.bf16.msra.mxu0 %v663
        %1004 = vmatmul.bf16.gmra.mxu0 %v771
        %v1005 = vpop.f32.mrf.mxu0
        %v1006 = vadd.f32 %v477, %v1005
        %v1007 = vpop.f32.mrf.mxu0
        %v1008 = vadd.f32 %v477, %v1007
        %1009 = vmatmul.bf16.gmra.mxu0 %v774
        %v1010 = vpop.f32.mrf.mxu0
        %v1011 = vadd.f32 %v477, %v1010
        %v1012 = vpop.f32.mrf.mxu0
        %v1013 = vadd.f32 %v477, %v1012
        %1014 = vmatmul.bf16.gmra.mxu0 %v777
        %v1015 = vpop.f32.mrf.mxu0
        %v1016 = vadd.f32 %v477, %v1015
        %v1017 = vpop.f32.mrf.mxu0
        %v1018 = vadd.f32 %v477, %v1017
        %1019 = vmatmul.bf16.gmra.mxu0 %v780
        %v1020 = vpop.f32.mrf.mxu0
        %v1021 = vadd.f32 %v477, %v1020
        %v1022 = vpop.f32.mrf.mxu0
        %v1023 = vadd.f32 %v477, %v1022
        %1024 = vmatmul.bf16.gmra.mxu0 %v783
        %v1025 = vpop.f32.mrf.mxu0
        %v1026 = vadd.f32 %v477, %v1025
        %v1027 = vpop.f32.mrf.mxu0
        %v1028 = vadd.f32 %v477, %v1027
        %1029 = vmatmul.bf16.gmra.mxu0 %v786
        %v1030 = vpop.f32.mrf.mxu0
        %v1031 = vadd.f32 %v477, %v1030
        %v1032 = vpop.f32.mrf.mxu0
        %v1033 = vadd.f32 %v477, %v1032
        %1034 = vmatmul.bf16.gmra.mxu0 %v789
        %v1035 = vpop.f32.mrf.mxu0
        %v1036 = vadd.f32 %v477, %v1035
        %v1037 = vpop.f32.mrf.mxu0
        %v1038 = vadd.f32 %v477, %v1037
        %1039 = vmatmul.bf16.gmra.mxu0 %v792
        %v1040 = vpop.f32.mrf.mxu0
        %v1041 = vadd.f32 %v477, %v1040
        %v1042 = vpop.f32.mrf.mxu0
        %v1043 = vadd.f32 %v477, %v1042
        %1044 = vmatmul.bf16.gmra.mxu0 %v795
        %v1045 = vpop.f32.mrf.mxu0
        %v1046 = vadd.f32 %v477, %v1045
        %v1047 = vpop.f32.mrf.mxu0
        %v1048 = vadd.f32 %v477, %v1047
        %1049 = vmatmul.bf16.gmra.mxu0 %v798
        %v1050 = vpop.f32.mrf.mxu0
        %v1051 = vadd.f32 %v477, %v1050
        %v1052 = vpop.f32.mrf.mxu0
        %v1053 = vadd.f32 %v477, %v1052
        %1054 = vmatmul.bf16.gmra.mxu0 %v801
        %v1055 = vpop.f32.mrf.mxu0
        %v1056 = vadd.f32 %v477, %v1055
        %v1057 = vpop.f32.mrf.mxu0
        %v1058 = vadd.f32 %v477, %v1057
        %1059 = vmatmul.bf16.gmra.mxu0 %v804
        %v1060 = vpop.f32.mrf.mxu0
        %v1061 = vadd.f32 %v477, %v1060
        %v1062 = vpop.f32.mrf.mxu0
        %v1063 = vadd.f32 %v477, %v1062
        %1064 = vmatmul.bf16.gmra.mxu0 %v807
        %v1065 = vpop.f32.mrf.mxu0
        %v1066 = vadd.f32 %v477, %v1065
        %v1067 = vpop.f32.mrf.mxu0
        %v1068 = vadd.f32 %v477, %v1067
        %1069 = vmatmul.bf16.gmra.mxu0 %v810
        %v1070 = vpop.f32.mrf.mxu0
        %v1071 = vadd.f32 %v477, %v1070
        %v1072 = vpop.f32.mrf.mxu0
        %v1073 = vadd.f32 %v477, %v1072
        %1074 = vmatmul.bf16.gmra.mxu0 %v813
        %v1075 = vpop.f32.mrf.mxu0
        %v1076 = vadd.f32 %v477, %v1075
        %v1077 = vpop.f32.mrf.mxu0
        %v1078 = vadd.f32 %v477, %v1077
        %1079 = vmatmul.bf16.gmra.mxu0 %v816
        %v1080 = vpop.f32.mrf.mxu0
        %v1081 = vadd.f32 %v477, %v1080
        %v1082 = vpop.f32.mrf.mxu0
        %v1083 = vadd.f32 %v477, %v1082
        %1084 = vdwg.mxu0
        %1085 = vmatpush.bf16.msra.mxu0 0
        %1086 = vmatpush.bf16.msra.mxu0 0
        %1087 = vmatpush.bf16.msra.mxu0 %v709
        %1088 = vmatpush.bf16.msra.mxu0 %v700
        %1089 = vmatpush.bf16.msra.mxu0 %v691
        %1090 = vmatpush.bf16.msra.mxu0 %v682
        %1091 = vmatpush.bf16.msra.mxu0 %v673
        %1092 = vmatpush.bf16.msra.mxu0 %v664
        %1093 = vmatmul.bf16.gmra.mxu0 %v771
        %v1094 = vpop.f32.mrf.mxu0
        %v1095 = vadd.f32 %v478, %v1094
        %v1096 = vpop.f32.mrf.mxu0
        %v1097 = vadd.f32 %v478, %v1096
        %1098 = vmatmul.bf16.gmra.mxu0 %v774
        %v1099 = vpop.f32.mrf.mxu0
        %v1100 = vadd.f32 %v478, %v1099
        %v1101 = vpop.f32.mrf.mxu0
        %v1102 = vadd.f32 %v478, %v1101
        %1103 = vmatmul.bf16.gmra.mxu0 %v777
        %v1104 = vpop.f32.mrf.mxu0
        %v1105 = vadd.f32 %v478, %v1104
        %v1106 = vpop.f32.mrf.mxu0
        %v1107 = vadd.f32 %v478, %v1106
        %1108 = vmatmul.bf16.gmra.mxu0 %v780
        %v1109 = vpop.f32.mrf.mxu0
        %v1110 = vadd.f32 %v478, %v1109
        %v1111 = vpop.f32.mrf.mxu0
        %v1112 = vadd.f32 %v478, %v1111
        %1113 = vmatmul.bf16.gmra.mxu0 %v783
        %v1114 = vpop.f32.mrf.mxu0
        %v1115 = vadd.f32 %v478, %v1114
        %v1116 = vpop.f32.mrf.mxu0
        %v1117 = vadd.f32 %v478, %v1116
        %1118 = vmatmul.bf16.gmra.mxu0 %v786
        %v1119 = vpop.f32.mrf.mxu0
        %v1120 = vadd.f32 %v478, %v1119
        %v1121 = vpop.f32.mrf.mxu0
        %v1122 = vadd.f32 %v478, %v1121
        %1123 = vmatmul.bf16.gmra.mxu0 %v789
        %v1124 = vpop.f32.mrf.mxu0
        %v1125 = vadd.f32 %v478, %v1124
        %v1126 = vpop.f32.mrf.mxu0
        %v1127 = vadd.f32 %v478, %v1126
        %1128 = vmatmul.bf16.gmra.mxu0 %v792
        %v1129 = vpop.f32.mrf.mxu0
        %v1130 = vadd.f32 %v478, %v1129
        %v1131 = vpop.f32.mrf.mxu0
        %v1132 = vadd.f32 %v478, %v1131
        %1133 = vmatmul.bf16.gmra.mxu0 %v795
        %v1134 = vpop.f32.mrf.mxu0
        %v1135 = vadd.f32 %v478, %v1134
        %v1136 = vpop.f32.mrf.mxu0
        %v1137 = vadd.f32 %v478, %v1136
        %1138 = vmatmul.bf16.gmra.mxu0 %v798
        %v1139 = vpop.f32.mrf.mxu0
        %v1140 = vadd.f32 %v478, %v1139
        %v1141 = vpop.f32.mrf.mxu0
        %v1142 = vadd.f32 %v478, %v1141
        %1143 = vmatmul.bf16.gmra.mxu0 %v801
        %v1144 = vpop.f32.mrf.mxu0
        %v1145 = vadd.f32 %v478, %v1144
        %v1146 = vpop.f32.mrf.mxu0
        %v1147 = vadd.f32 %v478, %v1146
        %1148 = vmatmul.bf16.gmra.mxu0 %v804
        %v1149 = vpop.f32.mrf.mxu0
        %v1150 = vadd.f32 %v478, %v1149
        %v1151 = vpop.f32.mrf.mxu0
        %v1152 = vadd.f32 %v478, %v1151
        %1153 = vmatmul.bf16.gmra.mxu0 %v807
        %v1154 = vpop.f32.mrf.mxu0
        %v1155 = vadd.f32 %v478, %v1154
        %v1156 = vpop.f32.mrf.mxu0
        %v1157 = vadd.f32 %v478, %v1156
        %1158 = vmatmul.bf16.gmra.mxu0 %v810
        %v1159 = vpop.f32.mrf.mxu0
        %v1160 = vadd.f32 %v478, %v1159
        %v1161 = vpop.f32.mrf.mxu0
        %v1162 = vadd.f32 %v478, %v1161
        %1163 = vmatmul.bf16.gmra.mxu0 %v813
        %v1164 = vpop.f32.mrf.mxu0
        %v1165 = vadd.f32 %v478, %v1164
        %v1166 = vpop.f32.mrf.mxu0
        %v1167 = vadd.f32 %v478, %v1166
        %1168 = vmatmul.bf16.gmra.mxu0 %v816
        %v1169 = vpop.f32.mrf.mxu0
        %v1170 = vadd.f32 %v478, %v1169
        %v1171 = vpop.f32.mrf.mxu0
        %v1172 = vadd.f32 %v478, %v1171
        %1173 = vdwg.mxu0
        %1174 = vmatpush.bf16.msra.mxu0 0
        %1175 = vmatpush.bf16.msra.mxu0 0
        %1176 = vmatpush.bf16.msra.mxu0 %v710
        %1177 = vmatpush.bf16.msra.mxu0 %v701
        %1178 = vmatpush.bf16.msra.mxu0 %v692
        %1179 = vmatpush.bf16.msra.mxu0 %v683
        %1180 = vmatpush.bf16.msra.mxu0 %v674
        %1181 = vmatpush.bf16.msra.mxu0 %v665
        %1182 = vmatmul.bf16.gmra.mxu0 %v771
        %v1183 = vpop.f32.mrf.mxu0
        %v1184 = vadd.f32 %v479, %v1183
        %v1185 = vpop.f32.mrf.mxu0
        %v1186 = vadd.f32 %v479, %v1185
        %1187 = vmatmul.bf16.gmra.mxu0 %v774
        %v1188 = vpop.f32.mrf.mxu0
        %v1189 = vadd.f32 %v479, %v1188
        %v1190 = vpop.f32.mrf.mxu0
        %v1191 = vadd.f32 %v479, %v1190
        %1192 = vmatmul.bf16.gmra.mxu0 %v777
        %v1193 = vpop.f32.mrf.mxu0
        %v1194 = vadd.f32 %v479, %v1193
        %v1195 = vpop.f32.mrf.mxu0
        %v1196 = vadd.f32 %v479, %v1195
        %1197 = vmatmul.bf16.gmra.mxu0 %v780
        %v1198 = vpop.f32.mrf.mxu0
        %v1199 = vadd.f32 %v479, %v1198
        %v1200 = vpop.f32.mrf.mxu0
        %v1201 = vadd.f32 %v479, %v1200
        %1202 = vmatmul.bf16.gmra.mxu0 %v783
        %v1203 = vpop.f32.mrf.mxu0
        %v1204 = vadd.f32 %v479, %v1203
        %v1205 = vpop.f32.mrf.mxu0
        %v1206 = vadd.f32 %v479, %v1205
        %1207 = vmatmul.bf16.gmra.mxu0 %v786
        %v1208 = vpop.f32.mrf.mxu0
        %v1209 = vadd.f32 %v479, %v1208
        %v1210 = vpop.f32.mrf.mxu0
        %v1211 = vadd.f32 %v479, %v1210
        %1212 = vmatmul.bf16.gmra.mxu0 %v789
        %v1213 = vpop.f32.mrf.mxu0
        %v1214 = vadd.f32 %v479, %v1213
        %v1215 = vpop.f32.mrf.mxu0
        %v1216 = vadd.f32 %v479, %v1215
        %1217 = vmatmul.bf16.gmra.mxu0 %v792
        %v1218 = vpop.f32.mrf.mxu0
        %v1219 = vadd.f32 %v479, %v1218
        %v1220 = vpop.f32.mrf.mxu0
        %v1221 = vadd.f32 %v479, %v1220
        %1222 = vmatmul.bf16.gmra.mxu0 %v795
        %v1223 = vpop.f32.mrf.mxu0
        %v1224 = vadd.f32 %v479, %v1223
        %v1225 = vpop.f32.mrf.mxu0
        %v1226 = vadd.f32 %v479, %v1225
        %1227 = vmatmul.bf16.gmra.mxu0 %v798
        %v1228 = vpop.f32.mrf.mxu0
        %v1229 = vadd.f32 %v479, %v1228
        %v1230 = vpop.f32.mrf.mxu0
        %v1231 = vadd.f32 %v479, %v1230
        %1232 = vmatmul.bf16.gmra.mxu0 %v801
        %v1233 = vpop.f32.mrf.mxu0
        %v1234 = vadd.f32 %v479, %v1233
        %v1235 = vpop.f32.mrf.mxu0
        %v1236 = vadd.f32 %v479, %v1235
        %1237 = vmatmul.bf16.gmra.mxu0 %v804
        %v1238 = vpop.f32.mrf.mxu0
        %v1239 = vadd.f32 %v479, %v1238
        %v1240 = vpop.f32.mrf.mxu0
        %v1241 = vadd.f32 %v479, %v1240
        %1242 = vmatmul.bf16.gmra.mxu0 %v807
        %v1243 = vpop.f32.mrf.mxu0
        %v1244 = vadd.f32 %v479, %v1243
        %v1245 = vpop.f32.mrf.mxu0
        %v1246 = vadd.f32 %v479, %v1245
        %1247 = vmatmul.bf16.gmra.mxu0 %v810
        %v1248 = vpop.f32.mrf.mxu0
        %v1249 = vadd.f32 %v479, %v1248
        %v1250 = vpop.f32.mrf.mxu0
        %v1251 = vadd.f32 %v479, %v1250
        %1252 = vmatmul.bf16.gmra.mxu0 %v813
        %v1253 = vpop.f32.mrf.mxu0
        %v1254 = vadd.f32 %v479, %v1253
        %v1255 = vpop.f32.mrf.mxu0
        %v1256 = vadd.f32 %v479, %v1255
        %1257 = vmatmul.bf16.gmra.mxu0 %v816
        %v1258 = vpop.f32.mrf.mxu0
        %v1259 = vadd.f32 %v479, %v1258
        %v1260 = vpop.f32.mrf.mxu0
        %v1261 = vadd.f32 %v479, %v1260
        %1262 = vdwg.mxu0
        %1263 = vmatpush.bf16.msra.mxu0 0
        %1264 = vmatpush.bf16.msra.mxu0 0
        %1265 = vmatpush.bf16.msra.mxu0 %v711
        %1266 = vmatpush.bf16.msra.mxu0 %v702
        %1267 = vmatpush.bf16.msra.mxu0 %v693
        %1268 = vmatpush.bf16.msra.mxu0 %v684
        %1269 = vmatpush.bf16.msra.mxu0 %v675
        %1270 = vmatpush.bf16.msra.mxu0 %v666
        %1271 = vmatmul.bf16.gmra.mxu0 %v771
        %v1272 = vpop.f32.mrf.mxu0
        %v1273 = vadd.f32 %v480, %v1272
        %v1274 = vpop.f32.mrf.mxu0
        %v1275 = vadd.f32 %v480, %v1274
        %1276 = vmatmul.bf16.gmra.mxu0 %v774
        %v1277 = vpop.f32.mrf.mxu0
        %v1278 = vadd.f32 %v480, %v1277
        %v1279 = vpop.f32.mrf.mxu0
        %v1280 = vadd.f32 %v480, %v1279
        %1281 = vmatmul.bf16.gmra.mxu0 %v777
        %v1282 = vpop.f32.mrf.mxu0
        %v1283 = vadd.f32 %v480, %v1282
        %v1284 = vpop.f32.mrf.mxu0
        %v1285 = vadd.f32 %v480, %v1284
        %1286 = vmatmul.bf16.gmra.mxu0 %v780
        %v1287 = vpop.f32.mrf.mxu0
        %v1288 = vadd.f32 %v480, %v1287
        %v1289 = vpop.f32.mrf.mxu0
        %v1290 = vadd.f32 %v480, %v1289
        %1291 = vmatmul.bf16.gmra.mxu0 %v783
        %v1292 = vpop.f32.mrf.mxu0
        %v1293 = vadd.f32 %v480, %v1292
        %v1294 = vpop.f32.mrf.mxu0
        %v1295 = vadd.f32 %v480, %v1294
        %1296 = vmatmul.bf16.gmra.mxu0 %v786
        %v1297 = vpop.f32.mrf.mxu0
        %v1298 = vadd.f32 %v480, %v1297
        %v1299 = vpop.f32.mrf.mxu0
        %v1300 = vadd.f32 %v480, %v1299
        %1301 = vmatmul.bf16.gmra.mxu0 %v789
        %v1302 = vpop.f32.mrf.mxu0
        %v1303 = vadd.f32 %v480, %v1302
        %v1304 = vpop.f32.mrf.mxu0
        %v1305 = vadd.f32 %v480, %v1304
        %1306 = vmatmul.bf16.gmra.mxu0 %v792
        %v1307 = vpop.f32.mrf.mxu0
        %v1308 = vadd.f32 %v480, %v1307
        %v1309 = vpop.f32.mrf.mxu0
        %v1310 = vadd.f32 %v480, %v1309
        %1311 = vmatmul.bf16.gmra.mxu0 %v795
        %v1312 = vpop.f32.mrf.mxu0
        %v1313 = vadd.f32 %v480, %v1312
        %v1314 = vpop.f32.mrf.mxu0
        %v1315 = vadd.f32 %v480, %v1314
        %1316 = vmatmul.bf16.gmra.mxu0 %v798
        %v1317 = vpop.f32.mrf.mxu0
        %v1318 = vadd.f32 %v480, %v1317
        %v1319 = vpop.f32.mrf.mxu0
        %v1320 = vadd.f32 %v480, %v1319
        %1321 = vmatmul.bf16.gmra.mxu0 %v801
        %v1322 = vpop.f32.mrf.mxu0
        %v1323 = vadd.f32 %v480, %v1322
        %v1324 = vpop.f32.mrf.mxu0
        %v1325 = vadd.f32 %v480, %v1324
        %1326 = vmatmul.bf16.gmra.mxu0 %v804
        %v1327 = vpop.f32.mrf.mxu0
        %v1328 = vadd.f32 %v480, %v1327
        %v1329 = vpop.f32.mrf.mxu0
        %v1330 = vadd.f32 %v480, %v1329
        %1331 = vmatmul.bf16.gmra.mxu0 %v807
        %v1332 = vpop.f32.mrf.mxu0
        %v1333 = vadd.f32 %v480, %v1332
        %v1334 = vpop.f32.mrf.mxu0
        %v1335 = vadd.f32 %v480, %v1334
        %1336 = vmatmul.bf16.gmra.mxu0 %v810
        %v1337 = vpop.f32.mrf.mxu0
        %v1338 = vadd.f32 %v480, %v1337
        %v1339 = vpop.f32.mrf.mxu0
        %v1340 = vadd.f32 %v480, %v1339
        %1341 = vmatmul.bf16.gmra.mxu0 %v813
        %v1342 = vpop.f32.mrf.mxu0
        %v1343 = vadd.f32 %v480, %v1342
        %v1344 = vpop.f32.mrf.mxu0
        %v1345 = vadd.f32 %v480, %v1344
        %1346 = vmatmul.bf16.gmra.mxu0 %v816
        %v1347 = vpop.f32.mrf.mxu0
        %v1348 = vadd.f32 %v480, %v1347
        %v1349 = vpop.f32.mrf.mxu0
        %v1350 = vadd.f32 %v480, %v1349
        %1351 = vdwg.mxu0
        %1352 = vmatpush.bf16.msra.mxu0 0
        %1353 = vmatpush.bf16.msra.mxu0 0
        %1354 = vmatpush.bf16.msra.mxu0 %v712
        %1355 = vmatpush.bf16.msra.mxu0 %v703
        %1356 = vmatpush.bf16.msra.mxu0 %v694
        %1357 = vmatpush.bf16.msra.mxu0 %v685
        %1358 = vmatpush.bf16.msra.mxu0 %v676
        %1359 = vmatpush.bf16.msra.mxu0 %v667
        %1360 = vmatmul.bf16.gmra.mxu0 %v771
        %v1361 = vpop.f32.mrf.mxu0
        %v1362 = vadd.f32 %v481, %v1361
        %v1363 = vpop.f32.mrf.mxu0
        %v1364 = vadd.f32 %v481, %v1363
        %1365 = vmatmul.bf16.gmra.mxu0 %v774
        %v1366 = vpop.f32.mrf.mxu0
        %v1367 = vadd.f32 %v481, %v1366
        %v1368 = vpop.f32.mrf.mxu0
        %v1369 = vadd.f32 %v481, %v1368
        %1370 = vmatmul.bf16.gmra.mxu0 %v777
        %v1371 = vpop.f32.mrf.mxu0
        %v1372 = vadd.f32 %v481, %v1371
        %v1373 = vpop.f32.mrf.mxu0
        %v1374 = vadd.f32 %v481, %v1373
        %1375 = vmatmul.bf16.gmra.mxu0 %v780
        %v1376 = vpop.f32.mrf.mxu0
        %v1377 = vadd.f32 %v481, %v1376
        %v1378 = vpop.f32.mrf.mxu0
        %v1379 = vadd.f32 %v481, %v1378
        %1380 = vmatmul.bf16.gmra.mxu0 %v783
        %v1381 = vpop.f32.mrf.mxu0
        %v1382 = vadd.f32 %v481, %v1381
        %v1383 = vpop.f32.mrf.mxu0
        %v1384 = vadd.f32 %v481, %v1383
        %1385 = vmatmul.bf16.gmra.mxu0 %v786
        %v1386 = vpop.f32.mrf.mxu0
        %v1387 = vadd.f32 %v481, %v1386
        %v1388 = vpop.f32.mrf.mxu0
        %v1389 = vadd.f32 %v481, %v1388
        %1390 = vmatmul.bf16.gmra.mxu0 %v789
        %v1391 = vpop.f32.mrf.mxu0
        %v1392 = vadd.f32 %v481, %v1391
        %v1393 = vpop.f32.mrf.mxu0
        %v1394 = vadd.f32 %v481, %v1393
        %1395 = vmatmul.bf16.gmra.mxu0 %v792
        %v1396 = vpop.f32.mrf.mxu0
        %v1397 = vadd.f32 %v481, %v1396
        %v1398 = vpop.f32.mrf.mxu0
        %v1399 = vadd.f32 %v481, %v1398
        %1400 = vmatmul.bf16.gmra.mxu0 %v795
        %v1401 = vpop.f32.mrf.mxu0
        %v1402 = vadd.f32 %v481, %v1401
        %v1403 = vpop.f32.mrf.mxu0
        %v1404 = vadd.f32 %v481, %v1403
        %1405 = vmatmul.bf16.gmra.mxu0 %v798
        %v1406 = vpop.f32.mrf.mxu0
        %v1407 = vadd.f32 %v481, %v1406
        %v1408 = vpop.f32.mrf.mxu0
        %v1409 = vadd.f32 %v481, %v1408
        %1410 = vmatmul.bf16.gmra.mxu0 %v801
        %v1411 = vpop.f32.mrf.mxu0
        %v1412 = vadd.f32 %v481, %v1411
        %v1413 = vpop.f32.mrf.mxu0
        %v1414 = vadd.f32 %v481, %v1413
        %1415 = vmatmul.bf16.gmra.mxu0 %v804
        %v1416 = vpop.f32.mrf.mxu0
        %v1417 = vadd.f32 %v481, %v1416
        %v1418 = vpop.f32.mrf.mxu0
        %v1419 = vadd.f32 %v481, %v1418
        %1420 = vmatmul.bf16.gmra.mxu0 %v807
        %v1421 = vpop.f32.mrf.mxu0
        %v1422 = vadd.f32 %v481, %v1421
        %v1423 = vpop.f32.mrf.mxu0
        %v1424 = vadd.f32 %v481, %v1423
        %1425 = vmatmul.bf16.gmra.mxu0 %v810
        %v1426 = vpop.f32.mrf.mxu0
        %v1427 = vadd.f32 %v481, %v1426
        %v1428 = vpop.f32.mrf.mxu0
        %v1429 = vadd.f32 %v481, %v1428
        %1430 = vmatmul.bf16.gmra.mxu0 %v813
        %v1431 = vpop.f32.mrf.mxu0
        %v1432 = vadd.f32 %v481, %v1431
        %v1433 = vpop.f32.mrf.mxu0
        %v1434 = vadd.f32 %v481, %v1433
        %1435 = vmatmul.bf16.gmra.mxu0 %v816
        %v1436 = vpop.f32.mrf.mxu0
        %v1437 = vadd.f32 %v481, %v1436
        %v1438 = vpop.f32.mrf.mxu0
        %v1439 = vadd.f32 %v481, %v1438
        %1440 = vdwg.mxu0
        %1441 = vmatpush.bf16.msra.mxu0 0
        %1442 = vmatpush.bf16.msra.mxu0 0
        %1443 = vmatpush.bf16.msra.mxu0 %v713
        %1444 = vmatpush.bf16.msra.mxu0 %v704
        %1445 = vmatpush.bf16.msra.mxu0 %v695
        %1446 = vmatpush.bf16.msra.mxu0 %v686
        %1447 = vmatpush.bf16.msra.mxu0 %v677
        %1448 = vmatpush.bf16.msra.mxu0 %v668
        %1449 = vmatmul.bf16.gmra.mxu0 %v771
        %v1450 = vpop.f32.mrf.mxu0
        %v1451 = vadd.f32 %v482, %v1450
        %v1452 = vpop.f32.mrf.mxu0
        %v1453 = vadd.f32 %v482, %v1452
        %1454 = vmatmul.bf16.gmra.mxu0 %v774
        %v1455 = vpop.f32.mrf.mxu0
        %v1456 = vadd.f32 %v482, %v1455
        %v1457 = vpop.f32.mrf.mxu0
        %v1458 = vadd.f32 %v482, %v1457
        %1459 = vmatmul.bf16.gmra.mxu0 %v777
        %v1460 = vpop.f32.mrf.mxu0
        %v1461 = vadd.f32 %v482, %v1460
        %v1462 = vpop.f32.mrf.mxu0
        %v1463 = vadd.f32 %v482, %v1462
        %1464 = vmatmul.bf16.gmra.mxu0 %v780
        %v1465 = vpop.f32.mrf.mxu0
        %v1466 = vadd.f32 %v482, %v1465
        %v1467 = vpop.f32.mrf.mxu0
        %v1468 = vadd.f32 %v482, %v1467
        %1469 = vmatmul.bf16.gmra.mxu0 %v783
        %v1470 = vpop.f32.mrf.mxu0
        %v1471 = vadd.f32 %v482, %v1470
        %v1472 = vpop.f32.mrf.mxu0
        %v1473 = vadd.f32 %v482, %v1472
        %1474 = vmatmul.bf16.gmra.mxu0 %v786
        %v1475 = vpop.f32.mrf.mxu0
        %v1476 = vadd.f32 %v482, %v1475
        %v1477 = vpop.f32.mrf.mxu0
        %v1478 = vadd.f32 %v482, %v1477
        %1479 = vmatmul.bf16.gmra.mxu0 %v789
        %v1480 = vpop.f32.mrf.mxu0
        %v1481 = vadd.f32 %v482, %v1480
        %v1482 = vpop.f32.mrf.mxu0
        %v1483 = vadd.f32 %v482, %v1482
        %1484 = vmatmul.bf16.gmra.mxu0 %v792
        %v1485 = vpop.f32.mrf.mxu0
        %v1486 = vadd.f32 %v482, %v1485
        %v1487 = vpop.f32.mrf.mxu0
        %v1488 = vadd.f32 %v482, %v1487
        %1489 = vmatmul.bf16.gmra.mxu0 %v795
        %v1490 = vpop.f32.mrf.mxu0
        %v1491 = vadd.f32 %v482, %v1490
        %v1492 = vpop.f32.mrf.mxu0
        %v1493 = vadd.f32 %v482, %v1492
        %1494 = vmatmul.bf16.gmra.mxu0 %v798
        %v1495 = vpop.f32.mrf.mxu0
        %v1496 = vadd.f32 %v482, %v1495
        %v1497 = vpop.f32.mrf.mxu0
        %v1498 = vadd.f32 %v482, %v1497
        %1499 = vmatmul.bf16.gmra.mxu0 %v801
        %v1500 = vpop.f32.mrf.mxu0
        %v1501 = vadd.f32 %v482, %v1500
        %v1502 = vpop.f32.mrf.mxu0
        %v1503 = vadd.f32 %v482, %v1502
        %1504 = vmatmul.bf16.gmra.mxu0 %v804
        %v1505 = vpop.f32.mrf.mxu0
        %v1506 = vadd.f32 %v482, %v1505
        %v1507 = vpop.f32.mrf.mxu0
        %v1508 = vadd.f32 %v482, %v1507
        %1509 = vmatmul.bf16.gmra.mxu0 %v807
        %v1510 = vpop.f32.mrf.mxu0
        %v1511 = vadd.f32 %v482, %v1510
        %v1512 = vpop.f32.mrf.mxu0
        %v1513 = vadd.f32 %v482, %v1512
        %1514 = vmatmul.bf16.gmra.mxu0 %v810
        %v1515 = vpop.f32.mrf.mxu0
        %v1516 = vadd.f32 %v482, %v1515
        %v1517 = vpop.f32.mrf.mxu0
        %v1518 = vadd.f32 %v482, %v1517
        %1519 = vmatmul.bf16.gmra.mxu0 %v813
        %v1520 = vpop.f32.mrf.mxu0
        %v1521 = vadd.f32 %v482, %v1520
        %v1522 = vpop.f32.mrf.mxu0
        %v1523 = vadd.f32 %v482, %v1522
        %1524 = vmatmul.bf16.gmra.mxu0 %v816
        %v1525 = vpop.f32.mrf.mxu0
        %v1526 = vadd.f32 %v482, %v1525
        %v1527 = vpop.f32.mrf.mxu0
        %v1528 = vadd.f32 %v482, %v1527
        %1529 = vdwg.mxu0
        %1530 = vmatpush.bf16.msra.mxu0 0
        %1531 = vmatpush.bf16.msra.mxu0 0
        %1532 = vmatpush.bf16.msra.mxu0 %v714
        %1533 = vmatpush.bf16.msra.mxu0 %v705
        %1534 = vmatpush.bf16.msra.mxu0 %v696
        %1535 = vmatpush.bf16.msra.mxu0 %v687
        %1536 = vmatpush.bf16.msra.mxu0 %v678
        %1537 = vmatpush.bf16.msra.mxu0 %v669
        %1538 = vmatmul.bf16.gmra.mxu0 %v771
        %v1539 = vpop.f32.mrf.mxu0
        %v1540 = vadd.f32 %v483, %v1539
        %v1541 = vpop.f32.mrf.mxu0
        %v1542 = vadd.f32 %v483, %v1541
        %1543 = vmatmul.bf16.gmra.mxu0 %v774
        %v1544 = vpop.f32.mrf.mxu0
        %v1545 = vadd.f32 %v483, %v1544
        %v1546 = vpop.f32.mrf.mxu0
        %v1547 = vadd.f32 %v483, %v1546
        %1548 = vmatmul.bf16.gmra.mxu0 %v777
        %v1549 = vpop.f32.mrf.mxu0
        %v1550 = vadd.f32 %v483, %v1549
        %v1551 = vpop.f32.mrf.mxu0
        %v1552 = vadd.f32 %v483, %v1551
        %1553 = vmatmul.bf16.gmra.mxu0 %v780
        %v1554 = vpop.f32.mrf.mxu0
        %v1555 = vadd.f32 %v483, %v1554
        %v1556 = vpop.f32.mrf.mxu0
        %v1557 = vadd.f32 %v483, %v1556
        %1558 = vmatmul.bf16.gmra.mxu0 %v783
        %v1559 = vpop.f32.mrf.mxu0
        %v1560 = vadd.f32 %v483, %v1559
        %v1561 = vpop.f32.mrf.mxu0
        %v1562 = vadd.f32 %v483, %v1561
        %1563 = vmatmul.bf16.gmra.mxu0 %v786
        %v1564 = vpop.f32.mrf.mxu0
        %v1565 = vadd.f32 %v483, %v1564
        %v1566 = vpop.f32.mrf.mxu0
        %v1567 = vadd.f32 %v483, %v1566
        %1568 = vmatmul.bf16.gmra.mxu0 %v789
        %v1569 = vpop.f32.mrf.mxu0
        %v1570 = vadd.f32 %v483, %v1569
        %v1571 = vpop.f32.mrf.mxu0
        %v1572 = vadd.f32 %v483, %v1571
        %1573 = vmatmul.bf16.gmra.mxu0 %v792
        %v1574 = vpop.f32.mrf.mxu0
        %v1575 = vadd.f32 %v483, %v1574
        %v1576 = vpop.f32.mrf.mxu0
        %v1577 = vadd.f32 %v483, %v1576
        %1578 = vmatmul.bf16.gmra.mxu0 %v795
        %v1579 = vpop.f32.mrf.mxu0
        %v1580 = vadd.f32 %v483, %v1579
        %v1581 = vpop.f32.mrf.mxu0
        %v1582 = vadd.f32 %v483, %v1581
        %1583 = vmatmul.bf16.gmra.mxu0 %v798
        %v1584 = vpop.f32.mrf.mxu0
        %v1585 = vadd.f32 %v483, %v1584
        %v1586 = vpop.f32.mrf.mxu0
        %v1587 = vadd.f32 %v483, %v1586
        %1588 = vmatmul.bf16.gmra.mxu0 %v801
        %v1589 = vpop.f32.mrf.mxu0
        %v1590 = vadd.f32 %v483, %v1589
        %v1591 = vpop.f32.mrf.mxu0
        %v1592 = vadd.f32 %v483, %v1591
        %1593 = vmatmul.bf16.gmra.mxu0 %v804
        %v1594 = vpop.f32.mrf.mxu0
        %v1595 = vadd.f32 %v483, %v1594
        %v1596 = vpop.f32.mrf.mxu0
        %v1597 = vadd.f32 %v483, %v1596
        %1598 = vmatmul.bf16.gmra.mxu0 %v807
        %v1599 = vpop.f32.mrf.mxu0
        %v1600 = vadd.f32 %v483, %v1599
        %v1601 = vpop.f32.mrf.mxu0
        %v1602 = vadd.f32 %v483, %v1601
        %1603 = vmatmul.bf16.gmra.mxu0 %v810
        %v1604 = vpop.f32.mrf.mxu0
        %v1605 = vadd.f32 %v483, %v1604
        %v1606 = vpop.f32.mrf.mxu0
        %v1607 = vadd.f32 %v483, %v1606
        %1608 = vmatmul.bf16.gmra.mxu0 %v813
        %v1609 = vpop.f32.mrf.mxu0
        %v1610 = vadd.f32 %v483, %v1609
        %v1611 = vpop.f32.mrf.mxu0
        %v1612 = vadd.f32 %v483, %v1611
        %1613 = vmatmul.bf16.gmra.mxu0 %v816
        %v1614 = vpop.f32.mrf.mxu0
        %v1615 = vadd.f32 %v483, %v1614
        %v1616 = vpop.f32.mrf.mxu0
        %v1617 = vadd.f32 %v483, %v1616
        %1618 = vdwg.mxu0
        %v1619 = vpack.c.bf16 %v917, %v828
        %v1620 = vpack.c.bf16 %v1095, %v1006
        %v1621 = vpack.c.bf16 %v1273, %v1184
        %v1622 = vpack.c.bf16 %v1451, %v1362
        %v1623 = vpack.c.bf16 %v1540, %v1540
        %v1624 = vpack.c.bf16 %v919, %v830
        %v1625 = vpack.c.bf16 %v1097, %v1008
        %v1626 = vpack.c.bf16 %v1275, %v1186
        %v1627 = vpack.c.bf16 %v1453, %v1364
        %v1628 = vpack.c.bf16 %v1542, %v1542
        %v1629 = vpack.c.bf16 %v922, %v833
        %v1630 = vpack.c.bf16 %v1100, %v1011
        %v1631 = vpack.c.bf16 %v1278, %v1189
        %v1632 = vpack.c.bf16 %v1456, %v1367
        %v1633 = vpack.c.bf16 %v1545, %v1545
        %v1634 = vpack.c.bf16 %v924, %v835
        %v1635 = vpack.c.bf16 %v1102, %v1013
        %v1636 = vpack.c.bf16 %v1280, %v1191
        %v1637 = vpack.c.bf16 %v1458, %v1369
        %v1638 = vpack.c.bf16 %v1547, %v1547
        %v1639 = vpack.c.bf16 %v927, %v838
        %v1640 = vpack.c.bf16 %v1105, %v1016
        %v1641 = vpack.c.bf16 %v1283, %v1194
        %v1642 = vpack.c.bf16 %v1461, %v1372
        %v1643 = vpack.c.bf16 %v1550, %v1550
        %v1644 = vpack.c.bf16 %v929, %v840
        %v1645 = vpack.c.bf16 %v1107, %v1018
        %v1646 = vpack.c.bf16 %v1285, %v1196
        %v1647 = vpack.c.bf16 %v1463, %v1374
        %v1648 = vpack.c.bf16 %v1552, %v1552
        %v1649 = vpack.c.bf16 %v932, %v843
        %v1650 = vpack.c.bf16 %v1110, %v1021
        %v1651 = vpack.c.bf16 %v1288, %v1199
        %v1652 = vpack.c.bf16 %v1466, %v1377
        %v1653 = vpack.c.bf16 %v1555, %v1555
        %v1654 = vpack.c.bf16 %v934, %v845
        %v1655 = vpack.c.bf16 %v1112, %v1023
        %v1656 = vpack.c.bf16 %v1290, %v1201
        %v1657 = vpack.c.bf16 %v1468, %v1379
        %v1658 = vpack.c.bf16 %v1557, %v1557
        %v1659 = vpack.c.bf16 %v937, %v848
        %v1660 = vpack.c.bf16 %v1115, %v1026
        %v1661 = vpack.c.bf16 %v1293, %v1204
        %v1662 = vpack.c.bf16 %v1471, %v1382
        %v1663 = vpack.c.bf16 %v1560, %v1560
        %v1664 = vpack.c.bf16 %v939, %v850
        %v1665 = vpack.c.bf16 %v1117, %v1028
        %v1666 = vpack.c.bf16 %v1295, %v1206
        %v1667 = vpack.c.bf16 %v1473, %v1384
        %v1668 = vpack.c.bf16 %v1562, %v1562
        %v1669 = vpack.c.bf16 %v942, %v853
        %v1670 = vpack.c.bf16 %v1120, %v1031
        %v1671 = vpack.c.bf16 %v1298, %v1209
        %v1672 = vpack.c.bf16 %v1476, %v1387
        %v1673 = vpack.c.bf16 %v1565, %v1565
        %v1674 = vpack.c.bf16 %v944, %v855
        %v1675 = vpack.c.bf16 %v1122, %v1033
        %v1676 = vpack.c.bf16 %v1300, %v1211
        %v1677 = vpack.c.bf16 %v1478, %v1389
        %v1678 = vpack.c.bf16 %v1567, %v1567
        %v1679 = vpack.c.bf16 %v947, %v858
        %v1680 = vpack.c.bf16 %v1125, %v1036
        %v1681 = vpack.c.bf16 %v1303, %v1214
        %v1682 = vpack.c.bf16 %v1481, %v1392
        %v1683 = vpack.c.bf16 %v1570, %v1570
        %v1684 = vpack.c.bf16 %v949, %v860
        %v1685 = vpack.c.bf16 %v1127, %v1038
        %v1686 = vpack.c.bf16 %v1305, %v1216
        %v1687 = vpack.c.bf16 %v1483, %v1394
        %v1688 = vpack.c.bf16 %v1572, %v1572
        %v1689 = vpack.c.bf16 %v952, %v863
        %v1690 = vpack.c.bf16 %v1130, %v1041
        %v1691 = vpack.c.bf16 %v1308, %v1219
        %v1692 = vpack.c.bf16 %v1486, %v1397
        %v1693 = vpack.c.bf16 %v1575, %v1575
        %v1694 = vpack.c.bf16 %v954, %v865
        %v1695 = vpack.c.bf16 %v1132, %v1043
        %v1696 = vpack.c.bf16 %v1310, %v1221
        %v1697 = vpack.c.bf16 %v1488, %v1399
        %v1698 = vpack.c.bf16 %v1577, %v1577
        %v1699 = vpack.c.bf16 %v957, %v868
        %v1700 = vpack.c.bf16 %v1135, %v1046
        %v1701 = vpack.c.bf16 %v1313, %v1224
        %v1702 = vpack.c.bf16 %v1491, %v1402
        %v1703 = vpack.c.bf16 %v1580, %v1580
        %v1704 = vpack.c.bf16 %v959, %v870
        %v1705 = vpack.c.bf16 %v1137, %v1048
        %v1706 = vpack.c.bf16 %v1315, %v1226
        %v1707 = vpack.c.bf16 %v1493, %v1404
        %v1708 = vpack.c.bf16 %v1582, %v1582
        %v1709 = vpack.c.bf16 %v962, %v873
        %v1710 = vpack.c.bf16 %v1140, %v1051
        %v1711 = vpack.c.bf16 %v1318, %v1229
        %v1712 = vpack.c.bf16 %v1496, %v1407
        %v1713 = vpack.c.bf16 %v1585, %v1585
        %v1714 = vpack.c.bf16 %v964, %v875
        %v1715 = vpack.c.bf16 %v1142, %v1053
        %v1716 = vpack.c.bf16 %v1320, %v1231
        %v1717 = vpack.c.bf16 %v1498, %v1409
        %v1718 = vpack.c.bf16 %v1587, %v1587
        %v1719 = vpack.c.bf16 %v967, %v878
        %v1720 = vpack.c.bf16 %v1145, %v1056
        %v1721 = vpack.c.bf16 %v1323, %v1234
        %v1722 = vpack.c.bf16 %v1501, %v1412
        %v1723 = vpack.c.bf16 %v1590, %v1590
        %v1724 = vpack.c.bf16 %v969, %v880
        %v1725 = vpack.c.bf16 %v1147, %v1058
        %v1726 = vpack.c.bf16 %v1325, %v1236
        %v1727 = vpack.c.bf16 %v1503, %v1414
        %v1728 = vpack.c.bf16 %v1592, %v1592
        %v1729 = vpack.c.bf16 %v972, %v883
        %v1730 = vpack.c.bf16 %v1150, %v1061
        %v1731 = vpack.c.bf16 %v1328, %v1239
        %v1732 = vpack.c.bf16 %v1506, %v1417
        %v1733 = vpack.c.bf16 %v1595, %v1595
        %v1734 = vpack.c.bf16 %v974, %v885
        %v1735 = vpack.c.bf16 %v1152, %v1063
        %v1736 = vpack.c.bf16 %v1330, %v1241
        %v1737 = vpack.c.bf16 %v1508, %v1419
        %v1738 = vpack.c.bf16 %v1597, %v1597
        %v1739 = vpack.c.bf16 %v977, %v888
        %v1740 = vpack.c.bf16 %v1155, %v1066
        %v1741 = vpack.c.bf16 %v1333, %v1244
        %v1742 = vpack.c.bf16 %v1511, %v1422
        %v1743 = vpack.c.bf16 %v1600, %v1600
        %v1744 = vpack.c.bf16 %v979, %v890
        %v1745 = vpack.c.bf16 %v1157, %v1068
        %v1746 = vpack.c.bf16 %v1335, %v1246
        %v1747 = vpack.c.bf16 %v1513, %v1424
        %v1748 = vpack.c.bf16 %v1602, %v1602
        %v1749 = vpack.c.bf16 %v982, %v893
        %v1750 = vpack.c.bf16 %v1160, %v1071
        %v1751 = vpack.c.bf16 %v1338, %v1249
        %v1752 = vpack.c.bf16 %v1516, %v1427
        %v1753 = vpack.c.bf16 %v1605, %v1605
        %v1754 = vpack.c.bf16 %v984, %v895
        %v1755 = vpack.c.bf16 %v1162, %v1073
        %v1756 = vpack.c.bf16 %v1340, %v1251
        %v1757 = vpack.c.bf16 %v1518, %v1429
        %v1758 = vpack.c.bf16 %v1607, %v1607
        %v1759 = vpack.c.bf16 %v987, %v898
        %v1760 = vpack.c.bf16 %v1165, %v1076
        %v1761 = vpack.c.bf16 %v1343, %v1254
        %v1762 = vpack.c.bf16 %v1521, %v1432
        %v1763 = vpack.c.bf16 %v1610, %v1610
        %v1764 = vpack.c.bf16 %v989, %v900
        %v1765 = vpack.c.bf16 %v1167, %v1078
        %v1766 = vpack.c.bf16 %v1345, %v1256
        %v1767 = vpack.c.bf16 %v1523, %v1434
        %v1768 = vpack.c.bf16 %v1612, %v1612
        %v1769 = vpack.c.bf16 %v992, %v903
        %v1770 = vpack.c.bf16 %v1170, %v1081
        %v1771 = vpack.c.bf16 %v1348, %v1259
        %v1772 = vpack.c.bf16 %v1526, %v1437
        %v1773 = vpack.c.bf16 %v1615, %v1615
        %v1774 = vpack.c.bf16 %v994, %v905
        %v1775 = vpack.c.bf16 %v1172, %v1083
        %v1776 = vpack.c.bf16 %v1350, %v1261
        %v1777 = vpack.c.bf16 %v1528, %v1439
        %v1778 = vpack.c.bf16 %v1617, %v1617
        %v1779 = vld [vmem:[%s6] sm:$0xff]
        %v1780 = vld [vmem:[%s6 + $0x8] sm:$0xff]
        %v1781 = vld [vmem:[%s6 + $0x10] sm:$0xff]
        %v1782 = vld [vmem:[%s6 + $0x18] sm:$0xff]
        %v1783 = vld [vmem:[%s6 + $0x20] sm:$0xff]
        %v1784 = vld [vmem:[%s6 + $0x28] sm:$0xff]
        %v1785 = vld [vmem:[%s6 + $0x30] sm:$0xff]
        %v1786 = vld [vmem:[%s6 + $0x38] sm:$0xff]
        %v1787 = vld [vmem:[%s6 + $0x40] sm:$0xff]
        %v1788 = vld [vmem:[%s6 + $0x48] sm:$0xff]
        %v1789 = vld [vmem:[%s6 + $0x50] sm:$0xff]
        %v1790 = vld [vmem:[%s6 + $0x58] sm:$0xff]
        %v1791 = vld [vmem:[%s6 + $0x60] sm:$0xff]
        %v1792 = vld [vmem:[%s6 + $0x68] sm:$0xff]
        %v1793 = vld [vmem:[%s6 + $0x70] sm:$0xff]
        %v1794 = vld [vmem:[%s6 + $0x78] sm:$0xff]
        %v1795 = vld [vmem:[%s6 + $0x80] sm:$0xff]
        %v1796 = vld [vmem:[%s6 + $0x88] sm:$0xff]
        %v1797 = vld [vmem:[%s6 + $0x90] sm:$0xff]
        %v1798 = vld [vmem:[%s6 + $0x98] sm:$0xff]
        %v1799 = vld [vmem:[%s6 + $0xa0] sm:$0xff]
        %v1800 = vld [vmem:[%s6 + $0xa8] sm:$0xff]
        %v1801 = vld [vmem:[%s6 + $0xb0] sm:$0xff]
        %v1802 = vld [vmem:[%s6 + $0xb8] sm:$0xff]
        %v1803 = vld [vmem:[%s6 + $0xc0] sm:$0xff]
        %v1804 = vld [vmem:[%s6 + $0xc8] sm:$0xff]
        %v1805 = vld [vmem:[%s6 + $0xd0] sm:$0xff]
        %v1806 = vld [vmem:[%s6 + $0xd8] sm:$0xff]
        %v1807 = vld [vmem:[%s6 + $0xe0] sm:$0xff]
        %v1808 = vld [vmem:[%s6 + $0xe8] sm:$0xff]
        %v1809 = vld [vmem:[%s6 + $0xf0] sm:$0xff]
        %v1810 = vld [vmem:[%s6 + $0xf8] sm:$0xff]
        %v1811 = vld [vmem:[%s1] sm:$0xff]
        %v1812 = vld [vmem:[%s1 + $0x8] sm:$0xff]
        %v1813 = vld [vmem:[%s1 + $0x10] sm:$0xff]
        %v1814 = vld [vmem:[%s1 + $0x18] sm:$0xff]
        %v1815 = vld [vmem:[%s1 + $0x20] sm:$0xff]
        %v1816 = vld [vmem:[%s1 + $0x28] sm:$0xff]
        %v1817 = vld [vmem:[%s1 + $0x30] sm:$0xff]
        %v1818 = vld [vmem:[%s1 + $0x38] sm:$0xff]
        %v1827 = vrot.slane %v1620, 4
        %v1828 = vrot.slane %v1625, 4
        %v1829 = vrot.slane %v1630, 4
        %v1830 = vrot.slane %v1635, 4
        %v1831 = vrot.slane %v1640, 4
        %v1832 = vrot.slane %v1645, 4
        %v1833 = vrot.slane %v1650, 4
        %v1834 = vrot.slane %v1655, 4
        %v1843 = vunpack.c.l.b16 %v1619
        %v1844 = vunpack.c.l.b16 %v1624
        %v1845 = vunpack.c.l.b16 %v1629
        %v1846 = vunpack.c.l.b16 %v1634
        %v1847 = vunpack.c.l.b16 %v1639
        %v1848 = vunpack.c.l.b16 %v1644
        %v1849 = vunpack.c.l.b16 %v1649
        %v1850 = vunpack.c.l.b16 %v1654
        %v1851 = vpack.c.b16 %v1844, %v1843
        %v1852 = vpack.c.b16 %v1846, %v1845
        %v1853 = vpack.c.b16 %v1848, %v1847
        %v1854 = vpack.c.b16 %v1850, %v1849
        %v1859 = vunpack.c.l.b16 %v1827
        %v1860 = vunpack.c.l.b16 %v1828
        %v1861 = vunpack.c.l.b16 %v1829
        %v1862 = vunpack.c.l.b16 %v1830
        %v1863 = vunpack.c.l.b16 %v1831
        %v1864 = vunpack.c.l.b16 %v1832
        %v1865 = vunpack.c.l.b16 %v1833
        %v1866 = vunpack.c.l.b16 %v1834
        %v1867 = vpack.c.b16 %v1860, %v1859
        %v1868 = vpack.c.b16 %v1862, %v1861
        %v1869 = vpack.c.b16 %v1864, %v1863
        %v1870 = vpack.c.b16 %v1866, %v1865
        %1875 = vmatpush.bf16.xpose.msra.mxu0 0
        %1876 = vmatpush.bf16.xpose.msra.mxu0 0
        %1877 = vmatpush.bf16.xpose.msra.mxu0 0
        %1878 = vmatpush.bf16.xpose.msra.mxu0 0
        %1879 = vmatpush.bf16.xpose.msra.mxu0 %v1870
        %1880 = vmatpush.bf16.xpose.msra.mxu0 %v1869
        %1881 = vmatpush.bf16.xpose.msra.mxu0 %v1868
        %1882 = vmatpush.bf16.xpose.msra.mxu0 %v1867
        %1883 = vmatmul.bf16.gmra.mxu0 %v1851
        %v1884 = vpop.f32.mrf.mxu0
        %v1885 = vadd.f32 %v1811, %v1884
        %v1886 = vpop.f32.mrf.mxu0
        %v1887 = vadd.f32 %v1812, %v1886
        %1888 = vmatmul.bf16.gmra.mxu0 %v1852
        %v1889 = vpop.f32.mrf.mxu0
        %v1890 = vadd.f32 %v1813, %v1889
        %v1891 = vpop.f32.mrf.mxu0
        %v1892 = vadd.f32 %v1814, %v1891
        %1893 = vmatmul.bf16.gmra.mxu0 %v1853
        %v1894 = vpop.f32.mrf.mxu0
        %v1895 = vadd.f32 %v1815, %v1894
        %v1896 = vpop.f32.mrf.mxu0
        %v1897 = vadd.f32 %v1816, %v1896
        %1898 = vmatmul.bf16.gmra.mxu0 %v1854
        %v1899 = vpop.f32.mrf.mxu0
        %v1900 = vadd.f32 %v1817, %v1899
        %v1901 = vpop.f32.mrf.mxu0
        %v1902 = vadd.f32 %v1818, %v1901
        %1903 = vdwg.mxu0
        %v1912 = vrot.slane %v1660, 4
        %v1913 = vrot.slane %v1665, 4
        %v1914 = vrot.slane %v1670, 4
        %v1915 = vrot.slane %v1675, 4
        %v1916 = vrot.slane %v1680, 4
        %v1917 = vrot.slane %v1685, 4
        %v1918 = vrot.slane %v1690, 4
        %v1919 = vrot.slane %v1695, 4
        %v1928 = vunpack.c.l.b16 %v1659
        %v1929 = vunpack.c.l.b16 %v1664
        %v1930 = vunpack.c.l.b16 %v1669
        %v1931 = vunpack.c.l.b16 %v1674
        %v1932 = vunpack.c.l.b16 %v1679
        %v1933 = vunpack.c.l.b16 %v1684
        %v1934 = vunpack.c.l.b16 %v1689
        %v1935 = vunpack.c.l.b16 %v1694
        %v1936 = vpack.c.b16 %v1929, %v1928
        %v1937 = vpack.c.b16 %v1931, %v1930
        %v1938 = vpack.c.b16 %v1933, %v1932
        %v1939 = vpack.c.b16 %v1935, %v1934
        %v1944 = vunpack.c.l.b16 %v1912
        %v1945 = vunpack.c.l.b16 %v1913
        %v1946 = vunpack.c.l.b16 %v1914
        %v1947 = vunpack.c.l.b16 %v1915
        %v1948 = vunpack.c.l.b16 %v1916
        %v1949 = vunpack.c.l.b16 %v1917
        %v1950 = vunpack.c.l.b16 %v1918
        %v1951 = vunpack.c.l.b16 %v1919
        %v1952 = vpack.c.b16 %v1945, %v1944
        %v1953 = vpack.c.b16 %v1947, %v1946
        %v1954 = vpack.c.b16 %v1949, %v1948
        %v1955 = vpack.c.b16 %v1951, %v1950
        %1960 = vmatpush.bf16.xpose.msra.mxu0 0
        %1961 = vmatpush.bf16.xpose.msra.mxu0 0
        %1962 = vmatpush.bf16.xpose.msra.mxu0 0
        %1963 = vmatpush.bf16.xpose.msra.mxu0 0
        %1964 = vmatpush.bf16.xpose.msra.mxu0 %v1955
        %1965 = vmatpush.bf16.xpose.msra.mxu0 %v1954
        %1966 = vmatpush.bf16.xpose.msra.mxu0 %v1953
        %1967 = vmatpush.bf16.xpose.msra.mxu0 %v1952
        %1968 = vmatmul.bf16.gmra.mxu0 %v1936
        %v1969 = vpop.f32.mrf.mxu0
        %v1970 = vadd.f32 %v1811, %v1969
        %v1971 = vpop.f32.mrf.mxu0
        %v1972 = vadd.f32 %v1812, %v1971
        %1973 = vmatmul.bf16.gmra.mxu0 %v1937
        %v1974 = vpop.f32.mrf.mxu0
        %v1975 = vadd.f32 %v1813, %v1974
        %v1976 = vpop.f32.mrf.mxu0
        %v1977 = vadd.f32 %v1814, %v1976
        %1978 = vmatmul.bf16.gmra.mxu0 %v1938
        %v1979 = vpop.f32.mrf.mxu0
        %v1980 = vadd.f32 %v1815, %v1979
        %v1981 = vpop.f32.mrf.mxu0
        %v1982 = vadd.f32 %v1816, %v1981
        %1983 = vmatmul.bf16.gmra.mxu0 %v1939
        %v1984 = vpop.f32.mrf.mxu0
        %v1985 = vadd.f32 %v1817, %v1984
        %v1986 = vpop.f32.mrf.mxu0
        %v1987 = vadd.f32 %v1818, %v1986
        %1988 = vdwg.mxu0
        %v1997 = vrot.slane %v1700, 4
        %v1998 = vrot.slane %v1705, 4
        %v1999 = vrot.slane %v1710, 4
        %v2000 = vrot.slane %v1715, 4
        %v2001 = vrot.slane %v1720, 4
        %v2002 = vrot.slane %v1725, 4
        %v2003 = vrot.slane %v1730, 4
        %v2004 = vrot.slane %v1735, 4
        %v2013 = vunpack.c.l.b16 %v1699
        %v2014 = vunpack.c.l.b16 %v1704
        %v2015 = vunpack.c.l.b16 %v1709
        %v2016 = vunpack.c.l.b16 %v1714
        %v2017 = vunpack.c.l.b16 %v1719
        %v2018 = vunpack.c.l.b16 %v1724
        %v2019 = vunpack.c.l.b16 %v1729
        %v2020 = vunpack.c.l.b16 %v1734
        %v2021 = vpack.c.b16 %v2014, %v2013
        %v2022 = vpack.c.b16 %v2016, %v2015
        %v2023 = vpack.c.b16 %v2018, %v2017
        %v2024 = vpack.c.b16 %v2020, %v2019
        %v2029 = vunpack.c.l.b16 %v1997
        %v2030 = vunpack.c.l.b16 %v1998
        %v2031 = vunpack.c.l.b16 %v1999
        %v2032 = vunpack.c.l.b16 %v2000
        %v2033 = vunpack.c.l.b16 %v2001
        %v2034 = vunpack.c.l.b16 %v2002
        %v2035 = vunpack.c.l.b16 %v2003
        %v2036 = vunpack.c.l.b16 %v2004
        %v2037 = vpack.c.b16 %v2030, %v2029
        %v2038 = vpack.c.b16 %v2032, %v2031
        %v2039 = vpack.c.b16 %v2034, %v2033
        %v2040 = vpack.c.b16 %v2036, %v2035
        %2045 = vmatpush.bf16.xpose.msra.mxu0 0
        %2046 = vmatpush.bf16.xpose.msra.mxu0 0
        %2047 = vmatpush.bf16.xpose.msra.mxu0 0
        %2048 = vmatpush.bf16.xpose.msra.mxu0 0
        %2049 = vmatpush.bf16.xpose.msra.mxu0 %v2040
        %2050 = vmatpush.bf16.xpose.msra.mxu0 %v2039
        %2051 = vmatpush.bf16.xpose.msra.mxu0 %v2038
        %2052 = vmatpush.bf16.xpose.msra.mxu0 %v2037
        %2053 = vmatmul.bf16.gmra.mxu0 %v2021
        %v2054 = vpop.f32.mrf.mxu0
        %v2055 = vadd.f32 %v1811, %v2054
        %v2056 = vpop.f32.mrf.mxu0
        %v2057 = vadd.f32 %v1812, %v2056
        %2058 = vmatmul.bf16.gmra.mxu0 %v2022
        %v2059 = vpop.f32.mrf.mxu0
        %v2060 = vadd.f32 %v1813, %v2059
        %v2061 = vpop.f32.mrf.mxu0
        %v2062 = vadd.f32 %v1814, %v2061
        %2063 = vmatmul.bf16.gmra.mxu0 %v2023
        %v2064 = vpop.f32.mrf.mxu0
        %v2065 = vadd.f32 %v1815, %v2064
        %v2066 = vpop.f32.mrf.mxu0
        %v2067 = vadd.f32 %v1816, %v2066
        %2068 = vmatmul.bf16.gmra.mxu0 %v2024
        %v2069 = vpop.f32.mrf.mxu0
        %v2070 = vadd.f32 %v1817, %v2069
        %v2071 = vpop.f32.mrf.mxu0
        %v2072 = vadd.f32 %v1818, %v2071
        %2073 = vdwg.mxu0
        %v2082 = vrot.slane %v1740, 4
        %v2083 = vrot.slane %v1745, 4
        %v2084 = vrot.slane %v1750, 4
        %v2085 = vrot.slane %v1755, 4
        %v2086 = vrot.slane %v1760, 4
        %v2087 = vrot.slane %v1765, 4
        %v2088 = vrot.slane %v1770, 4
        %v2089 = vrot.slane %v1775, 4
        %v2098 = vunpack.c.l.b16 %v1739
        %v2099 = vunpack.c.l.b16 %v1744
        %v2100 = vunpack.c.l.b16 %v1749
        %v2101 = vunpack.c.l.b16 %v1754
        %v2102 = vunpack.c.l.b16 %v1759
        %v2103 = vunpack.c.l.b16 %v1764
        %v2104 = vunpack.c.l.b16 %v1769
        %v2105 = vunpack.c.l.b16 %v1774
        %v2106 = vpack.c.b16 %v2099, %v2098
        %v2107 = vpack.c.b16 %v2101, %v2100
        %v2108 = vpack.c.b16 %v2103, %v2102
        %v2109 = vpack.c.b16 %v2105, %v2104
        %v2114 = vunpack.c.l.b16 %v2082
        %v2115 = vunpack.c.l.b16 %v2083
        %v2116 = vunpack.c.l.b16 %v2084
        %v2117 = vunpack.c.l.b16 %v2085
        %v2118 = vunpack.c.l.b16 %v2086
        %v2119 = vunpack.c.l.b16 %v2087
        %v2120 = vunpack.c.l.b16 %v2088
        %v2121 = vunpack.c.l.b16 %v2089
        %v2122 = vpack.c.b16 %v2115, %v2114
        %v2123 = vpack.c.b16 %v2117, %v2116
        %v2124 = vpack.c.b16 %v2119, %v2118
        %v2125 = vpack.c.b16 %v2121, %v2120
        %2130 = vmatpush.bf16.xpose.msra.mxu0 0
        %2131 = vmatpush.bf16.xpose.msra.mxu0 0
        %2132 = vmatpush.bf16.xpose.msra.mxu0 0
        %2133 = vmatpush.bf16.xpose.msra.mxu0 0
        %2134 = vmatpush.bf16.xpose.msra.mxu0 %v2125
        %2135 = vmatpush.bf16.xpose.msra.mxu0 %v2124
        %2136 = vmatpush.bf16.xpose.msra.mxu0 %v2123
        %2137 = vmatpush.bf16.xpose.msra.mxu0 %v2122
        %2138 = vmatmul.bf16.gmra.mxu0 %v2106
        %v2139 = vpop.f32.mrf.mxu0
        %v2140 = vadd.f32 %v1811, %v2139
        %v2141 = vpop.f32.mrf.mxu0
        %v2142 = vadd.f32 %v1812, %v2141
        %2143 = vmatmul.bf16.gmra.mxu0 %v2107
        %v2144 = vpop.f32.mrf.mxu0
        %v2145 = vadd.f32 %v1813, %v2144
        %v2146 = vpop.f32.mrf.mxu0
        %v2147 = vadd.f32 %v1814, %v2146
        %2148 = vmatmul.bf16.gmra.mxu0 %v2108
        %v2149 = vpop.f32.mrf.mxu0
        %v2150 = vadd.f32 %v1815, %v2149
        %v2151 = vpop.f32.mrf.mxu0
        %v2152 = vadd.f32 %v1816, %v2151
        %2153 = vmatmul.bf16.gmra.mxu0 %v2109
        %v2154 = vpop.f32.mrf.mxu0
        %v2155 = vadd.f32 %v1817, %v2154
        %v2156 = vpop.f32.mrf.mxu0
        %v2157 = vadd.f32 %v1818, %v2156
        %2158 = vdwg.mxu0
        %v2159 = vadd.f32 %v1885, %v1779
        %v2160 = vadd.f32 %v1887, %v1780
        %v2161 = vadd.f32 %v1890, %v1781
        %v2162 = vadd.f32 %v1892, %v1782
        %v2163 = vadd.f32 %v1895, %v1783
        %v2164 = vadd.f32 %v1897, %v1784
        %v2165 = vadd.f32 %v1900, %v1785
        %v2166 = vadd.f32 %v1902, %v1786
        %v2167 = vadd.f32 %v1970, %v1787
        %v2168 = vadd.f32 %v1972, %v1788
        %v2169 = vadd.f32 %v1975, %v1789
        %v2170 = vadd.f32 %v1977, %v1790
        %v2171 = vadd.f32 %v1980, %v1791
        %v2172 = vadd.f32 %v1982, %v1792
        %v2173 = vadd.f32 %v1985, %v1793
        %v2174 = vadd.f32 %v1987, %v1794
        %v2175 = vadd.f32 %v2055, %v1795
        %v2176 = vadd.f32 %v2057, %v1796
        %v2177 = vadd.f32 %v2060, %v1797
        %v2178 = vadd.f32 %v2062, %v1798
        %v2179 = vadd.f32 %v2065, %v1799
        %v2180 = vadd.f32 %v2067, %v1800
        %v2181 = vadd.f32 %v2070, %v1801
        %v2182 = vadd.f32 %v2072, %v1802
        %v2183 = vadd.f32 %v2140, %v1803
        %v2184 = vadd.f32 %v2142, %v1804
        %v2185 = vadd.f32 %v2145, %v1805
        %v2186 = vadd.f32 %v2147, %v1806
        %v2187 = vadd.f32 %v2150, %v1807
        %v2188 = vadd.f32 %v2152, %v1808
        %v2189 = vadd.f32 %v2155, %v1809
        %v2190 = vadd.f32 %v2157, %v1810
        %vm2191 = vcmask 523264
        %v2192 = vsel %vm2191, %v2159, -inf
        %2193 = vmax.xlane.f32.xlu0 %v2192
        %v2194 = vpop.xlane.xlu0 %2193
        %v2195 = vsel %vm2191, %v2160, -inf
        %2196 = vmax.xlane.f32.xlu0 %v2195
        %v2197 = vpop.xlane.xlu0 %2196
        %v2198 = vsel %vm2191, %v2161, -inf
        %2199 = vmax.xlane.f32.xlu0 %v2198
        %v2200 = vpop.xlane.xlu0 %2199
        %v2201 = vsel %vm2191, %v2162, -inf
        %2202 = vmax.xlane.f32.xlu0 %v2201
        %v2203 = vpop.xlane.xlu0 %2202
        %v2204 = vsel %vm2191, %v2163, -inf
        %2205 = vmax.xlane.f32.xlu0 %v2204
        %v2206 = vpop.xlane.xlu0 %2205
        %v2207 = vsel %vm2191, %v2164, -inf
        %2208 = vmax.xlane.f32.xlu0 %v2207
        %v2209 = vpop.xlane.xlu0 %2208
        %v2210 = vsel %vm2191, %v2165, -inf
        %2211 = vmax.xlane.f32.xlu0 %v2210
        %v2212 = vpop.xlane.xlu0 %2211
        %v2213 = vsel %vm2191, %v2166, -inf
        %2214 = vmax.xlane.f32.xlu0 %v2213
        %v2215 = vpop.xlane.xlu0 %2214
        %v2216 = vsel %vm2191, %v2167, -inf
        %2217 = vmax.xlane.f32.xlu0 %v2216
        %v2218 = vpop.xlane.xlu0 %2217
        %v2219 = vsel %vm2191, %v2168, -inf
        %2220 = vmax.xlane.f32.xlu0 %v2219
        %v2221 = vpop.xlane.xlu0 %2220
        %v2222 = vsel %vm2191, %v2169, -inf
        %2223 = vmax.xlane.f32.xlu0 %v2222
        %v2224 = vpop.xlane.xlu0 %2223
        %v2225 = vsel %vm2191, %v2170, -inf
        %2226 = vmax.xlane.f32.xlu0 %v2225
        %v2227 = vpop.xlane.xlu0 %2226
        %v2228 = vsel %vm2191, %v2171, -inf
        %2229 = vmax.xlane.f32.xlu0 %v2228
        %v2230 = vpop.xlane.xlu0 %2229
        %v2231 = vsel %vm2191, %v2172, -inf
        %2232 = vmax.xlane.f32.xlu0 %v2231
        %v2233 = vpop.xlane.xlu0 %2232
        %v2234 = vsel %vm2191, %v2173, -inf
        %2235 = vmax.xlane.f32.xlu0 %v2234
        %v2236 = vpop.xlane.xlu0 %2235
        %v2237 = vsel %vm2191, %v2174, -inf
        %2238 = vmax.xlane.f32.xlu0 %v2237
        %v2239 = vpop.xlane.xlu0 %2238
        %v2240 = vsel %vm2191, %v2175, -inf
        %2241 = vmax.xlane.f32.xlu0 %v2240
        %v2242 = vpop.xlane.xlu0 %2241
        %v2243 = vsel %vm2191, %v2176, -inf
        %2244 = vmax.xlane.f32.xlu0 %v2243
        %v2245 = vpop.xlane.xlu0 %2244
        %v2246 = vsel %vm2191, %v2177, -inf
        %2247 = vmax.xlane.f32.xlu0 %v2246
        %v2248 = vpop.xlane.xlu0 %2247
        %v2249 = vsel %vm2191, %v2178, -inf
        %2250 = vmax.xlane.f32.xlu0 %v2249
        %v2251 = vpop.xlane.xlu0 %2250
        %v2252 = vsel %vm2191, %v2179, -inf
        %2253 = vmax.xlane.f32.xlu0 %v2252
        %v2254 = vpop.xlane.xlu0 %2253
        %v2255 = vsel %vm2191, %v2180, -inf
        %2256 = vmax.xlane.f32.xlu0 %v2255
        %v2257 = vpop.xlane.xlu0 %2256
        %v2258 = vsel %vm2191, %v2181, -inf
        %2259 = vmax.xlane.f32.xlu0 %v2258
        %v2260 = vpop.xlane.xlu0 %2259
        %v2261 = vsel %vm2191, %v2182, -inf
        %2262 = vmax.xlane.f32.xlu0 %v2261
        %v2263 = vpop.xlane.xlu0 %2262
        %v2264 = vsel %vm2191, %v2183, -inf
        %2265 = vmax.xlane.f32.xlu0 %v2264
        %v2266 = vpop.xlane.xlu0 %2265
        %v2267 = vsel %vm2191, %v2184, -inf
        %2268 = vmax.xlane.f32.xlu0 %v2267
        %v2269 = vpop.xlane.xlu0 %2268
        %v2270 = vsel %vm2191, %v2185, -inf
        %2271 = vmax.xlane.f32.xlu0 %v2270
        %v2272 = vpop.xlane.xlu0 %2271
        %v2273 = vsel %vm2191, %v2186, -inf
        %2274 = vmax.xlane.f32.xlu0 %v2273
        %v2275 = vpop.xlane.xlu0 %2274
        %v2276 = vsel %vm2191, %v2187, -inf
        %2277 = vmax.xlane.f32.xlu0 %v2276
        %v2278 = vpop.xlane.xlu0 %2277
        %v2279 = vsel %vm2191, %v2188, -inf
        %2280 = vmax.xlane.f32.xlu0 %v2279
        %v2281 = vpop.xlane.xlu0 %2280
        %v2282 = vsel %vm2191, %v2189, -inf
        %2283 = vmax.xlane.f32.xlu0 %v2282
        %v2284 = vpop.xlane.xlu0 %2283
        %v2285 = vsel %vm2191, %v2190, -inf
        %2286 = vmax.xlane.f32.xlu0 %v2285
        %v2287 = vpop.xlane.xlu0 %2286
        %v2288 = vsub.f32 %v2159, %v2194
        %v2289 = vsub.f32 %v2160, %v2197
        %v2290 = vsub.f32 %v2161, %v2200
        %v2291 = vsub.f32 %v2162, %v2203
        %v2292 = vsub.f32 %v2163, %v2206
        %v2293 = vsub.f32 %v2164, %v2209
        %v2294 = vsub.f32 %v2165, %v2212
        %v2295 = vsub.f32 %v2166, %v2215
        %v2296 = vsub.f32 %v2167, %v2218
        %v2297 = vsub.f32 %v2168, %v2221
        %v2298 = vsub.f32 %v2169, %v2224
        %v2299 = vsub.f32 %v2170, %v2227
        %v2300 = vsub.f32 %v2171, %v2230
        %v2301 = vsub.f32 %v2172, %v2233
        %v2302 = vsub.f32 %v2173, %v2236
        %v2303 = vsub.f32 %v2174, %v2239
        %v2304 = vsub.f32 %v2175, %v2242
        %v2305 = vsub.f32 %v2176, %v2245
        %v2306 = vsub.f32 %v2177, %v2248
        %v2307 = vsub.f32 %v2178, %v2251
        %v2308 = vsub.f32 %v2179, %v2254
        %v2309 = vsub.f32 %v2180, %v2257
        %v2310 = vsub.f32 %v2181, %v2260
        %v2311 = vsub.f32 %v2182, %v2263
        %v2312 = vsub.f32 %v2183, %v2266
        %v2313 = vsub.f32 %v2184, %v2269
        %v2314 = vsub.f32 %v2185, %v2272
        %v2315 = vsub.f32 %v2186, %v2275
        %v2316 = vsub.f32 %v2187, %v2278
        %v2317 = vsub.f32 %v2188, %v2281
        %v2318 = vsub.f32 %v2189, %v2284
        %v2319 = vsub.f32 %v2190, %v2287
        %v2320 = vmul.f32 %v2288, 1.442695
        %v2321 = vpow.pop %v2320
        %v2322 = vmul.f32 %v2289, 1.442695
        %v2323 = vpow.pop %v2322
        %v2324 = vmul.f32 %v2290, 1.442695
        %v2325 = vpow.pop %v2324
        %v2326 = vmul.f32 %v2291, 1.442695
        %v2327 = vpow.pop %v2326
        %v2328 = vmul.f32 %v2292, 1.442695
        %v2329 = vpow.pop %v2328
        %v2330 = vmul.f32 %v2293, 1.442695
        %v2331 = vpow.pop %v2330
        %v2332 = vmul.f32 %v2294, 1.442695
        %v2333 = vpow.pop %v2332
        %v2334 = vmul.f32 %v2295, 1.442695
        %v2335 = vpow.pop %v2334
        %v2336 = vmul.f32 %v2296, 1.442695
        %v2337 = vpow.pop %v2336
        %v2338 = vmul.f32 %v2297, 1.442695
        %v2339 = vpow.pop %v2338
        %v2340 = vmul.f32 %v2298, 1.442695
        %v2341 = vpow.pop %v2340
        %v2342 = vmul.f32 %v2299, 1.442695
        %v2343 = vpow.pop %v2342
        %v2344 = vmul.f32 %v2300, 1.442695
        %v2345 = vpow.pop %v2344
        %v2346 = vmul.f32 %v2301, 1.442695
        %v2347 = vpow.pop %v2346
        %v2348 = vmul.f32 %v2302, 1.442695
        %v2349 = vpow.pop %v2348
        %v2350 = vmul.f32 %v2303, 1.442695
        %v2351 = vpow.pop %v2350
        %v2352 = vmul.f32 %v2304, 1.442695
        %v2353 = vpow.pop %v2352
        %v2354 = vmul.f32 %v2305, 1.442695
        %v2355 = vpow.pop %v2354
        %v2356 = vmul.f32 %v2306, 1.442695
        %v2357 = vpow.pop %v2356
        %v2358 = vmul.f32 %v2307, 1.442695
        %v2359 = vpow.pop %v2358
        %v2360 = vmul.f32 %v2308, 1.442695
        %v2361 = vpow.pop %v2360
        %v2362 = vmul.f32 %v2309, 1.442695
        %v2363 = vpow.pop %v2362
        %v2364 = vmul.f32 %v2310, 1.442695
        %v2365 = vpow.pop %v2364
        %v2366 = vmul.f32 %v2311, 1.442695
        %v2367 = vpow.pop %v2366
        %v2368 = vmul.f32 %v2312, 1.442695
        %v2369 = vpow.pop %v2368
        %v2370 = vmul.f32 %v2313, 1.442695
        %v2371 = vpow.pop %v2370
        %v2372 = vmul.f32 %v2314, 1.442695
        %v2373 = vpow.pop %v2372
        %v2374 = vmul.f32 %v2315, 1.442695
        %v2375 = vpow.pop %v2374
        %v2376 = vmul.f32 %v2316, 1.442695
        %v2377 = vpow.pop %v2376
        %v2378 = vmul.f32 %v2317, 1.442695
        %v2379 = vpow.pop %v2378
        %v2380 = vmul.f32 %v2318, 1.442695
        %v2381 = vpow.pop %v2380
        %v2382 = vmul.f32 %v2319, 1.442695
        %v2383 = vpow.pop %v2382
        %v2384 = vsel %vm2191, %v2321, 0.0
        %2385 = vadd.xlane.f32.xlu0 %v2384
        %v2386 = vpop.xlane.xlu0 %2385
        %v2387 = vsel %vm2191, %v2323, 0.0
        %2388 = vadd.xlane.f32.xlu0 %v2387
        %v2389 = vpop.xlane.xlu0 %2388
        %v2390 = vsel %vm2191, %v2325, 0.0
        %2391 = vadd.xlane.f32.xlu0 %v2390
        %v2392 = vpop.xlane.xlu0 %2391
        %v2393 = vsel %vm2191, %v2327, 0.0
        %2394 = vadd.xlane.f32.xlu0 %v2393
        %v2395 = vpop.xlane.xlu0 %2394
        %v2396 = vsel %vm2191, %v2329, 0.0
        %2397 = vadd.xlane.f32.xlu0 %v2396
        %v2398 = vpop.xlane.xlu0 %2397
        %v2399 = vsel %vm2191, %v2331, 0.0
        %2400 = vadd.xlane.f32.xlu0 %v2399
        %v2401 = vpop.xlane.xlu0 %2400
        %v2402 = vsel %vm2191, %v2333, 0.0
        %2403 = vadd.xlane.f32.xlu0 %v2402
        %v2404 = vpop.xlane.xlu0 %2403
        %v2405 = vsel %vm2191, %v2335, 0.0
        %2406 = vadd.xlane.f32.xlu0 %v2405
        %v2407 = vpop.xlane.xlu0 %2406
        %v2408 = vsel %vm2191, %v2337, 0.0
        %2409 = vadd.xlane.f32.xlu0 %v2408
        %v2410 = vpop.xlane.xlu0 %2409
        %v2411 = vsel %vm2191, %v2339, 0.0
        %2412 = vadd.xlane.f32.xlu0 %v2411
        %v2413 = vpop.xlane.xlu0 %2412
        %v2414 = vsel %vm2191, %v2341, 0.0
        %2415 = vadd.xlane.f32.xlu0 %v2414
        %v2416 = vpop.xlane.xlu0 %2415
        %v2417 = vsel %vm2191, %v2343, 0.0
        %2418 = vadd.xlane.f32.xlu0 %v2417
        %v2419 = vpop.xlane.xlu0 %2418
        %v2420 = vsel %vm2191, %v2345, 0.0
        %2421 = vadd.xlane.f32.xlu0 %v2420
        %v2422 = vpop.xlane.xlu0 %2421
        %v2423 = vsel %vm2191, %v2347, 0.0
        %2424 = vadd.xlane.f32.xlu0 %v2423
        %v2425 = vpop.xlane.xlu0 %2424
        %v2426 = vsel %vm2191, %v2349, 0.0
        %2427 = vadd.xlane.f32.xlu0 %v2426
        %v2428 = vpop.xlane.xlu0 %2427
        %v2429 = vsel %vm2191, %v2351, 0.0
        %2430 = vadd.xlane.f32.xlu0 %v2429
        %v2431 = vpop.xlane.xlu0 %2430
        %v2432 = vsel %vm2191, %v2353, 0.0
        %2433 = vadd.xlane.f32.xlu0 %v2432
        %v2434 = vpop.xlane.xlu0 %2433
        %v2435 = vsel %vm2191, %v2355, 0.0
        %2436 = vadd.xlane.f32.xlu0 %v2435
        %v2437 = vpop.xlane.xlu0 %2436
        %v2438 = vsel %vm2191, %v2357, 0.0
        %2439 = vadd.xlane.f32.xlu0 %v2438
        %v2440 = vpop.xlane.xlu0 %2439
        %v2441 = vsel %vm2191, %v2359, 0.0
        %2442 = vadd.xlane.f32.xlu0 %v2441
        %v2443 = vpop.xlane.xlu0 %2442
        %v2444 = vsel %vm2191, %v2361, 0.0
        %2445 = vadd.xlane.f32.xlu0 %v2444
        %v2446 = vpop.xlane.xlu0 %2445
        %v2447 = vsel %vm2191, %v2363, 0.0
        %2448 = vadd.xlane.f32.xlu0 %v2447
        %v2449 = vpop.xlane.xlu0 %2448
        %v2450 = vsel %vm2191, %v2365, 0.0
        %2451 = vadd.xlane.f32.xlu0 %v2450
        %v2452 = vpop.xlane.xlu0 %2451
        %v2453 = vsel %vm2191, %v2367, 0.0
        %2454 = vadd.xlane.f32.xlu0 %v2453
        %v2455 = vpop.xlane.xlu0 %2454
        %v2456 = vsel %vm2191, %v2369, 0.0
        %2457 = vadd.xlane.f32.xlu0 %v2456
        %v2458 = vpop.xlane.xlu0 %2457
        %v2459 = vsel %vm2191, %v2371, 0.0
        %2460 = vadd.xlane.f32.xlu0 %v2459
        %v2461 = vpop.xlane.xlu0 %2460
        %v2462 = vsel %vm2191, %v2373, 0.0
        %2463 = vadd.xlane.f32.xlu0 %v2462
        %v2464 = vpop.xlane.xlu0 %2463
        %v2465 = vsel %vm2191, %v2375, 0.0
        %2466 = vadd.xlane.f32.xlu0 %v2465
        %v2467 = vpop.xlane.xlu0 %2466
        %v2468 = vsel %vm2191, %v2377, 0.0
        %2469 = vadd.xlane.f32.xlu0 %v2468
        %v2470 = vpop.xlane.xlu0 %2469
        %v2471 = vsel %vm2191, %v2379, 0.0
        %2472 = vadd.xlane.f32.xlu0 %v2471
        %v2473 = vpop.xlane.xlu0 %2472
        %v2474 = vsel %vm2191, %v2381, 0.0
        %2475 = vadd.xlane.f32.xlu0 %v2474
        %v2476 = vpop.xlane.xlu0 %2475
        %v2477 = vsel %vm2191, %v2383, 0.0
        %2478 = vadd.xlane.f32.xlu0 %v2477
        %v2479 = vpop.xlane.xlu0 %2478
        %v2480 = vrcp.pop %v2386
        %v2481 = vrcp.pop %v2389
        %v2482 = vrcp.pop %v2392
        %v2483 = vrcp.pop %v2395
        %v2484 = vrcp.pop %v2398
        %v2485 = vrcp.pop %v2401
        %v2486 = vrcp.pop %v2404
        %v2487 = vrcp.pop %v2407
        %v2488 = vrcp.pop %v2410
        %v2489 = vrcp.pop %v2413
        %v2490 = vrcp.pop %v2416
        %v2491 = vrcp.pop %v2419
        %v2492 = vrcp.pop %v2422
        %v2493 = vrcp.pop %v2425
        %v2494 = vrcp.pop %v2428
        %v2495 = vrcp.pop %v2431
        %v2496 = vrcp.pop %v2434
        %v2497 = vrcp.pop %v2437
        %v2498 = vrcp.pop %v2440
        %v2499 = vrcp.pop %v2443
        %v2500 = vrcp.pop %v2446
        %v2501 = vrcp.pop %v2449
        %v2502 = vrcp.pop %v2452
        %v2503 = vrcp.pop %v2455
        %v2504 = vrcp.pop %v2458
        %v2505 = vrcp.pop %v2461
        %v2506 = vrcp.pop %v2464
        %v2507 = vrcp.pop %v2467
        %v2508 = vrcp.pop %v2470
        %v2509 = vrcp.pop %v2473
        %v2510 = vrcp.pop %v2476
        %v2511 = vrcp.pop %v2479
        %v2512 = vmul.f32 %v2321, %v2480
        %v2513 = vmul.f32 %v2323, %v2481
        %v2514 = vmul.f32 %v2325, %v2482
        %v2515 = vmul.f32 %v2327, %v2483
        %v2516 = vmul.f32 %v2329, %v2484
        %v2517 = vmul.f32 %v2331, %v2485
        %v2518 = vmul.f32 %v2333, %v2486
        %v2519 = vmul.f32 %v2335, %v2487
        %v2520 = vmul.f32 %v2337, %v2488
        %v2521 = vmul.f32 %v2339, %v2489
        %v2522 = vmul.f32 %v2341, %v2490
        %v2523 = vmul.f32 %v2343, %v2491
        %v2524 = vmul.f32 %v2345, %v2492
        %v2525 = vmul.f32 %v2347, %v2493
        %v2526 = vmul.f32 %v2349, %v2494
        %v2527 = vmul.f32 %v2351, %v2495
        %v2528 = vmul.f32 %v2353, %v2496
        %v2529 = vmul.f32 %v2355, %v2497
        %v2530 = vmul.f32 %v2357, %v2498
        %v2531 = vmul.f32 %v2359, %v2499
        %v2532 = vmul.f32 %v2361, %v2500
        %v2533 = vmul.f32 %v2363, %v2501
        %v2534 = vmul.f32 %v2365, %v2502
        %v2535 = vmul.f32 %v2367, %v2503
        %v2536 = vmul.f32 %v2369, %v2504
        %v2537 = vmul.f32 %v2371, %v2505
        %v2538 = vmul.f32 %v2373, %v2506
        %v2539 = vmul.f32 %v2375, %v2507
        %v2540 = vmul.f32 %v2377, %v2508
        %v2541 = vmul.f32 %v2379, %v2509
        %v2542 = vmul.f32 %v2381, %v2510
        %v2543 = vmul.f32 %v2383, %v2511
        %v2544 = vpack.c.bf16 %v2512, %v2512
        %v2545 = vpack.c.bf16 %v2513, %v2513
        %v2546 = vpack.c.bf16 %v2514, %v2514
        %v2547 = vpack.c.bf16 %v2515, %v2515
        %v2548 = vpack.c.bf16 %v2516, %v2516
        %v2549 = vpack.c.bf16 %v2517, %v2517
        %v2550 = vpack.c.bf16 %v2518, %v2518
        %v2551 = vpack.c.bf16 %v2519, %v2519
        %v2552 = vpack.c.bf16 %v2520, %v2520
        %v2553 = vpack.c.bf16 %v2521, %v2521
        %v2554 = vpack.c.bf16 %v2522, %v2522
        %v2555 = vpack.c.bf16 %v2523, %v2523
        %v2556 = vpack.c.bf16 %v2524, %v2524
        %v2557 = vpack.c.bf16 %v2525, %v2525
        %v2558 = vpack.c.bf16 %v2526, %v2526
        %v2559 = vpack.c.bf16 %v2527, %v2527
        %v2560 = vpack.c.bf16 %v2528, %v2528
        %v2561 = vpack.c.bf16 %v2529, %v2529
        %v2562 = vpack.c.bf16 %v2530, %v2530
        %v2563 = vpack.c.bf16 %v2531, %v2531
        %v2564 = vpack.c.bf16 %v2532, %v2532
        %v2565 = vpack.c.bf16 %v2533, %v2533
        %v2566 = vpack.c.bf16 %v2534, %v2534
        %v2567 = vpack.c.bf16 %v2535, %v2535
        %v2568 = vpack.c.bf16 %v2536, %v2536
        %v2569 = vpack.c.bf16 %v2537, %v2537
        %v2570 = vpack.c.bf16 %v2538, %v2538
        %v2571 = vpack.c.bf16 %v2539, %v2539
        %v2572 = vpack.c.bf16 %v2540, %v2540
        %v2573 = vpack.c.bf16 %v2541, %v2541
        %v2574 = vpack.c.bf16 %v2542, %v2542
        %v2575 = vpack.c.bf16 %v2543, %v2543
        %v2584 = vunpack.c.l.b16 %v2544
        %v2585 = vunpack.c.l.b16 %v2545
        %v2586 = vunpack.c.l.b16 %v2546
        %v2587 = vunpack.c.l.b16 %v2547
        %v2588 = vunpack.c.l.b16 %v2548
        %v2589 = vunpack.c.l.b16 %v2549
        %v2590 = vunpack.c.l.b16 %v2550
        %v2591 = vunpack.c.l.b16 %v2551
        %v2592 = vpack.c.b16 %v2585, %v2584
        %v2593 = vpack.c.b16 %v2587, %v2586
        %v2594 = vpack.c.b16 %v2589, %v2588
        %v2595 = vpack.c.b16 %v2591, %v2590
        %v2604 = vunpack.c.l.b16 %v1622
        %v2605 = vunpack.c.l.b16 %v1627
        %v2606 = vunpack.c.l.b16 %v1632
        %v2607 = vunpack.c.l.b16 %v1637
        %v2608 = vunpack.c.l.b16 %v1642
        %v2609 = vunpack.c.l.b16 %v1647
        %v2610 = vunpack.c.l.b16 %v1652
        %v2611 = vunpack.c.l.b16 %v1657
        %v2612 = vpack.c.b16 %v2605, %v2604
        %v2613 = vpack.c.b16 %v2607, %v2606
        %v2614 = vpack.c.b16 %v2609, %v2608
        %v2615 = vpack.c.b16 %v2611, %v2610
        %v2621 = vsel %vm2191, %v2592, 0
        %v2624 = vsel %vm2191, %v2593, 0
        %v2627 = vsel %vm2191, %v2594, 0
        %v2630 = vsel %vm2191, %v2595, 0
        %2632 = vmatpush.bf16.msra.mxu0 0
        %2633 = vmatpush.bf16.msra.mxu0 0
        %2634 = vmatpush.bf16.msra.mxu0 0
        %2635 = vmatpush.bf16.msra.mxu0 0
        %2636 = vmatpush.bf16.msra.mxu0 %v2615
        %2637 = vmatpush.bf16.msra.mxu0 %v2614
        %2638 = vmatpush.bf16.msra.mxu0 %v2613
        %2639 = vmatpush.bf16.msra.mxu0 %v2612
        %2640 = vmatmul.bf16.gmra.mxu0 %v2621
        %v2641 = vpop.f32.mrf.mxu0
        %v2642 = vadd.f32 0.0, %v2641
        %v2643 = vpop.f32.mrf.mxu0
        %v2644 = vadd.f32 0.0, %v2643
        %2645 = vmatmul.bf16.gmra.mxu0 %v2624
        %v2646 = vpop.f32.mrf.mxu0
        %v2647 = vadd.f32 0.0, %v2646
        %v2648 = vpop.f32.mrf.mxu0
        %v2649 = vadd.f32 0.0, %v2648
        %2650 = vmatmul.bf16.gmra.mxu0 %v2627
        %v2651 = vpop.f32.mrf.mxu0
        %v2652 = vadd.f32 0.0, %v2651
        %v2653 = vpop.f32.mrf.mxu0
        %v2654 = vadd.f32 0.0, %v2653
        %2655 = vmatmul.bf16.gmra.mxu0 %v2630
        %v2656 = vpop.f32.mrf.mxu0
        %v2657 = vadd.f32 0.0, %v2656
        %v2658 = vpop.f32.mrf.mxu0
        %v2659 = vadd.f32 0.0, %v2658
        %2660 = vdwg.mxu0
        %v2669 = vunpack.c.l.b16 %v2552
        %v2670 = vunpack.c.l.b16 %v2553
        %v2671 = vunpack.c.l.b16 %v2554
        %v2672 = vunpack.c.l.b16 %v2555
        %v2673 = vunpack.c.l.b16 %v2556
        %v2674 = vunpack.c.l.b16 %v2557
        %v2675 = vunpack.c.l.b16 %v2558
        %v2676 = vunpack.c.l.b16 %v2559
        %v2677 = vpack.c.b16 %v2670, %v2669
        %v2678 = vpack.c.b16 %v2672, %v2671
        %v2679 = vpack.c.b16 %v2674, %v2673
        %v2680 = vpack.c.b16 %v2676, %v2675
        %v2689 = vunpack.c.l.b16 %v1662
        %v2690 = vunpack.c.l.b16 %v1667
        %v2691 = vunpack.c.l.b16 %v1672
        %v2692 = vunpack.c.l.b16 %v1677
        %v2693 = vunpack.c.l.b16 %v1682
        %v2694 = vunpack.c.l.b16 %v1687
        %v2695 = vunpack.c.l.b16 %v1692
        %v2696 = vunpack.c.l.b16 %v1697
        %v2697 = vpack.c.b16 %v2690, %v2689
        %v2698 = vpack.c.b16 %v2692, %v2691
        %v2699 = vpack.c.b16 %v2694, %v2693
        %v2700 = vpack.c.b16 %v2696, %v2695
        %v2706 = vsel %vm2191, %v2677, 0
        %v2709 = vsel %vm2191, %v2678, 0
        %v2712 = vsel %vm2191, %v2679, 0
        %v2715 = vsel %vm2191, %v2680, 0
        %2717 = vmatpush.bf16.msra.mxu0 0
        %2718 = vmatpush.bf16.msra.mxu0 0
        %2719 = vmatpush.bf16.msra.mxu0 0
        %2720 = vmatpush.bf16.msra.mxu0 0
        %2721 = vmatpush.bf16.msra.mxu0 %v2700
        %2722 = vmatpush.bf16.msra.mxu0 %v2699
        %2723 = vmatpush.bf16.msra.mxu0 %v2698
        %2724 = vmatpush.bf16.msra.mxu0 %v2697
        %2725 = vmatmul.bf16.gmra.mxu0 %v2706
        %v2726 = vpop.f32.mrf.mxu0
        %v2727 = vadd.f32 0.0, %v2726
        %v2728 = vpop.f32.mrf.mxu0
        %v2729 = vadd.f32 0.0, %v2728
        %2730 = vmatmul.bf16.gmra.mxu0 %v2709
        %v2731 = vpop.f32.mrf.mxu0
        %v2732 = vadd.f32 0.0, %v2731
        %v2733 = vpop.f32.mrf.mxu0
        %v2734 = vadd.f32 0.0, %v2733
        %2735 = vmatmul.bf16.gmra.mxu0 %v2712
        %v2736 = vpop.f32.mrf.mxu0
        %v2737 = vadd.f32 0.0, %v2736
        %v2738 = vpop.f32.mrf.mxu0
        %v2739 = vadd.f32 0.0, %v2738
        %2740 = vmatmul.bf16.gmra.mxu0 %v2715
        %v2741 = vpop.f32.mrf.mxu0
        %v2742 = vadd.f32 0.0, %v2741
        %v2743 = vpop.f32.mrf.mxu0
        %v2744 = vadd.f32 0.0, %v2743
        %2745 = vdwg.mxu0
        %v2754 = vunpack.c.l.b16 %v2560
        %v2755 = vunpack.c.l.b16 %v2561
        %v2756 = vunpack.c.l.b16 %v2562
        %v2757 = vunpack.c.l.b16 %v2563
        %v2758 = vunpack.c.l.b16 %v2564
        %v2759 = vunpack.c.l.b16 %v2565
        %v2760 = vunpack.c.l.b16 %v2566
        %v2761 = vunpack.c.l.b16 %v2567
        %v2762 = vpack.c.b16 %v2755, %v2754
        %v2763 = vpack.c.b16 %v2757, %v2756
        %v2764 = vpack.c.b16 %v2759, %v2758
        %v2765 = vpack.c.b16 %v2761, %v2760
        %v2774 = vunpack.c.l.b16 %v1702
        %v2775 = vunpack.c.l.b16 %v1707
        %v2776 = vunpack.c.l.b16 %v1712
        %v2777 = vunpack.c.l.b16 %v1717
        %v2778 = vunpack.c.l.b16 %v1722
        %v2779 = vunpack.c.l.b16 %v1727
        %v2780 = vunpack.c.l.b16 %v1732
        %v2781 = vunpack.c.l.b16 %v1737
        %v2782 = vpack.c.b16 %v2775, %v2774
        %v2783 = vpack.c.b16 %v2777, %v2776
        %v2784 = vpack.c.b16 %v2779, %v2778
        %v2785 = vpack.c.b16 %v2781, %v2780
        %v2791 = vsel %vm2191, %v2762, 0
        %v2794 = vsel %vm2191, %v2763, 0
        %v2797 = vsel %vm2191, %v2764, 0
        %v2800 = vsel %vm2191, %v2765, 0
        %2802 = vmatpush.bf16.msra.mxu0 0
        %2803 = vmatpush.bf16.msra.mxu0 0
        %2804 = vmatpush.bf16.msra.mxu0 0
        %2805 = vmatpush.bf16.msra.mxu0 0
        %2806 = vmatpush.bf16.msra.mxu0 %v2785
        %2807 = vmatpush.bf16.msra.mxu0 %v2784
        %2808 = vmatpush.bf16.msra.mxu0 %v2783
        %2809 = vmatpush.bf16.msra.mxu0 %v2782
        %2810 = vmatmul.bf16.gmra.mxu0 %v2791
        %v2811 = vpop.f32.mrf.mxu0
        %v2812 = vadd.f32 0.0, %v2811
        %v2813 = vpop.f32.mrf.mxu0
        %v2814 = vadd.f32 0.0, %v2813
        %2815 = vmatmul.bf16.gmra.mxu0 %v2794
        %v2816 = vpop.f32.mrf.mxu0
        %v2817 = vadd.f32 0.0, %v2816
        %v2818 = vpop.f32.mrf.mxu0
        %v2819 = vadd.f32 0.0, %v2818
        %2820 = vmatmul.bf16.gmra.mxu0 %v2797
        %v2821 = vpop.f32.mrf.mxu0
        %v2822 = vadd.f32 0.0, %v2821
        %v2823 = vpop.f32.mrf.mxu0
        %v2824 = vadd.f32 0.0, %v2823
        %2825 = vmatmul.bf16.gmra.mxu0 %v2800
        %v2826 = vpop.f32.mrf.mxu0
        %v2827 = vadd.f32 0.0, %v2826
        %v2828 = vpop.f32.mrf.mxu0
        %v2829 = vadd.f32 0.0, %v2828
        %2830 = vdwg.mxu0
        %v2839 = vunpack.c.l.b16 %v2568
        %v2840 = vunpack.c.l.b16 %v2569
        %v2841 = vunpack.c.l.b16 %v2570
        %v2842 = vunpack.c.l.b16 %v2571
        %v2843 = vunpack.c.l.b16 %v2572
        %v2844 = vunpack.c.l.b16 %v2573
        %v2845 = vunpack.c.l.b16 %v2574
        %v2846 = vunpack.c.l.b16 %v2575
        %v2847 = vpack.c.b16 %v2840, %v2839
        %v2848 = vpack.c.b16 %v2842, %v2841
        %v2849 = vpack.c.b16 %v2844, %v2843
        %v2850 = vpack.c.b16 %v2846, %v2845
        %v2859 = vunpack.c.l.b16 %v1742
        %v2860 = vunpack.c.l.b16 %v1747
        %v2861 = vunpack.c.l.b16 %v1752
        %v2862 = vunpack.c.l.b16 %v1757
        %v2863 = vunpack.c.l.b16 %v1762
        %v2864 = vunpack.c.l.b16 %v1767
        %v2865 = vunpack.c.l.b16 %v1772
        %v2866 = vunpack.c.l.b16 %v1777
        %v2867 = vpack.c.b16 %v2860, %v2859
        %v2868 = vpack.c.b16 %v2862, %v2861
        %v2869 = vpack.c.b16 %v2864, %v2863
        %v2870 = vpack.c.b16 %v2866, %v2865
        %v2876 = vsel %vm2191, %v2847, 0
        %v2879 = vsel %vm2191, %v2848, 0
        %v2882 = vsel %vm2191, %v2849, 0
        %v2885 = vsel %vm2191, %v2850, 0
        %2887 = vmatpush.bf16.msra.mxu0 0
        %2888 = vmatpush.bf16.msra.mxu0 0
        %2889 = vmatpush.bf16.msra.mxu0 0
        %2890 = vmatpush.bf16.msra.mxu0 0
        %2891 = vmatpush.bf16.msra.mxu0 %v2870
        %2892 = vmatpush.bf16.msra.mxu0 %v2869
        %2893 = vmatpush.bf16.msra.mxu0 %v2868
        %2894 = vmatpush.bf16.msra.mxu0 %v2867
        %2895 = vmatmul.bf16.gmra.mxu0 %v2876
        %v2896 = vpop.f32.mrf.mxu0
        %v2897 = vadd.f32 0.0, %v2896
        %v2898 = vpop.f32.mrf.mxu0
        %v2899 = vadd.f32 0.0, %v2898
        %2900 = vmatmul.bf16.gmra.mxu0 %v2879
        %v2901 = vpop.f32.mrf.mxu0
        %v2902 = vadd.f32 0.0, %v2901
        %v2903 = vpop.f32.mrf.mxu0
        %v2904 = vadd.f32 0.0, %v2903
        %2905 = vmatmul.bf16.gmra.mxu0 %v2882
        %v2906 = vpop.f32.mrf.mxu0
        %v2907 = vadd.f32 0.0, %v2906
        %v2908 = vpop.f32.mrf.mxu0
        %v2909 = vadd.f32 0.0, %v2908
        %2910 = vmatmul.bf16.gmra.mxu0 %v2885
        %v2911 = vpop.f32.mrf.mxu0
        %v2912 = vadd.f32 0.0, %v2911
        %v2913 = vpop.f32.mrf.mxu0
        %v2914 = vadd.f32 0.0, %v2913
        %2915 = vdwg.mxu0
        %v2916 = vpack.c.bf16 %v2642, %v2642
        %v2917 = vpack.c.bf16 %v2644, %v2644
        %v2918 = vpack.c.bf16 %v2647, %v2647
        %v2919 = vpack.c.bf16 %v2649, %v2649
        %v2920 = vpack.c.bf16 %v2652, %v2652
        %v2921 = vpack.c.bf16 %v2654, %v2654
        %v2922 = vpack.c.bf16 %v2657, %v2657
        %v2923 = vpack.c.bf16 %v2659, %v2659
        %v2924 = vpack.c.bf16 %v2727, %v2727
        %v2925 = vpack.c.bf16 %v2729, %v2729
        %v2926 = vpack.c.bf16 %v2732, %v2732
        %v2927 = vpack.c.bf16 %v2734, %v2734
        %v2928 = vpack.c.bf16 %v2737, %v2737
        %v2929 = vpack.c.bf16 %v2739, %v2739
        %v2930 = vpack.c.bf16 %v2742, %v2742
        %v2931 = vpack.c.bf16 %v2744, %v2744
        %v2932 = vpack.c.bf16 %v2812, %v2812
        %v2933 = vpack.c.bf16 %v2814, %v2814
        %v2934 = vpack.c.bf16 %v2817, %v2817
        %v2935 = vpack.c.bf16 %v2819, %v2819
        %v2936 = vpack.c.bf16 %v2822, %v2822
        %v2937 = vpack.c.bf16 %v2824, %v2824
        %v2938 = vpack.c.bf16 %v2827, %v2827
        %v2939 = vpack.c.bf16 %v2829, %v2829
        %v2940 = vpack.c.bf16 %v2897, %v2897
        %v2941 = vpack.c.bf16 %v2899, %v2899
        %v2942 = vpack.c.bf16 %v2902, %v2902
        %v2943 = vpack.c.bf16 %v2904, %v2904
        %v2944 = vpack.c.bf16 %v2907, %v2907
        %v2945 = vpack.c.bf16 %v2909, %v2909
        %v2946 = vpack.c.bf16 %v2912, %v2912
        %v2947 = vpack.c.bf16 %v2914, %v2914
        %v2948 = vld [vmem:[%s4] sm:$0xf]
        %v2949 = vld [vmem:[%s4 + $0x4] sm:$0xf]
        %v2950 = vld [vmem:[%s4 + $0x8] sm:$0xf]
        %v2951 = vld [vmem:[%s4 + $0xc] sm:$0xf]
        %v2952 = vld [vmem:[%s4 + $0x10] sm:$0xf]
        %v2953 = vld [vmem:[%s4 + $0x14] sm:$0xf]
        %v2954 = vld [vmem:[%s4 + $0x18] sm:$0xf]
        %v2955 = vld [vmem:[%s4 + $0x1c] sm:$0xf]
        %v2956 = vld [vmem:[%s4 + $0x20] sm:$0xf]
        %v2957 = vld [vmem:[%s4 + $0x24] sm:$0xf]
        %v2958 = vld [vmem:[%s4 + $0x28] sm:$0xf]
        %v2959 = vld [vmem:[%s4 + $0x2c] sm:$0xf]
        %v2960 = vld [vmem:[%s4 + $0x30] sm:$0xf]
        %v2961 = vld [vmem:[%s4 + $0x34] sm:$0xf]
        %v2962 = vld [vmem:[%s4 + $0x38] sm:$0xf]
        %v2963 = vld [vmem:[%s4 + $0x3c] sm:$0xf]
        %s2964 = scalar_lea.vmem %s1, 64
        %v2965 = vld [vmem:[%s2964] sm:$0xff]
        %v2966 = vld [vmem:[%s2964 + $0x8] sm:$0xff]
        %v2967 = vld [vmem:[%s2964 + $0x10] sm:$0xff]
        %v2968 = vld [vmem:[%s2964 + $0x18] sm:$0xff]
        %v2969 = vld [vmem:[%s2964 + $0x20] sm:$0xff]
        %v2970 = vld [vmem:[%s2964 + $0x28] sm:$0xff]
        %v2971 = vld [vmem:[%s2964 + $0x30] sm:$0xff]
        %v2972 = vld [vmem:[%s2964 + $0x38] sm:$0xff]
        %v2973 = vrot.slane %v1619, 4
        %v2974 = vrot.slane %v1624, 4
        %v2975 = vrot.slane %v1629, 4
        %v2976 = vrot.slane %v1634, 4
        %v2977 = vrot.slane %v1639, 4
        %v2978 = vrot.slane %v1644, 4
        %v2979 = vrot.slane %v1649, 4
        %v2980 = vrot.slane %v1654, 4
        %v2981 = vunpack.c.l.b16 %v2973
        %v2982 = vunpack.c.l.b16 %v2974
        %v2983 = vunpack.c.l.b16 %v2975
        %v2984 = vunpack.c.l.b16 %v2976
        %v2985 = vunpack.c.l.b16 %v2977
        %v2986 = vunpack.c.l.b16 %v2978
        %v2987 = vunpack.c.l.b16 %v2979
        %v2988 = vunpack.c.l.b16 %v2980
        %v2989 = vpack.c.b16 %v2982, %v2981
        %v2990 = vpack.c.b16 %v2984, %v2983
        %v2991 = vpack.c.b16 %v2986, %v2985
        %v2992 = vpack.c.b16 %v2988, %v2987
        %v3005 = vunpack.c.l.b16 %v1621
        %v3006 = vunpack.c.l.b16 %v1626
        %v3007 = vunpack.c.l.b16 %v1631
        %v3008 = vunpack.c.l.b16 %v1636
        %v3009 = vunpack.c.l.b16 %v1641
        %v3010 = vunpack.c.l.b16 %v1646
        %v3011 = vunpack.c.l.b16 %v1651
        %v3012 = vunpack.c.l.b16 %v1656
        %v3013 = vpack.c.b16 %v3006, %v3005
        %v3014 = vpack.c.b16 %v3008, %v3007
        %v3015 = vpack.c.b16 %v3010, %v3009
        %v3016 = vpack.c.b16 %v3012, %v3011
        %3021 = vmatpush.bf16.xpose.msra.mxu0 0
        %3022 = vmatpush.bf16.xpose.msra.mxu0 0
        %3023 = vmatpush.bf16.xpose.msra.mxu0 0
        %3024 = vmatpush.bf16.xpose.msra.mxu0 0
        %3025 = vmatpush.bf16.xpose.msra.mxu0 %v3016
        %3026 = vmatpush.bf16.xpose.msra.mxu0 %v3015
        %3027 = vmatpush.bf16.xpose.msra.mxu0 %v3014
        %3028 = vmatpush.bf16.xpose.msra.mxu0 %v3013
        %3029 = vmatmul.bf16.gmra.mxu0 %v2989
        %v3030 = vpop.f32.mrf.mxu0
        %v3031 = vadd.f32 %v2965, %v3030
        %v3032 = vpop.f32.mrf.mxu0
        %v3033 = vadd.f32 %v2966, %v3032
        %3034 = vmatmul.bf16.gmra.mxu0 %v2990
        %v3035 = vpop.f32.mrf.mxu0
        %v3036 = vadd.f32 %v2967, %v3035
        %v3037 = vpop.f32.mrf.mxu0
        %v3038 = vadd.f32 %v2968, %v3037
        %3039 = vmatmul.bf16.gmra.mxu0 %v2991
        %v3040 = vpop.f32.mrf.mxu0
        %v3041 = vadd.f32 %v2969, %v3040
        %v3042 = vpop.f32.mrf.mxu0
        %v3043 = vadd.f32 %v2970, %v3042
        %3044 = vmatmul.bf16.gmra.mxu0 %v2992
        %v3045 = vpop.f32.mrf.mxu0
        %v3046 = vadd.f32 %v2971, %v3045
        %v3047 = vpop.f32.mrf.mxu0
        %v3048 = vadd.f32 %v2972, %v3047
        %3049 = vdwg.mxu0
        %v3050 = vrot.slane %v1659, 4
        %v3051 = vrot.slane %v1664, 4
        %v3052 = vrot.slane %v1669, 4
        %v3053 = vrot.slane %v1674, 4
        %v3054 = vrot.slane %v1679, 4
        %v3055 = vrot.slane %v1684, 4
        %v3056 = vrot.slane %v1689, 4
        %v3057 = vrot.slane %v1694, 4
        %v3058 = vunpack.c.l.b16 %v3050
        %v3059 = vunpack.c.l.b16 %v3051
        %v3060 = vunpack.c.l.b16 %v3052
        %v3061 = vunpack.c.l.b16 %v3053
        %v3062 = vunpack.c.l.b16 %v3054
        %v3063 = vunpack.c.l.b16 %v3055
        %v3064 = vunpack.c.l.b16 %v3056
        %v3065 = vunpack.c.l.b16 %v3057
        %v3066 = vpack.c.b16 %v3059, %v3058
        %v3067 = vpack.c.b16 %v3061, %v3060
        %v3068 = vpack.c.b16 %v3063, %v3062
        %v3069 = vpack.c.b16 %v3065, %v3064
        %v3082 = vunpack.c.l.b16 %v1661
        %v3083 = vunpack.c.l.b16 %v1666
        %v3084 = vunpack.c.l.b16 %v1671
        %v3085 = vunpack.c.l.b16 %v1676
        %v3086 = vunpack.c.l.b16 %v1681
        %v3087 = vunpack.c.l.b16 %v1686
        %v3088 = vunpack.c.l.b16 %v1691
        %v3089 = vunpack.c.l.b16 %v1696
        %v3090 = vpack.c.b16 %v3083, %v3082
        %v3091 = vpack.c.b16 %v3085, %v3084
        %v3092 = vpack.c.b16 %v3087, %v3086
        %v3093 = vpack.c.b16 %v3089, %v3088
        %3098 = vmatpush.bf16.xpose.msra.mxu0 0
        %3099 = vmatpush.bf16.xpose.msra.mxu0 0
        %3100 = vmatpush.bf16.xpose.msra.mxu0 0
        %3101 = vmatpush.bf16.xpose.msra.mxu0 0
        %3102 = vmatpush.bf16.xpose.msra.mxu0 %v3093
        %3103 = vmatpush.bf16.xpose.msra.mxu0 %v3092
        %3104 = vmatpush.bf16.xpose.msra.mxu0 %v3091
        %3105 = vmatpush.bf16.xpose.msra.mxu0 %v3090
        %3106 = vmatmul.bf16.gmra.mxu0 %v3066
        %v3107 = vpop.f32.mrf.mxu0
        %v3108 = vadd.f32 %v2965, %v3107
        %v3109 = vpop.f32.mrf.mxu0
        %v3110 = vadd.f32 %v2966, %v3109
        %3111 = vmatmul.bf16.gmra.mxu0 %v3067
        %v3112 = vpop.f32.mrf.mxu0
        %v3113 = vadd.f32 %v2967, %v3112
        %v3114 = vpop.f32.mrf.mxu0
        %v3115 = vadd.f32 %v2968, %v3114
        %3116 = vmatmul.bf16.gmra.mxu0 %v3068
        %v3117 = vpop.f32.mrf.mxu0
        %v3118 = vadd.f32 %v2969, %v3117
        %v3119 = vpop.f32.mrf.mxu0
        %v3120 = vadd.f32 %v2970, %v3119
        %3121 = vmatmul.bf16.gmra.mxu0 %v3069
        %v3122 = vpop.f32.mrf.mxu0
        %v3123 = vadd.f32 %v2971, %v3122
        %v3124 = vpop.f32.mrf.mxu0
        %v3125 = vadd.f32 %v2972, %v3124
        %3126 = vdwg.mxu0
        %v3127 = vrot.slane %v1699, 4
        %v3128 = vrot.slane %v1704, 4
        %v3129 = vrot.slane %v1709, 4
        %v3130 = vrot.slane %v1714, 4
        %v3131 = vrot.slane %v1719, 4
        %v3132 = vrot.slane %v1724, 4
        %v3133 = vrot.slane %v1729, 4
        %v3134 = vrot.slane %v1734, 4
        %v3135 = vunpack.c.l.b16 %v3127
        %v3136 = vunpack.c.l.b16 %v3128
        %v3137 = vunpack.c.l.b16 %v3129
        %v3138 = vunpack.c.l.b16 %v3130
        %v3139 = vunpack.c.l.b16 %v3131
        %v3140 = vunpack.c.l.b16 %v3132
        %v3141 = vunpack.c.l.b16 %v3133
        %v3142 = vunpack.c.l.b16 %v3134
        %v3143 = vpack.c.b16 %v3136, %v3135
        %v3144 = vpack.c.b16 %v3138, %v3137
        %v3145 = vpack.c.b16 %v3140, %v3139
        %v3146 = vpack.c.b16 %v3142, %v3141
        %v3159 = vunpack.c.l.b16 %v1701
        %v3160 = vunpack.c.l.b16 %v1706
        %v3161 = vunpack.c.l.b16 %v1711
        %v3162 = vunpack.c.l.b16 %v1716
        %v3163 = vunpack.c.l.b16 %v1721
        %v3164 = vunpack.c.l.b16 %v1726
        %v3165 = vunpack.c.l.b16 %v1731
        %v3166 = vunpack.c.l.b16 %v1736
        %v3167 = vpack.c.b16 %v3160, %v3159
        %v3168 = vpack.c.b16 %v3162, %v3161
        %v3169 = vpack.c.b16 %v3164, %v3163
        %v3170 = vpack.c.b16 %v3166, %v3165
        %3175 = vmatpush.bf16.xpose.msra.mxu0 0
        %3176 = vmatpush.bf16.xpose.msra.mxu0 0
        %3177 = vmatpush.bf16.xpose.msra.mxu0 0
        %3178 = vmatpush.bf16.xpose.msra.mxu0 0
        %3179 = vmatpush.bf16.xpose.msra.mxu0 %v3170
        %3180 = vmatpush.bf16.xpose.msra.mxu0 %v3169
        %3181 = vmatpush.bf16.xpose.msra.mxu0 %v3168
        %3182 = vmatpush.bf16.xpose.msra.mxu0 %v3167
        %3183 = vmatmul.bf16.gmra.mxu0 %v3143
        %v3184 = vpop.f32.mrf.mxu0
        %v3185 = vadd.f32 %v2965, %v3184
        %v3186 = vpop.f32.mrf.mxu0
        %v3187 = vadd.f32 %v2966, %v3186
        %3188 = vmatmul.bf16.gmra.mxu0 %v3144
        %v3189 = vpop.f32.mrf.mxu0
        %v3190 = vadd.f32 %v2967, %v3189
        %v3191 = vpop.f32.mrf.mxu0
        %v3192 = vadd.f32 %v2968, %v3191
        %3193 = vmatmul.bf16.gmra.mxu0 %v3145
        %v3194 = vpop.f32.mrf.mxu0
        %v3195 = vadd.f32 %v2969, %v3194
        %v3196 = vpop.f32.mrf.mxu0
        %v3197 = vadd.f32 %v2970, %v3196
        %3198 = vmatmul.bf16.gmra.mxu0 %v3146
        %v3199 = vpop.f32.mrf.mxu0
        %v3200 = vadd.f32 %v2971, %v3199
        %v3201 = vpop.f32.mrf.mxu0
        %v3202 = vadd.f32 %v2972, %v3201
        %3203 = vdwg.mxu0
        %v3204 = vrot.slane %v1739, 4
        %v3205 = vrot.slane %v1744, 4
        %v3206 = vrot.slane %v1749, 4
        %v3207 = vrot.slane %v1754, 4
        %v3208 = vrot.slane %v1759, 4
        %v3209 = vrot.slane %v1764, 4
        %v3210 = vrot.slane %v1769, 4
        %v3211 = vrot.slane %v1774, 4
        %v3212 = vunpack.c.l.b16 %v3204
        %v3213 = vunpack.c.l.b16 %v3205
        %v3214 = vunpack.c.l.b16 %v3206
        %v3215 = vunpack.c.l.b16 %v3207
        %v3216 = vunpack.c.l.b16 %v3208
        %v3217 = vunpack.c.l.b16 %v3209
        %v3218 = vunpack.c.l.b16 %v3210
        %v3219 = vunpack.c.l.b16 %v3211
        %v3220 = vpack.c.b16 %v3213, %v3212
        %v3221 = vpack.c.b16 %v3215, %v3214
        %v3222 = vpack.c.b16 %v3217, %v3216
        %v3223 = vpack.c.b16 %v3219, %v3218
        %v3236 = vunpack.c.l.b16 %v1741
        %v3237 = vunpack.c.l.b16 %v1746
        %v3238 = vunpack.c.l.b16 %v1751
        %v3239 = vunpack.c.l.b16 %v1756
        %v3240 = vunpack.c.l.b16 %v1761
        %v3241 = vunpack.c.l.b16 %v1766
        %v3242 = vunpack.c.l.b16 %v1771
        %v3243 = vunpack.c.l.b16 %v1776
        %v3244 = vpack.c.b16 %v3237, %v3236
        %v3245 = vpack.c.b16 %v3239, %v3238
        %v3246 = vpack.c.b16 %v3241, %v3240
        %v3247 = vpack.c.b16 %v3243, %v3242
        %3252 = vmatpush.bf16.xpose.msra.mxu0 0
        %3253 = vmatpush.bf16.xpose.msra.mxu0 0
        %3254 = vmatpush.bf16.xpose.msra.mxu0 0
        %3255 = vmatpush.bf16.xpose.msra.mxu0 0
        %3256 = vmatpush.bf16.xpose.msra.mxu0 %v3247
        %3257 = vmatpush.bf16.xpose.msra.mxu0 %v3246
        %3258 = vmatpush.bf16.xpose.msra.mxu0 %v3245
        %3259 = vmatpush.bf16.xpose.msra.mxu0 %v3244
        %3260 = vmatmul.bf16.gmra.mxu0 %v3220
        %v3261 = vpop.f32.mrf.mxu0
        %v3262 = vadd.f32 %v2965, %v3261
        %v3263 = vpop.f32.mrf.mxu0
        %v3264 = vadd.f32 %v2966, %v3263
        %3265 = vmatmul.bf16.gmra.mxu0 %v3221
        %v3266 = vpop.f32.mrf.mxu0
        %v3267 = vadd.f32 %v2967, %v3266
        %v3268 = vpop.f32.mrf.mxu0
        %v3269 = vadd.f32 %v2968, %v3268
        %3270 = vmatmul.bf16.gmra.mxu0 %v3222
        %v3271 = vpop.f32.mrf.mxu0
        %v3272 = vadd.f32 %v2969, %v3271
        %v3273 = vpop.f32.mrf.mxu0
        %v3274 = vadd.f32 %v2970, %v3273
        %3275 = vmatmul.bf16.gmra.mxu0 %v3223
        %v3276 = vpop.f32.mrf.mxu0
        %v3277 = vadd.f32 %v2971, %v3276
        %v3278 = vpop.f32.mrf.mxu0
        %v3279 = vadd.f32 %v2972, %v3278
        %3280 = vdwg.mxu0
        %v3281 = vadd.f32 %v3031, %v1779
        %v3282 = vadd.f32 %v3033, %v1780
        %v3283 = vadd.f32 %v3036, %v1781
        %v3284 = vadd.f32 %v3038, %v1782
        %v3285 = vadd.f32 %v3041, %v1783
        %v3286 = vadd.f32 %v3043, %v1784
        %v3287 = vadd.f32 %v3046, %v1785
        %v3288 = vadd.f32 %v3048, %v1786
        %v3289 = vadd.f32 %v3108, %v1787
        %v3290 = vadd.f32 %v3110, %v1788
        %v3291 = vadd.f32 %v3113, %v1789
        %v3292 = vadd.f32 %v3115, %v1790
        %v3293 = vadd.f32 %v3118, %v1791
        %v3294 = vadd.f32 %v3120, %v1792
        %v3295 = vadd.f32 %v3123, %v1793
        %v3296 = vadd.f32 %v3125, %v1794
        %v3297 = vadd.f32 %v3185, %v1795
        %v3298 = vadd.f32 %v3187, %v1796
        %v3299 = vadd.f32 %v3190, %v1797
        %v3300 = vadd.f32 %v3192, %v1798
        %v3301 = vadd.f32 %v3195, %v1799
        %v3302 = vadd.f32 %v3197, %v1800
        %v3303 = vadd.f32 %v3200, %v1801
        %v3304 = vadd.f32 %v3202, %v1802
        %v3305 = vadd.f32 %v3262, %v1803
        %v3306 = vadd.f32 %v3264, %v1804
        %v3307 = vadd.f32 %v3267, %v1805
        %v3308 = vadd.f32 %v3269, %v1806
        %v3309 = vadd.f32 %v3272, %v1807
        %v3310 = vadd.f32 %v3274, %v1808
        %v3311 = vadd.f32 %v3277, %v1809
        %v3312 = vadd.f32 %v3279, %v1810
        %v3313 = vsel %vm2191, %v3281, -inf
        %3314 = vmax.xlane.f32.xlu0 %v3313
        %v3315 = vpop.xlane.xlu0 %3314
        %v3316 = vsel %vm2191, %v3282, -inf
        %3317 = vmax.xlane.f32.xlu0 %v3316
        %v3318 = vpop.xlane.xlu0 %3317
        %v3319 = vsel %vm2191, %v3283, -inf
        %3320 = vmax.xlane.f32.xlu0 %v3319
        %v3321 = vpop.xlane.xlu0 %3320
        %v3322 = vsel %vm2191, %v3284, -inf
        %3323 = vmax.xlane.f32.xlu0 %v3322
        %v3324 = vpop.xlane.xlu0 %3323
        %v3325 = vsel %vm2191, %v3285, -inf
        %3326 = vmax.xlane.f32.xlu0 %v3325
        %v3327 = vpop.xlane.xlu0 %3326
        %v3328 = vsel %vm2191, %v3286, -inf
        %3329 = vmax.xlane.f32.xlu0 %v3328
        %v3330 = vpop.xlane.xlu0 %3329
        %v3331 = vsel %vm2191, %v3287, -inf
        %3332 = vmax.xlane.f32.xlu0 %v3331
        %v3333 = vpop.xlane.xlu0 %3332
        %v3334 = vsel %vm2191, %v3288, -inf
        %3335 = vmax.xlane.f32.xlu0 %v3334
        %v3336 = vpop.xlane.xlu0 %3335
        %v3337 = vsel %vm2191, %v3289, -inf
        %3338 = vmax.xlane.f32.xlu0 %v3337
        %v3339 = vpop.xlane.xlu0 %3338
        %v3340 = vsel %vm2191, %v3290, -inf
        %3341 = vmax.xlane.f32.xlu0 %v3340
        %v3342 = vpop.xlane.xlu0 %3341
        %v3343 = vsel %vm2191, %v3291, -inf
        %3344 = vmax.xlane.f32.xlu0 %v3343
        %v3345 = vpop.xlane.xlu0 %3344
        %v3346 = vsel %vm2191, %v3292, -inf
        %3347 = vmax.xlane.f32.xlu0 %v3346
        %v3348 = vpop.xlane.xlu0 %3347
        %v3349 = vsel %vm2191, %v3293, -inf
        %3350 = vmax.xlane.f32.xlu0 %v3349
        %v3351 = vpop.xlane.xlu0 %3350
        %v3352 = vsel %vm2191, %v3294, -inf
        %3353 = vmax.xlane.f32.xlu0 %v3352
        %v3354 = vpop.xlane.xlu0 %3353
        %v3355 = vsel %vm2191, %v3295, -inf
        %3356 = vmax.xlane.f32.xlu0 %v3355
        %v3357 = vpop.xlane.xlu0 %3356
        %v3358 = vsel %vm2191, %v3296, -inf
        %3359 = vmax.xlane.f32.xlu0 %v3358
        %v3360 = vpop.xlane.xlu0 %3359
        %v3361 = vsel %vm2191, %v3297, -inf
        %3362 = vmax.xlane.f32.xlu0 %v3361
        %v3363 = vpop.xlane.xlu0 %3362
        %v3364 = vsel %vm2191, %v3298, -inf
        %3365 = vmax.xlane.f32.xlu0 %v3364
        %v3366 = vpop.xlane.xlu0 %3365
        %v3367 = vsel %vm2191, %v3299, -inf
        %3368 = vmax.xlane.f32.xlu0 %v3367
        %v3369 = vpop.xlane.xlu0 %3368
        %v3370 = vsel %vm2191, %v3300, -inf
        %3371 = vmax.xlane.f32.xlu0 %v3370
        %v3372 = vpop.xlane.xlu0 %3371
        %v3373 = vsel %vm2191, %v3301, -inf
        %3374 = vmax.xlane.f32.xlu0 %v3373
        %v3375 = vpop.xlane.xlu0 %3374
        %v3376 = vsel %vm2191, %v3302, -inf
        %3377 = vmax.xlane.f32.xlu0 %v3376
        %v3378 = vpop.xlane.xlu0 %3377
        %v3379 = vsel %vm2191, %v3303, -inf
        %3380 = vmax.xlane.f32.xlu0 %v3379
        %v3381 = vpop.xlane.xlu0 %3380
        %v3382 = vsel %vm2191, %v3304, -inf
        %3383 = vmax.xlane.f32.xlu0 %v3382
        %v3384 = vpop.xlane.xlu0 %3383
        %v3385 = vsel %vm2191, %v3305, -inf
        %3386 = vmax.xlane.f32.xlu0 %v3385
        %v3387 = vpop.xlane.xlu0 %3386
        %v3388 = vsel %vm2191, %v3306, -inf
        %3389 = vmax.xlane.f32.xlu0 %v3388
        %v3390 = vpop.xlane.xlu0 %3389
        %v3391 = vsel %vm2191, %v3307, -inf
        %3392 = vmax.xlane.f32.xlu0 %v3391
        %v3393 = vpop.xlane.xlu0 %3392
        %v3394 = vsel %vm2191, %v3308, -inf
        %3395 = vmax.xlane.f32.xlu0 %v3394
        %v3396 = vpop.xlane.xlu0 %3395
        %v3397 = vsel %vm2191, %v3309, -inf
        %3398 = vmax.xlane.f32.xlu0 %v3397
        %v3399 = vpop.xlane.xlu0 %3398
        %v3400 = vsel %vm2191, %v3310, -inf
        %3401 = vmax.xlane.f32.xlu0 %v3400
        %v3402 = vpop.xlane.xlu0 %3401
        %v3403 = vsel %vm2191, %v3311, -inf
        %3404 = vmax.xlane.f32.xlu0 %v3403
        %v3405 = vpop.xlane.xlu0 %3404
        %v3406 = vsel %vm2191, %v3312, -inf
        %3407 = vmax.xlane.f32.xlu0 %v3406
        %v3408 = vpop.xlane.xlu0 %3407
        %v3409 = vsub.f32 %v3281, %v3315
        %v3410 = vsub.f32 %v3282, %v3318
        %v3411 = vsub.f32 %v3283, %v3321
        %v3412 = vsub.f32 %v3284, %v3324
        %v3413 = vsub.f32 %v3285, %v3327
        %v3414 = vsub.f32 %v3286, %v3330
        %v3415 = vsub.f32 %v3287, %v3333
        %v3416 = vsub.f32 %v3288, %v3336
        %v3417 = vsub.f32 %v3289, %v3339
        %v3418 = vsub.f32 %v3290, %v3342
        %v3419 = vsub.f32 %v3291, %v3345
        %v3420 = vsub.f32 %v3292, %v3348
        %v3421 = vsub.f32 %v3293, %v3351
        %v3422 = vsub.f32 %v3294, %v3354
        %v3423 = vsub.f32 %v3295, %v3357
        %v3424 = vsub.f32 %v3296, %v3360
        %v3425 = vsub.f32 %v3297, %v3363
        %v3426 = vsub.f32 %v3298, %v3366
        %v3427 = vsub.f32 %v3299, %v3369
        %v3428 = vsub.f32 %v3300, %v3372
        %v3429 = vsub.f32 %v3301, %v3375
        %v3430 = vsub.f32 %v3302, %v3378
        %v3431 = vsub.f32 %v3303, %v3381
        %v3432 = vsub.f32 %v3304, %v3384
        %v3433 = vsub.f32 %v3305, %v3387
        %v3434 = vsub.f32 %v3306, %v3390
        %v3435 = vsub.f32 %v3307, %v3393
        %v3436 = vsub.f32 %v3308, %v3396
        %v3437 = vsub.f32 %v3309, %v3399
        %v3438 = vsub.f32 %v3310, %v3402
        %v3439 = vsub.f32 %v3311, %v3405
        %v3440 = vsub.f32 %v3312, %v3408
        %v3441 = vmul.f32 %v3409, 1.442695
        %v3442 = vpow.pop %v3441
        %v3443 = vmul.f32 %v3410, 1.442695
        %v3444 = vpow.pop %v3443
        %v3445 = vmul.f32 %v3411, 1.442695
        %v3446 = vpow.pop %v3445
        %v3447 = vmul.f32 %v3412, 1.442695
        %v3448 = vpow.pop %v3447
        %v3449 = vmul.f32 %v3413, 1.442695
        %v3450 = vpow.pop %v3449
        %v3451 = vmul.f32 %v3414, 1.442695
        %v3452 = vpow.pop %v3451
        %v3453 = vmul.f32 %v3415, 1.442695
        %v3454 = vpow.pop %v3453
        %v3455 = vmul.f32 %v3416, 1.442695
        %v3456 = vpow.pop %v3455
        %v3457 = vmul.f32 %v3417, 1.442695
        %v3458 = vpow.pop %v3457
        %v3459 = vmul.f32 %v3418, 1.442695
        %v3460 = vpow.pop %v3459
        %v3461 = vmul.f32 %v3419, 1.442695
        %v3462 = vpow.pop %v3461
        %v3463 = vmul.f32 %v3420, 1.442695
        %v3464 = vpow.pop %v3463
        %v3465 = vmul.f32 %v3421, 1.442695
        %v3466 = vpow.pop %v3465
        %v3467 = vmul.f32 %v3422, 1.442695
        %v3468 = vpow.pop %v3467
        %v3469 = vmul.f32 %v3423, 1.442695
        %v3470 = vpow.pop %v3469
        %v3471 = vmul.f32 %v3424, 1.442695
        %v3472 = vpow.pop %v3471
        %v3473 = vmul.f32 %v3425, 1.442695
        %v3474 = vpow.pop %v3473
        %v3475 = vmul.f32 %v3426, 1.442695
        %v3476 = vpow.pop %v3475
        %v3477 = vmul.f32 %v3427, 1.442695
        %v3478 = vpow.pop %v3477
        %v3479 = vmul.f32 %v3428, 1.442695
        %v3480 = vpow.pop %v3479
        %v3481 = vmul.f32 %v3429, 1.442695
        %v3482 = vpow.pop %v3481
        %v3483 = vmul.f32 %v3430, 1.442695
        %v3484 = vpow.pop %v3483
        %v3485 = vmul.f32 %v3431, 1.442695
        %v3486 = vpow.pop %v3485
        %v3487 = vmul.f32 %v3432, 1.442695
        %v3488 = vpow.pop %v3487
        %v3489 = vmul.f32 %v3433, 1.442695
        %v3490 = vpow.pop %v3489
        %v3491 = vmul.f32 %v3434, 1.442695
        %v3492 = vpow.pop %v3491
        %v3493 = vmul.f32 %v3435, 1.442695
        %v3494 = vpow.pop %v3493
        %v3495 = vmul.f32 %v3436, 1.442695
        %v3496 = vpow.pop %v3495
        %v3497 = vmul.f32 %v3437, 1.442695
        %v3498 = vpow.pop %v3497
        %v3499 = vmul.f32 %v3438, 1.442695
        %v3500 = vpow.pop %v3499
        %v3501 = vmul.f32 %v3439, 1.442695
        %v3502 = vpow.pop %v3501
        %v3503 = vmul.f32 %v3440, 1.442695
        %v3504 = vpow.pop %v3503
        %v3505 = vsel %vm2191, %v3442, 0.0
        %3506 = vadd.xlane.f32.xlu0 %v3505
        %v3507 = vpop.xlane.xlu0 %3506
        %v3508 = vsel %vm2191, %v3444, 0.0
        %3509 = vadd.xlane.f32.xlu0 %v3508
        %v3510 = vpop.xlane.xlu0 %3509
        %v3511 = vsel %vm2191, %v3446, 0.0
        %3512 = vadd.xlane.f32.xlu0 %v3511
        %v3513 = vpop.xlane.xlu0 %3512
        %v3514 = vsel %vm2191, %v3448, 0.0
        %3515 = vadd.xlane.f32.xlu0 %v3514
        %v3516 = vpop.xlane.xlu0 %3515
        %v3517 = vsel %vm2191, %v3450, 0.0
        %3518 = vadd.xlane.f32.xlu0 %v3517
        %v3519 = vpop.xlane.xlu0 %3518
        %v3520 = vsel %vm2191, %v3452, 0.0
        %3521 = vadd.xlane.f32.xlu0 %v3520
        %v3522 = vpop.xlane.xlu0 %3521
        %v3523 = vsel %vm2191, %v3454, 0.0
        %3524 = vadd.xlane.f32.xlu0 %v3523
        %v3525 = vpop.xlane.xlu0 %3524
        %v3526 = vsel %vm2191, %v3456, 0.0
        %3527 = vadd.xlane.f32.xlu0 %v3526
        %v3528 = vpop.xlane.xlu0 %3527
        %v3529 = vsel %vm2191, %v3458, 0.0
        %3530 = vadd.xlane.f32.xlu0 %v3529
        %v3531 = vpop.xlane.xlu0 %3530
        %v3532 = vsel %vm2191, %v3460, 0.0
        %3533 = vadd.xlane.f32.xlu0 %v3532
        %v3534 = vpop.xlane.xlu0 %3533
        %v3535 = vsel %vm2191, %v3462, 0.0
        %3536 = vadd.xlane.f32.xlu0 %v3535
        %v3537 = vpop.xlane.xlu0 %3536
        %v3538 = vsel %vm2191, %v3464, 0.0
        %3539 = vadd.xlane.f32.xlu0 %v3538
        %v3540 = vpop.xlane.xlu0 %3539
        %v3541 = vsel %vm2191, %v3466, 0.0
        %3542 = vadd.xlane.f32.xlu0 %v3541
        %v3543 = vpop.xlane.xlu0 %3542
        %v3544 = vsel %vm2191, %v3468, 0.0
        %3545 = vadd.xlane.f32.xlu0 %v3544
        %v3546 = vpop.xlane.xlu0 %3545
        %v3547 = vsel %vm2191, %v3470, 0.0
        %3548 = vadd.xlane.f32.xlu0 %v3547
        %v3549 = vpop.xlane.xlu0 %3548
        %v3550 = vsel %vm2191, %v3472, 0.0
        %3551 = vadd.xlane.f32.xlu0 %v3550
        %v3552 = vpop.xlane.xlu0 %3551
        %v3553 = vsel %vm2191, %v3474, 0.0
        %3554 = vadd.xlane.f32.xlu0 %v3553
        %v3555 = vpop.xlane.xlu0 %3554
        %v3556 = vsel %vm2191, %v3476, 0.0
        %3557 = vadd.xlane.f32.xlu0 %v3556
        %v3558 = vpop.xlane.xlu0 %3557
        %v3559 = vsel %vm2191, %v3478, 0.0
        %3560 = vadd.xlane.f32.xlu0 %v3559
        %v3561 = vpop.xlane.xlu0 %3560
        %v3562 = vsel %vm2191, %v3480, 0.0
        %3563 = vadd.xlane.f32.xlu0 %v3562
        %v3564 = vpop.xlane.xlu0 %3563
        %v3565 = vsel %vm2191, %v3482, 0.0
        %3566 = vadd.xlane.f32.xlu0 %v3565
        %v3567 = vpop.xlane.xlu0 %3566
        %v3568 = vsel %vm2191, %v3484, 0.0
        %3569 = vadd.xlane.f32.xlu0 %v3568
        %v3570 = vpop.xlane.xlu0 %3569
        %v3571 = vsel %vm2191, %v3486, 0.0
        %3572 = vadd.xlane.f32.xlu0 %v3571
        %v3573 = vpop.xlane.xlu0 %3572
        %v3574 = vsel %vm2191, %v3488, 0.0
        %3575 = vadd.xlane.f32.xlu0 %v3574
        %v3576 = vpop.xlane.xlu0 %3575
        %v3577 = vsel %vm2191, %v3490, 0.0
        %3578 = vadd.xlane.f32.xlu0 %v3577
        %v3579 = vpop.xlane.xlu0 %3578
        %v3580 = vsel %vm2191, %v3492, 0.0
        %3581 = vadd.xlane.f32.xlu0 %v3580
        %v3582 = vpop.xlane.xlu0 %3581
        %v3583 = vsel %vm2191, %v3494, 0.0
        %3584 = vadd.xlane.f32.xlu0 %v3583
        %v3585 = vpop.xlane.xlu0 %3584
        %v3586 = vsel %vm2191, %v3496, 0.0
        %3587 = vadd.xlane.f32.xlu0 %v3586
        %v3588 = vpop.xlane.xlu0 %3587
        %v3589 = vsel %vm2191, %v3498, 0.0
        %3590 = vadd.xlane.f32.xlu0 %v3589
        %v3591 = vpop.xlane.xlu0 %3590
        %v3592 = vsel %vm2191, %v3500, 0.0
        %3593 = vadd.xlane.f32.xlu0 %v3592
        %v3594 = vpop.xlane.xlu0 %3593
        %v3595 = vsel %vm2191, %v3502, 0.0
        %3596 = vadd.xlane.f32.xlu0 %v3595
        %v3597 = vpop.xlane.xlu0 %3596
        %v3598 = vsel %vm2191, %v3504, 0.0
        %3599 = vadd.xlane.f32.xlu0 %v3598
        %v3600 = vpop.xlane.xlu0 %3599
        %v3601 = vrcp.pop %v3507
        %v3602 = vrcp.pop %v3510
        %v3603 = vrcp.pop %v3513
        %v3604 = vrcp.pop %v3516
        %v3605 = vrcp.pop %v3519
        %v3606 = vrcp.pop %v3522
        %v3607 = vrcp.pop %v3525
        %v3608 = vrcp.pop %v3528
        %v3609 = vrcp.pop %v3531
        %v3610 = vrcp.pop %v3534
        %v3611 = vrcp.pop %v3537
        %v3612 = vrcp.pop %v3540
        %v3613 = vrcp.pop %v3543
        %v3614 = vrcp.pop %v3546
        %v3615 = vrcp.pop %v3549
        %v3616 = vrcp.pop %v3552
        %v3617 = vrcp.pop %v3555
        %v3618 = vrcp.pop %v3558
        %v3619 = vrcp.pop %v3561
        %v3620 = vrcp.pop %v3564
        %v3621 = vrcp.pop %v3567
        %v3622 = vrcp.pop %v3570
        %v3623 = vrcp.pop %v3573
        %v3624 = vrcp.pop %v3576
        %v3625 = vrcp.pop %v3579
        %v3626 = vrcp.pop %v3582
        %v3627 = vrcp.pop %v3585
        %v3628 = vrcp.pop %v3588
        %v3629 = vrcp.pop %v3591
        %v3630 = vrcp.pop %v3594
        %v3631 = vrcp.pop %v3597
        %v3632 = vrcp.pop %v3600
        %v3633 = vmul.f32 %v3442, %v3601
        %v3634 = vmul.f32 %v3444, %v3602
        %v3635 = vmul.f32 %v3446, %v3603
        %v3636 = vmul.f32 %v3448, %v3604
        %v3637 = vmul.f32 %v3450, %v3605
        %v3638 = vmul.f32 %v3452, %v3606
        %v3639 = vmul.f32 %v3454, %v3607
        %v3640 = vmul.f32 %v3456, %v3608
        %v3641 = vmul.f32 %v3458, %v3609
        %v3642 = vmul.f32 %v3460, %v3610
        %v3643 = vmul.f32 %v3462, %v3611
        %v3644 = vmul.f32 %v3464, %v3612
        %v3645 = vmul.f32 %v3466, %v3613
        %v3646 = vmul.f32 %v3468, %v3614
        %v3647 = vmul.f32 %v3470, %v3615
        %v3648 = vmul.f32 %v3472, %v3616
        %v3649 = vmul.f32 %v3474, %v3617
        %v3650 = vmul.f32 %v3476, %v3618
        %v3651 = vmul.f32 %v3478, %v3619
        %v3652 = vmul.f32 %v3480, %v3620
        %v3653 = vmul.f32 %v3482, %v3621
        %v3654 = vmul.f32 %v3484, %v3622
        %v3655 = vmul.f32 %v3486, %v3623
        %v3656 = vmul.f32 %v3488, %v3624
        %v3657 = vmul.f32 %v3490, %v3625
        %v3658 = vmul.f32 %v3492, %v3626
        %v3659 = vmul.f32 %v3494, %v3627
        %v3660 = vmul.f32 %v3496, %v3628
        %v3661 = vmul.f32 %v3498, %v3629
        %v3662 = vmul.f32 %v3500, %v3630
        %v3663 = vmul.f32 %v3502, %v3631
        %v3664 = vmul.f32 %v3504, %v3632
        %v3665 = vpack.c.bf16 %v3633, %v3633
        %v3666 = vpack.c.bf16 %v3634, %v3634
        %v3667 = vpack.c.bf16 %v3635, %v3635
        %v3668 = vpack.c.bf16 %v3636, %v3636
        %v3669 = vpack.c.bf16 %v3637, %v3637
        %v3670 = vpack.c.bf16 %v3638, %v3638
        %v3671 = vpack.c.bf16 %v3639, %v3639
        %v3672 = vpack.c.bf16 %v3640, %v3640
        %v3673 = vpack.c.bf16 %v3641, %v3641
        %v3674 = vpack.c.bf16 %v3642, %v3642
        %v3675 = vpack.c.bf16 %v3643, %v3643
        %v3676 = vpack.c.bf16 %v3644, %v3644
        %v3677 = vpack.c.bf16 %v3645, %v3645
        %v3678 = vpack.c.bf16 %v3646, %v3646
        %v3679 = vpack.c.bf16 %v3647, %v3647
        %v3680 = vpack.c.bf16 %v3648, %v3648
        %v3681 = vpack.c.bf16 %v3649, %v3649
        %v3682 = vpack.c.bf16 %v3650, %v3650
        %v3683 = vpack.c.bf16 %v3651, %v3651
        %v3684 = vpack.c.bf16 %v3652, %v3652
        %v3685 = vpack.c.bf16 %v3653, %v3653
        %v3686 = vpack.c.bf16 %v3654, %v3654
        %v3687 = vpack.c.bf16 %v3655, %v3655
        %v3688 = vpack.c.bf16 %v3656, %v3656
        %v3689 = vpack.c.bf16 %v3657, %v3657
        %v3690 = vpack.c.bf16 %v3658, %v3658
        %v3691 = vpack.c.bf16 %v3659, %v3659
        %v3692 = vpack.c.bf16 %v3660, %v3660
        %v3693 = vpack.c.bf16 %v3661, %v3661
        %v3694 = vpack.c.bf16 %v3662, %v3662
        %v3695 = vpack.c.bf16 %v3663, %v3663
        %v3696 = vpack.c.bf16 %v3664, %v3664
        %v3697 = vrot.slane %v1622, 4
        %v3698 = vrot.slane %v1627, 4
        %v3699 = vrot.slane %v1632, 4
        %v3700 = vrot.slane %v1637, 4
        %v3701 = vrot.slane %v1642, 4
        %v3702 = vrot.slane %v1647, 4
        %v3703 = vrot.slane %v1652, 4
        %v3704 = vrot.slane %v1657, 4
        %v3713 = vunpack.c.l.b16 %v3665
        %v3714 = vunpack.c.l.b16 %v3666
        %v3715 = vunpack.c.l.b16 %v3667
        %v3716 = vunpack.c.l.b16 %v3668
        %v3717 = vunpack.c.l.b16 %v3669
        %v3718 = vunpack.c.l.b16 %v3670
        %v3719 = vunpack.c.l.b16 %v3671
        %v3720 = vunpack.c.l.b16 %v3672
        %v3721 = vpack.c.b16 %v3714, %v3713
        %v3722 = vpack.c.b16 %v3716, %v3715
        %v3723 = vpack.c.b16 %v3718, %v3717
        %v3724 = vpack.c.b16 %v3720, %v3719
        %v3725 = vunpack.c.l.b16 %v3697
        %v3726 = vunpack.c.l.b16 %v3698
        %v3727 = vunpack.c.l.b16 %v3699
        %v3728 = vunpack.c.l.b16 %v3700
        %v3729 = vunpack.c.l.b16 %v3701
        %v3730 = vunpack.c.l.b16 %v3702
        %v3731 = vunpack.c.l.b16 %v3703
        %v3732 = vunpack.c.l.b16 %v3704
        %v3733 = vpack.c.b16 %v3726, %v3725
        %v3734 = vpack.c.b16 %v3728, %v3727
        %v3735 = vpack.c.b16 %v3730, %v3729
        %v3736 = vpack.c.b16 %v3732, %v3731
        %v3742 = vsel %vm2191, %v3721, 0
        %v3745 = vsel %vm2191, %v3722, 0
        %v3748 = vsel %vm2191, %v3723, 0
        %v3751 = vsel %vm2191, %v3724, 0
        %3753 = vmatpush.bf16.msra.mxu0 0
        %3754 = vmatpush.bf16.msra.mxu0 0
        %3755 = vmatpush.bf16.msra.mxu0 0
        %3756 = vmatpush.bf16.msra.mxu0 0
        %3757 = vmatpush.bf16.msra.mxu0 %v3736
        %3758 = vmatpush.bf16.msra.mxu0 %v3735
        %3759 = vmatpush.bf16.msra.mxu0 %v3734
        %3760 = vmatpush.bf16.msra.mxu0 %v3733
        %3761 = vmatmul.bf16.gmra.mxu0 %v3742
        %v3762 = vpop.f32.mrf.mxu0
        %v3763 = vadd.f32 0.0, %v3762
        %v3764 = vpop.f32.mrf.mxu0
        %v3765 = vadd.f32 0.0, %v3764
        %3766 = vmatmul.bf16.gmra.mxu0 %v3745
        %v3767 = vpop.f32.mrf.mxu0
        %v3768 = vadd.f32 0.0, %v3767
        %v3769 = vpop.f32.mrf.mxu0
        %v3770 = vadd.f32 0.0, %v3769
        %3771 = vmatmul.bf16.gmra.mxu0 %v3748
        %v3772 = vpop.f32.mrf.mxu0
        %v3773 = vadd.f32 0.0, %v3772
        %v3774 = vpop.f32.mrf.mxu0
        %v3775 = vadd.f32 0.0, %v3774
        %3776 = vmatmul.bf16.gmra.mxu0 %v3751
        %v3777 = vpop.f32.mrf.mxu0
        %v3778 = vadd.f32 0.0, %v3777
        %v3779 = vpop.f32.mrf.mxu0
        %v3780 = vadd.f32 0.0, %v3779
        %3781 = vdwg.mxu0
        %v3782 = vrot.slane %v1662, 4
        %v3783 = vrot.slane %v1667, 4
        %v3784 = vrot.slane %v1672, 4
        %v3785 = vrot.slane %v1677, 4
        %v3786 = vrot.slane %v1682, 4
        %v3787 = vrot.slane %v1687, 4
        %v3788 = vrot.slane %v1692, 4
        %v3789 = vrot.slane %v1697, 4
        %v3798 = vunpack.c.l.b16 %v3673
        %v3799 = vunpack.c.l.b16 %v3674
        %v3800 = vunpack.c.l.b16 %v3675
        %v3801 = vunpack.c.l.b16 %v3676
        %v3802 = vunpack.c.l.b16 %v3677
        %v3803 = vunpack.c.l.b16 %v3678
        %v3804 = vunpack.c.l.b16 %v3679
        %v3805 = vunpack.c.l.b16 %v3680
        %v3806 = vpack.c.b16 %v3799, %v3798
        %v3807 = vpack.c.b16 %v3801, %v3800
        %v3808 = vpack.c.b16 %v3803, %v3802
        %v3809 = vpack.c.b16 %v3805, %v3804
        %v3810 = vunpack.c.l.b16 %v3782
        %v3811 = vunpack.c.l.b16 %v3783
        %v3812 = vunpack.c.l.b16 %v3784
        %v3813 = vunpack.c.l.b16 %v3785
        %v3814 = vunpack.c.l.b16 %v3786
        %v3815 = vunpack.c.l.b16 %v3787
        %v3816 = vunpack.c.l.b16 %v3788
        %v3817 = vunpack.c.l.b16 %v3789
        %v3818 = vpack.c.b16 %v3811, %v3810
        %v3819 = vpack.c.b16 %v3813, %v3812
        %v3820 = vpack.c.b16 %v3815, %v3814
        %v3821 = vpack.c.b16 %v3817, %v3816
        %v3827 = vsel %vm2191, %v3806, 0
        %v3830 = vsel %vm2191, %v3807, 0
        %v3833 = vsel %vm2191, %v3808, 0
        %v3836 = vsel %vm2191, %v3809, 0
        %3838 = vmatpush.bf16.msra.mxu0 0
        %3839 = vmatpush.bf16.msra.mxu0 0
        %3840 = vmatpush.bf16.msra.mxu0 0
        %3841 = vmatpush.bf16.msra.mxu0 0
        %3842 = vmatpush.bf16.msra.mxu0 %v3821
        %3843 = vmatpush.bf16.msra.mxu0 %v3820
        %3844 = vmatpush.bf16.msra.mxu0 %v3819
        %3845 = vmatpush.bf16.msra.mxu0 %v3818
        %3846 = vmatmul.bf16.gmra.mxu0 %v3827
        %v3847 = vpop.f32.mrf.mxu0
        %v3848 = vadd.f32 0.0, %v3847
        %v3849 = vpop.f32.mrf.mxu0
        %v3850 = vadd.f32 0.0, %v3849
        %3851 = vmatmul.bf16.gmra.mxu0 %v3830
        %v3852 = vpop.f32.mrf.mxu0
        %v3853 = vadd.f32 0.0, %v3852
        %v3854 = vpop.f32.mrf.mxu0
        %v3855 = vadd.f32 0.0, %v3854
        %3856 = vmatmul.bf16.gmra.mxu0 %v3833
        %v3857 = vpop.f32.mrf.mxu0
        %v3858 = vadd.f32 0.0, %v3857
        %v3859 = vpop.f32.mrf.mxu0
        %v3860 = vadd.f32 0.0, %v3859
        %3861 = vmatmul.bf16.gmra.mxu0 %v3836
        %v3862 = vpop.f32.mrf.mxu0
        %v3863 = vadd.f32 0.0, %v3862
        %v3864 = vpop.f32.mrf.mxu0
        %v3865 = vadd.f32 0.0, %v3864
        %3866 = vdwg.mxu0
        %v3867 = vrot.slane %v1702, 4
        %v3868 = vrot.slane %v1707, 4
        %v3869 = vrot.slane %v1712, 4
        %v3870 = vrot.slane %v1717, 4
        %v3871 = vrot.slane %v1722, 4
        %v3872 = vrot.slane %v1727, 4
        %v3873 = vrot.slane %v1732, 4
        %v3874 = vrot.slane %v1737, 4
        %v3883 = vunpack.c.l.b16 %v3681
        %v3884 = vunpack.c.l.b16 %v3682
        %v3885 = vunpack.c.l.b16 %v3683
        %v3886 = vunpack.c.l.b16 %v3684
        %v3887 = vunpack.c.l.b16 %v3685
        %v3888 = vunpack.c.l.b16 %v3686
        %v3889 = vunpack.c.l.b16 %v3687
        %v3890 = vunpack.c.l.b16 %v3688
        %v3891 = vpack.c.b16 %v3884, %v3883
        %v3892 = vpack.c.b16 %v3886, %v3885
        %v3893 = vpack.c.b16 %v3888, %v3887
        %v3894 = vpack.c.b16 %v3890, %v3889
        %v3895 = vunpack.c.l.b16 %v3867
        %v3896 = vunpack.c.l.b16 %v3868
        %v3897 = vunpack.c.l.b16 %v3869
        %v3898 = vunpack.c.l.b16 %v3870
        %v3899 = vunpack.c.l.b16 %v3871
        %v3900 = vunpack.c.l.b16 %v3872
        %v3901 = vunpack.c.l.b16 %v3873
        %v3902 = vunpack.c.l.b16 %v3874
        %v3903 = vpack.c.b16 %v3896, %v3895
        %v3904 = vpack.c.b16 %v3898, %v3897
        %v3905 = vpack.c.b16 %v3900, %v3899
        %v3906 = vpack.c.b16 %v3902, %v3901
        %v3912 = vsel %vm2191, %v3891, 0
        %v3915 = vsel %vm2191, %v3892, 0
        %v3918 = vsel %vm2191, %v3893, 0
        %v3921 = vsel %vm2191, %v3894, 0
        %3923 = vmatpush.bf16.msra.mxu0 0
        %3924 = vmatpush.bf16.msra.mxu0 0
        %3925 = vmatpush.bf16.msra.mxu0 0
        %3926 = vmatpush.bf16.msra.mxu0 0
        %3927 = vmatpush.bf16.msra.mxu0 %v3906
        %3928 = vmatpush.bf16.msra.mxu0 %v3905
        %3929 = vmatpush.bf16.msra.mxu0 %v3904
        %3930 = vmatpush.bf16.msra.mxu0 %v3903
        %3931 = vmatmul.bf16.gmra.mxu0 %v3912
        %v3932 = vpop.f32.mrf.mxu0
        %v3933 = vadd.f32 0.0, %v3932
        %v3934 = vpop.f32.mrf.mxu0
        %v3935 = vadd.f32 0.0, %v3934
        %3936 = vmatmul.bf16.gmra.mxu0 %v3915
        %v3937 = vpop.f32.mrf.mxu0
        %v3938 = vadd.f32 0.0, %v3937
        %v3939 = vpop.f32.mrf.mxu0
        %v3940 = vadd.f32 0.0, %v3939
        %3941 = vmatmul.bf16.gmra.mxu0 %v3918
        %v3942 = vpop.f32.mrf.mxu0
        %v3943 = vadd.f32 0.0, %v3942
        %v3944 = vpop.f32.mrf.mxu0
        %v3945 = vadd.f32 0.0, %v3944
        %3946 = vmatmul.bf16.gmra.mxu0 %v3921
        %v3947 = vpop.f32.mrf.mxu0
        %v3948 = vadd.f32 0.0, %v3947
        %v3949 = vpop.f32.mrf.mxu0
        %v3950 = vadd.f32 0.0, %v3949
        %3951 = vdwg.mxu0
        %v3952 = vrot.slane %v1742, 4
        %v3953 = vrot.slane %v1747, 4
        %v3954 = vrot.slane %v1752, 4
        %v3955 = vrot.slane %v1757, 4
        %v3956 = vrot.slane %v1762, 4
        %v3957 = vrot.slane %v1767, 4
        %v3958 = vrot.slane %v1772, 4
        %v3959 = vrot.slane %v1777, 4
        %v3968 = vunpack.c.l.b16 %v3689
        %v3969 = vunpack.c.l.b16 %v3690
        %v3970 = vunpack.c.l.b16 %v3691
        %v3971 = vunpack.c.l.b16 %v3692
        %v3972 = vunpack.c.l.b16 %v3693
        %v3973 = vunpack.c.l.b16 %v3694
        %v3974 = vunpack.c.l.b16 %v3695
        %v3975 = vunpack.c.l.b16 %v3696
        %v3976 = vpack.c.b16 %v3969, %v3968
        %v3977 = vpack.c.b16 %v3971, %v3970
        %v3978 = vpack.c.b16 %v3973, %v3972
        %v3979 = vpack.c.b16 %v3975, %v3974
        %v3980 = vunpack.c.l.b16 %v3952
        %v3981 = vunpack.c.l.b16 %v3953
        %v3982 = vunpack.c.l.b16 %v3954
        %v3983 = vunpack.c.l.b16 %v3955
        %v3984 = vunpack.c.l.b16 %v3956
        %v3985 = vunpack.c.l.b16 %v3957
        %v3986 = vunpack.c.l.b16 %v3958
        %v3987 = vunpack.c.l.b16 %v3959
        %v3988 = vpack.c.b16 %v3981, %v3980
        %v3989 = vpack.c.b16 %v3983, %v3982
        %v3990 = vpack.c.b16 %v3985, %v3984
        %v3991 = vpack.c.b16 %v3987, %v3986
        %v3997 = vsel %vm2191, %v3976, 0
        %v4000 = vsel %vm2191, %v3977, 0
        %v4003 = vsel %vm2191, %v3978, 0
        %v4006 = vsel %vm2191, %v3979, 0
        %4008 = vmatpush.bf16.msra.mxu0 0
        %4009 = vmatpush.bf16.msra.mxu0 0
        %4010 = vmatpush.bf16.msra.mxu0 0
        %4011 = vmatpush.bf16.msra.mxu0 0
        %4012 = vmatpush.bf16.msra.mxu0 %v3991
        %4013 = vmatpush.bf16.msra.mxu0 %v3990
        %4014 = vmatpush.bf16.msra.mxu0 %v3989
        %4015 = vmatpush.bf16.msra.mxu0 %v3988
        %4016 = vmatmul.bf16.gmra.mxu0 %v3997
        %v4017 = vpop.f32.mrf.mxu0
        %v4018 = vadd.f32 0.0, %v4017
        %v4019 = vpop.f32.mrf.mxu0
        %v4020 = vadd.f32 0.0, %v4019
        %4021 = vmatmul.bf16.gmra.mxu0 %v4000
        %v4022 = vpop.f32.mrf.mxu0
        %v4023 = vadd.f32 0.0, %v4022
        %v4024 = vpop.f32.mrf.mxu0
        %v4025 = vadd.f32 0.0, %v4024
        %4026 = vmatmul.bf16.gmra.mxu0 %v4003
        %v4027 = vpop.f32.mrf.mxu0
        %v4028 = vadd.f32 0.0, %v4027
        %v4029 = vpop.f32.mrf.mxu0
        %v4030 = vadd.f32 0.0, %v4029
        %4031 = vmatmul.bf16.gmra.mxu0 %v4006
        %v4032 = vpop.f32.mrf.mxu0
        %v4033 = vadd.f32 0.0, %v4032
        %v4034 = vpop.f32.mrf.mxu0
        %v4035 = vadd.f32 0.0, %v4034
        %4036 = vdwg.mxu0
        %v4037 = vpack.c.bf16 %v3763, %v3763
        %v4038 = vpack.c.bf16 %v3765, %v3765
        %v4039 = vpack.c.bf16 %v3768, %v3768
        %v4040 = vpack.c.bf16 %v3770, %v3770
        %v4041 = vpack.c.bf16 %v3773, %v3773
        %v4042 = vpack.c.bf16 %v3775, %v3775
        %v4043 = vpack.c.bf16 %v3778, %v3778
        %v4044 = vpack.c.bf16 %v3780, %v3780
        %v4045 = vpack.c.bf16 %v3848, %v3848
        %v4046 = vpack.c.bf16 %v3850, %v3850
        %v4047 = vpack.c.bf16 %v3853, %v3853
        %v4048 = vpack.c.bf16 %v3855, %v3855
        %v4049 = vpack.c.bf16 %v3858, %v3858
        %v4050 = vpack.c.bf16 %v3860, %v3860
        %v4051 = vpack.c.bf16 %v3863, %v3863
        %v4052 = vpack.c.bf16 %v3865, %v3865
        %v4053 = vpack.c.bf16 %v3933, %v3933
        %v4054 = vpack.c.bf16 %v3935, %v3935
        %v4055 = vpack.c.bf16 %v3938, %v3938
        %v4056 = vpack.c.bf16 %v3940, %v3940
        %v4057 = vpack.c.bf16 %v3943, %v3943
        %v4058 = vpack.c.bf16 %v3945, %v3945
        %v4059 = vpack.c.bf16 %v3948, %v3948
        %v4060 = vpack.c.bf16 %v3950, %v3950
        %v4061 = vpack.c.bf16 %v4018, %v4018
        %v4062 = vpack.c.bf16 %v4020, %v4020
        %v4063 = vpack.c.bf16 %v4023, %v4023
        %v4064 = vpack.c.bf16 %v4025, %v4025
        %v4065 = vpack.c.bf16 %v4028, %v4028
        %v4066 = vpack.c.bf16 %v4030, %v4030
        %v4067 = vpack.c.bf16 %v4033, %v4033
        %v4068 = vpack.c.bf16 %v4035, %v4035
        %s4069 = scalar_lea.vmem %s4, 64
        %v4070 = vld [vmem:[%s4069] sm:$0xf]
        %v4071 = vld [vmem:[%s4069 + $0x4] sm:$0xf]
        %v4072 = vld [vmem:[%s4069 + $0x8] sm:$0xf]
        %v4073 = vld [vmem:[%s4069 + $0xc] sm:$0xf]
        %v4074 = vld [vmem:[%s4069 + $0x10] sm:$0xf]
        %v4075 = vld [vmem:[%s4069 + $0x14] sm:$0xf]
        %v4076 = vld [vmem:[%s4069 + $0x18] sm:$0xf]
        %v4077 = vld [vmem:[%s4069 + $0x1c] sm:$0xf]
        %v4078 = vld [vmem:[%s4069 + $0x20] sm:$0xf]
        %v4079 = vld [vmem:[%s4069 + $0x24] sm:$0xf]
        %v4080 = vld [vmem:[%s4069 + $0x28] sm:$0xf]
        %v4081 = vld [vmem:[%s4069 + $0x2c] sm:$0xf]
        %v4082 = vld [vmem:[%s4069 + $0x30] sm:$0xf]
        %v4083 = vld [vmem:[%s4069 + $0x34] sm:$0xf]
        %v4084 = vld [vmem:[%s4069 + $0x38] sm:$0xf]
        %v4085 = vld [vmem:[%s4069 + $0x3c] sm:$0xf]
        %v4118 = vunpack.c.l.b16 %v4037
        %v4119 = vunpack.c.l.b16 %v4038
        %v4120 = vunpack.c.l.b16 %v4039
        %v4121 = vunpack.c.l.b16 %v4040
        %v4122 = vunpack.c.l.b16 %v4041
        %v4123 = vunpack.c.l.b16 %v4042
        %v4124 = vunpack.c.l.b16 %v4043
        %v4125 = vunpack.c.l.b16 %v4044
        %v4126 = vunpack.c.l.b16 %v4045
        %v4127 = vunpack.c.l.b16 %v4046
        %v4128 = vunpack.c.l.b16 %v4047
        %v4129 = vunpack.c.l.b16 %v4048
        %v4130 = vunpack.c.l.b16 %v4049
        %v4131 = vunpack.c.l.b16 %v4050
        %v4132 = vunpack.c.l.b16 %v4051
        %v4133 = vunpack.c.l.b16 %v4052
        %v4134 = vunpack.c.l.b16 %v4053
        %v4135 = vunpack.c.l.b16 %v4054
        %v4136 = vunpack.c.l.b16 %v4055
        %v4137 = vunpack.c.l.b16 %v4056
        %v4138 = vunpack.c.l.b16 %v4057
        %v4139 = vunpack.c.l.b16 %v4058
        %v4140 = vunpack.c.l.b16 %v4059
        %v4141 = vunpack.c.l.b16 %v4060
        %v4142 = vunpack.c.l.b16 %v4061
        %v4143 = vunpack.c.l.b16 %v4062
        %v4144 = vunpack.c.l.b16 %v4063
        %v4145 = vunpack.c.l.b16 %v4064
        %v4146 = vunpack.c.l.b16 %v4065
        %v4147 = vunpack.c.l.b16 %v4066
        %v4148 = vunpack.c.l.b16 %v4067
        %v4149 = vunpack.c.l.b16 %v4068
        %v4150 = vpack.c.b16 %v4119, %v4118
        %v4151 = vpack.c.b16 %v4121, %v4120
        %v4152 = vpack.c.b16 %v4123, %v4122
        %v4153 = vpack.c.b16 %v4125, %v4124
        %v4154 = vpack.c.b16 %v4127, %v4126
        %v4155 = vpack.c.b16 %v4129, %v4128
        %v4156 = vpack.c.b16 %v4131, %v4130
        %v4157 = vpack.c.b16 %v4133, %v4132
        %v4158 = vpack.c.b16 %v4135, %v4134
        %v4159 = vpack.c.b16 %v4137, %v4136
        %v4160 = vpack.c.b16 %v4139, %v4138
        %v4161 = vpack.c.b16 %v4141, %v4140
        %v4162 = vpack.c.b16 %v4143, %v4142
        %v4163 = vpack.c.b16 %v4145, %v4144
        %v4164 = vpack.c.b16 %v4147, %v4146
        %v4165 = vpack.c.b16 %v4149, %v4148
        %v4198 = vunpack.c.l.b16 %v4070
        %v4199 = vunpack.c.l.b16 %v4071
        %v4200 = vunpack.c.l.b16 %v4072
        %v4201 = vunpack.c.l.b16 %v4073
        %v4202 = vunpack.c.l.b16 %v4074
        %v4203 = vunpack.c.l.b16 %v4075
        %v4204 = vunpack.c.l.b16 %v4076
        %v4205 = vunpack.c.l.b16 %v4077
        %v4206 = vunpack.c.l.b16 %v4078
        %v4207 = vunpack.c.l.b16 %v4079
        %v4208 = vunpack.c.l.b16 %v4080
        %v4209 = vunpack.c.l.b16 %v4081
        %v4210 = vunpack.c.l.b16 %v4082
        %v4211 = vunpack.c.l.b16 %v4083
        %v4212 = vunpack.c.l.b16 %v4084
        %v4213 = vunpack.c.l.b16 %v4085
        %v4214 = vpack.c.b16 %v4199, %v4198
        %v4215 = vpack.c.b16 %v4201, %v4200
        %v4216 = vpack.c.b16 %v4203, %v4202
        %v4217 = vpack.c.b16 %v4205, %v4204
        %v4218 = vpack.c.b16 %v4207, %v4206
        %v4219 = vpack.c.b16 %v4209, %v4208
        %v4220 = vpack.c.b16 %v4211, %v4210
        %v4221 = vpack.c.b16 %v4213, %v4212
        %4230 = vmatpush.bf16.msra.mxu0 %v4221
        %4231 = vmatpush.bf16.msra.mxu0 %v4220
        %4232 = vmatpush.bf16.msra.mxu0 %v4219
        %4233 = vmatpush.bf16.msra.mxu0 %v4218
        %4234 = vmatpush.bf16.msra.mxu0 %v4217
        %4235 = vmatpush.bf16.msra.mxu0 %v4216
        %4236 = vmatpush.bf16.msra.mxu0 %v4215
        %4237 = vmatpush.bf16.msra.mxu0 %v4214
        %4238 = vmatmul.bf16.gmra.mxu0 %v4150
        %v4239 = vpop.f32.mrf.mxu0
        %v4240 = vadd.f32 0.0, %v4239
        %v4241 = vpop.f32.mrf.mxu0
        %v4242 = vadd.f32 0.0, %v4241
        %4243 = vmatmul.bf16.gmra.mxu0 %v4151
        %v4244 = vpop.f32.mrf.mxu0
        %v4245 = vadd.f32 0.0, %v4244
        %v4246 = vpop.f32.mrf.mxu0
        %v4247 = vadd.f32 0.0, %v4246
        %4248 = vmatmul.bf16.gmra.mxu0 %v4152
        %v4249 = vpop.f32.mrf.mxu0
        %v4250 = vadd.f32 0.0, %v4249
        %v4251 = vpop.f32.mrf.mxu0
        %v4252 = vadd.f32 0.0, %v4251
        %4253 = vmatmul.bf16.gmra.mxu0 %v4153
        %v4254 = vpop.f32.mrf.mxu0
        %v4255 = vadd.f32 0.0, %v4254
        %v4256 = vpop.f32.mrf.mxu0
        %v4257 = vadd.f32 0.0, %v4256
        %4258 = vmatmul.bf16.gmra.mxu0 %v4154
        %v4259 = vpop.f32.mrf.mxu0
        %v4260 = vadd.f32 0.0, %v4259
        %v4261 = vpop.f32.mrf.mxu0
        %v4262 = vadd.f32 0.0, %v4261
        %4263 = vmatmul.bf16.gmra.mxu0 %v4155
        %v4264 = vpop.f32.mrf.mxu0
        %v4265 = vadd.f32 0.0, %v4264
        %v4266 = vpop.f32.mrf.mxu0
        %v4267 = vadd.f32 0.0, %v4266
        %4268 = vmatmul.bf16.gmra.mxu0 %v4156
        %v4269 = vpop.f32.mrf.mxu0
        %v4270 = vadd.f32 0.0, %v4269
        %v4271 = vpop.f32.mrf.mxu0
        %v4272 = vadd.f32 0.0, %v4271
        %4273 = vmatmul.bf16.gmra.mxu0 %v4157
        %v4274 = vpop.f32.mrf.mxu0
        %v4275 = vadd.f32 0.0, %v4274
        %v4276 = vpop.f32.mrf.mxu0
        %v4277 = vadd.f32 0.0, %v4276
        %4278 = vmatmul.bf16.gmra.mxu0 %v4158
        %v4279 = vpop.f32.mrf.mxu0
        %v4280 = vadd.f32 0.0, %v4279
        %v4281 = vpop.f32.mrf.mxu0
        %v4282 = vadd.f32 0.0, %v4281
        %4283 = vmatmul.bf16.gmra.mxu0 %v4159
        %v4284 = vpop.f32.mrf.mxu0
        %v4285 = vadd.f32 0.0, %v4284
        %v4286 = vpop.f32.mrf.mxu0
        %v4287 = vadd.f32 0.0, %v4286
        %4288 = vmatmul.bf16.gmra.mxu0 %v4160
        %v4289 = vpop.f32.mrf.mxu0
        %v4290 = vadd.f32 0.0, %v4289
        %v4291 = vpop.f32.mrf.mxu0
        %v4292 = vadd.f32 0.0, %v4291
        %4293 = vmatmul.bf16.gmra.mxu0 %v4161
        %v4294 = vpop.f32.mrf.mxu0
        %v4295 = vadd.f32 0.0, %v4294
        %v4296 = vpop.f32.mrf.mxu0
        %v4297 = vadd.f32 0.0, %v4296
        %4298 = vmatmul.bf16.gmra.mxu0 %v4162
        %v4299 = vpop.f32.mrf.mxu0
        %v4300 = vadd.f32 0.0, %v4299
        %v4301 = vpop.f32.mrf.mxu0
        %v4302 = vadd.f32 0.0, %v4301
        %4303 = vmatmul.bf16.gmra.mxu0 %v4163
        %v4304 = vpop.f32.mrf.mxu0
        %v4305 = vadd.f32 0.0, %v4304
        %v4306 = vpop.f32.mrf.mxu0
        %v4307 = vadd.f32 0.0, %v4306
        %4308 = vmatmul.bf16.gmra.mxu0 %v4164
        %v4309 = vpop.f32.mrf.mxu0
        %v4310 = vadd.f32 0.0, %v4309
        %v4311 = vpop.f32.mrf.mxu0
        %v4312 = vadd.f32 0.0, %v4311
        %4313 = vmatmul.bf16.gmra.mxu0 %v4165
        %v4314 = vpop.f32.mrf.mxu0
        %v4315 = vadd.f32 0.0, %v4314
        %v4316 = vpop.f32.mrf.mxu0
        %v4317 = vadd.f32 0.0, %v4316
        %4318 = vdwg.mxu0
        %v4351 = vunpack.c.l.b16 %v2916
        %v4352 = vunpack.c.l.b16 %v2917
        %v4353 = vunpack.c.l.b16 %v2918
        %v4354 = vunpack.c.l.b16 %v2919
        %v4355 = vunpack.c.l.b16 %v2920
        %v4356 = vunpack.c.l.b16 %v2921
        %v4357 = vunpack.c.l.b16 %v2922
        %v4358 = vunpack.c.l.b16 %v2923
        %v4359 = vunpack.c.l.b16 %v2924
        %v4360 = vunpack.c.l.b16 %v2925
        %v4361 = vunpack.c.l.b16 %v2926
        %v4362 = vunpack.c.l.b16 %v2927
        %v4363 = vunpack.c.l.b16 %v2928
        %v4364 = vunpack.c.l.b16 %v2929
        %v4365 = vunpack.c.l.b16 %v2930
        %v4366 = vunpack.c.l.b16 %v2931
        %v4367 = vunpack.c.l.b16 %v2932
        %v4368 = vunpack.c.l.b16 %v2933
        %v4369 = vunpack.c.l.b16 %v2934
        %v4370 = vunpack.c.l.b16 %v2935
        %v4371 = vunpack.c.l.b16 %v2936
        %v4372 = vunpack.c.l.b16 %v2937
        %v4373 = vunpack.c.l.b16 %v2938
        %v4374 = vunpack.c.l.b16 %v2939
        %v4375 = vunpack.c.l.b16 %v2940
        %v4376 = vunpack.c.l.b16 %v2941
        %v4377 = vunpack.c.l.b16 %v2942
        %v4378 = vunpack.c.l.b16 %v2943
        %v4379 = vunpack.c.l.b16 %v2944
        %v4380 = vunpack.c.l.b16 %v2945
        %v4381 = vunpack.c.l.b16 %v2946
        %v4382 = vunpack.c.l.b16 %v2947
        %v4383 = vpack.c.b16 %v4352, %v4351
        %v4384 = vpack.c.b16 %v4354, %v4353
        %v4385 = vpack.c.b16 %v4356, %v4355
        %v4386 = vpack.c.b16 %v4358, %v4357
        %v4387 = vpack.c.b16 %v4360, %v4359
        %v4388 = vpack.c.b16 %v4362, %v4361
        %v4389 = vpack.c.b16 %v4364, %v4363
        %v4390 = vpack.c.b16 %v4366, %v4365
        %v4391 = vpack.c.b16 %v4368, %v4367
        %v4392 = vpack.c.b16 %v4370, %v4369
        %v4393 = vpack.c.b16 %v4372, %v4371
        %v4394 = vpack.c.b16 %v4374, %v4373
        %v4395 = vpack.c.b16 %v4376, %v4375
        %v4396 = vpack.c.b16 %v4378, %v4377
        %v4397 = vpack.c.b16 %v4380, %v4379
        %v4398 = vpack.c.b16 %v4382, %v4381
        %v4431 = vunpack.c.l.b16 %v2948
        %v4432 = vunpack.c.l.b16 %v2949
        %v4433 = vunpack.c.l.b16 %v2950
        %v4434 = vunpack.c.l.b16 %v2951
        %v4435 = vunpack.c.l.b16 %v2952
        %v4436 = vunpack.c.l.b16 %v2953
        %v4437 = vunpack.c.l.b16 %v2954
        %v4438 = vunpack.c.l.b16 %v2955
        %v4439 = vunpack.c.l.b16 %v2956
        %v4440 = vunpack.c.l.b16 %v2957
        %v4441 = vunpack.c.l.b16 %v2958
        %v4442 = vunpack.c.l.b16 %v2959
        %v4443 = vunpack.c.l.b16 %v2960
        %v4444 = vunpack.c.l.b16 %v2961
        %v4445 = vunpack.c.l.b16 %v2962
        %v4446 = vunpack.c.l.b16 %v2963
        %v4447 = vpack.c.b16 %v4432, %v4431
        %v4448 = vpack.c.b16 %v4434, %v4433
        %v4449 = vpack.c.b16 %v4436, %v4435
        %v4450 = vpack.c.b16 %v4438, %v4437
        %v4451 = vpack.c.b16 %v4440, %v4439
        %v4452 = vpack.c.b16 %v4442, %v4441
        %v4453 = vpack.c.b16 %v4444, %v4443
        %v4454 = vpack.c.b16 %v4446, %v4445
        %4463 = vmatpush.bf16.msra.mxu0 %v4454
        %4464 = vmatpush.bf16.msra.mxu0 %v4453
        %4465 = vmatpush.bf16.msra.mxu0 %v4452
        %4466 = vmatpush.bf16.msra.mxu0 %v4451
        %4467 = vmatpush.bf16.msra.mxu0 %v4450
        %4468 = vmatpush.bf16.msra.mxu0 %v4449
        %4469 = vmatpush.bf16.msra.mxu0 %v4448
        %4470 = vmatpush.bf16.msra.mxu0 %v4447
        %4471 = vmatmul.bf16.gmra.mxu0 %v4383
        %v4472 = vpop.f32.mrf.mxu0
        %v4473 = vadd.f32 %v4240, %v4472
        %v4474 = vpop.f32.mrf.mxu0
        %v4475 = vadd.f32 %v4242, %v4474
        %4476 = vmatmul.bf16.gmra.mxu0 %v4384
        %v4477 = vpop.f32.mrf.mxu0
        %v4478 = vadd.f32 %v4245, %v4477
        %v4479 = vpop.f32.mrf.mxu0
        %v4480 = vadd.f32 %v4247, %v4479
        %4481 = vmatmul.bf16.gmra.mxu0 %v4385
        %v4482 = vpop.f32.mrf.mxu0
        %v4483 = vadd.f32 %v4250, %v4482
        %v4484 = vpop.f32.mrf.mxu0
        %v4485 = vadd.f32 %v4252, %v4484
        %4486 = vmatmul.bf16.gmra.mxu0 %v4386
        %v4487 = vpop.f32.mrf.mxu0
        %v4488 = vadd.f32 %v4255, %v4487
        %v4489 = vpop.f32.mrf.mxu0
        %v4490 = vadd.f32 %v4257, %v4489
        %4491 = vmatmul.bf16.gmra.mxu0 %v4387
        %v4492 = vpop.f32.mrf.mxu0
        %v4493 = vadd.f32 %v4260, %v4492
        %v4494 = vpop.f32.mrf.mxu0
        %v4495 = vadd.f32 %v4262, %v4494
        %4496 = vmatmul.bf16.gmra.mxu0 %v4388
        %v4497 = vpop.f32.mrf.mxu0
        %v4498 = vadd.f32 %v4265, %v4497
        %v4499 = vpop.f32.mrf.mxu0
        %v4500 = vadd.f32 %v4267, %v4499
        %4501 = vmatmul.bf16.gmra.mxu0 %v4389
        %v4502 = vpop.f32.mrf.mxu0
        %v4503 = vadd.f32 %v4270, %v4502
        %v4504 = vpop.f32.mrf.mxu0
        %v4505 = vadd.f32 %v4272, %v4504
        %4506 = vmatmul.bf16.gmra.mxu0 %v4390
        %v4507 = vpop.f32.mrf.mxu0
        %v4508 = vadd.f32 %v4275, %v4507
        %v4509 = vpop.f32.mrf.mxu0
        %v4510 = vadd.f32 %v4277, %v4509
        %4511 = vmatmul.bf16.gmra.mxu0 %v4391
        %v4512 = vpop.f32.mrf.mxu0
        %v4513 = vadd.f32 %v4280, %v4512
        %v4514 = vpop.f32.mrf.mxu0
        %v4515 = vadd.f32 %v4282, %v4514
        %4516 = vmatmul.bf16.gmra.mxu0 %v4392
        %v4517 = vpop.f32.mrf.mxu0
        %v4518 = vadd.f32 %v4285, %v4517
        %v4519 = vpop.f32.mrf.mxu0
        %v4520 = vadd.f32 %v4287, %v4519
        %4521 = vmatmul.bf16.gmra.mxu0 %v4393
        %v4522 = vpop.f32.mrf.mxu0
        %v4523 = vadd.f32 %v4290, %v4522
        %v4524 = vpop.f32.mrf.mxu0
        %v4525 = vadd.f32 %v4292, %v4524
        %4526 = vmatmul.bf16.gmra.mxu0 %v4394
        %v4527 = vpop.f32.mrf.mxu0
        %v4528 = vadd.f32 %v4295, %v4527
        %v4529 = vpop.f32.mrf.mxu0
        %v4530 = vadd.f32 %v4297, %v4529
        %4531 = vmatmul.bf16.gmra.mxu0 %v4395
        %v4532 = vpop.f32.mrf.mxu0
        %v4533 = vadd.f32 %v4300, %v4532
        %v4534 = vpop.f32.mrf.mxu0
        %v4535 = vadd.f32 %v4302, %v4534
        %4536 = vmatmul.bf16.gmra.mxu0 %v4396
        %v4537 = vpop.f32.mrf.mxu0
        %v4538 = vadd.f32 %v4305, %v4537
        %v4539 = vpop.f32.mrf.mxu0
        %v4540 = vadd.f32 %v4307, %v4539
        %4541 = vmatmul.bf16.gmra.mxu0 %v4397
        %v4542 = vpop.f32.mrf.mxu0
        %v4543 = vadd.f32 %v4310, %v4542
        %v4544 = vpop.f32.mrf.mxu0
        %v4545 = vadd.f32 %v4312, %v4544
        %4546 = vmatmul.bf16.gmra.mxu0 %v4398
        %v4547 = vpop.f32.mrf.mxu0
        %v4548 = vadd.f32 %v4315, %v4547
        %v4549 = vpop.f32.mrf.mxu0
        %v4550 = vadd.f32 %v4317, %v4549
        %4551 = vdwg.mxu0
        %s4552 = scalar_lea.vmem %s1, 128
        %v4553 = vld [vmem:[%s4552] sm:$0xff]
        %v4554 = vld [vmem:[%s4552 + $0x8] sm:$0xff]
        %v4555 = vld [vmem:[%s4552 + $0x10] sm:$0xff]
        %v4556 = vld [vmem:[%s4552 + $0x18] sm:$0xff]
        %v4557 = vld [vmem:[%s4552 + $0x20] sm:$0xff]
        %v4558 = vld [vmem:[%s4552 + $0x28] sm:$0xff]
        %v4559 = vld [vmem:[%s4552 + $0x30] sm:$0xff]
        %v4560 = vld [vmem:[%s4552 + $0x38] sm:$0xff]
        %v4561 = vrot.slane %v1621, 4
        %v4562 = vrot.slane %v1626, 4
        %v4563 = vrot.slane %v1631, 4
        %v4564 = vrot.slane %v1636, 4
        %v4565 = vrot.slane %v1641, 4
        %v4566 = vrot.slane %v1646, 4
        %v4567 = vrot.slane %v1651, 4
        %v4568 = vrot.slane %v1656, 4
        %v4569 = vunpack.c.l.b16 %v1620
        %v4570 = vunpack.c.l.b16 %v1625
        %v4571 = vunpack.c.l.b16 %v1630
        %v4572 = vunpack.c.l.b16 %v1635
        %v4573 = vunpack.c.l.b16 %v1640
        %v4574 = vunpack.c.l.b16 %v1645
        %v4575 = vunpack.c.l.b16 %v1650
        %v4576 = vunpack.c.l.b16 %v1655
        %v4577 = vpack.c.b16 %v4570, %v4569
        %v4578 = vpack.c.b16 %v4572, %v4571
        %v4579 = vpack.c.b16 %v4574, %v4573
        %v4580 = vpack.c.b16 %v4576, %v4575
        %v4585 = vunpack.c.l.b16 %v4561
        %v4586 = vunpack.c.l.b16 %v4562
        %v4587 = vunpack.c.l.b16 %v4563
        %v4588 = vunpack.c.l.b16 %v4564
        %v4589 = vunpack.c.l.b16 %v4565
        %v4590 = vunpack.c.l.b16 %v4566
        %v4591 = vunpack.c.l.b16 %v4567
        %v4592 = vunpack.c.l.b16 %v4568
        %v4593 = vpack.c.b16 %v4586, %v4585
        %v4594 = vpack.c.b16 %v4588, %v4587
        %v4595 = vpack.c.b16 %v4590, %v4589
        %v4596 = vpack.c.b16 %v4592, %v4591
        %4601 = vmatpush.bf16.xpose.msra.mxu0 0
        %4602 = vmatpush.bf16.xpose.msra.mxu0 0
        %4603 = vmatpush.bf16.xpose.msra.mxu0 0
        %4604 = vmatpush.bf16.xpose.msra.mxu0 0
        %4605 = vmatpush.bf16.xpose.msra.mxu0 %v4596
        %4606 = vmatpush.bf16.xpose.msra.mxu0 %v4595
        %4607 = vmatpush.bf16.xpose.msra.mxu0 %v4594
        %4608 = vmatpush.bf16.xpose.msra.mxu0 %v4593
        %4609 = vmatmul.bf16.gmra.mxu0 %v4577
        %v4610 = vpop.f32.mrf.mxu0
        %v4611 = vadd.f32 %v4553, %v4610
        %v4612 = vpop.f32.mrf.mxu0
        %v4613 = vadd.f32 %v4554, %v4612
        %4614 = vmatmul.bf16.gmra.mxu0 %v4578
        %v4615 = vpop.f32.mrf.mxu0
        %v4616 = vadd.f32 %v4555, %v4615
        %v4617 = vpop.f32.mrf.mxu0
        %v4618 = vadd.f32 %v4556, %v4617
        %4619 = vmatmul.bf16.gmra.mxu0 %v4579
        %v4620 = vpop.f32.mrf.mxu0
        %v4621 = vadd.f32 %v4557, %v4620
        %v4622 = vpop.f32.mrf.mxu0
        %v4623 = vadd.f32 %v4558, %v4622
        %4624 = vmatmul.bf16.gmra.mxu0 %v4580
        %v4625 = vpop.f32.mrf.mxu0
        %v4626 = vadd.f32 %v4559, %v4625
        %v4627 = vpop.f32.mrf.mxu0
        %v4628 = vadd.f32 %v4560, %v4627
        %4629 = vdwg.mxu0
        %v4630 = vrot.slane %v1661, 4
        %v4631 = vrot.slane %v1666, 4
        %v4632 = vrot.slane %v1671, 4
        %v4633 = vrot.slane %v1676, 4
        %v4634 = vrot.slane %v1681, 4
        %v4635 = vrot.slane %v1686, 4
        %v4636 = vrot.slane %v1691, 4
        %v4637 = vrot.slane %v1696, 4
        %v4638 = vunpack.c.l.b16 %v1660
        %v4639 = vunpack.c.l.b16 %v1665
        %v4640 = vunpack.c.l.b16 %v1670
        %v4641 = vunpack.c.l.b16 %v1675
        %v4642 = vunpack.c.l.b16 %v1680
        %v4643 = vunpack.c.l.b16 %v1685
        %v4644 = vunpack.c.l.b16 %v1690
        %v4645 = vunpack.c.l.b16 %v1695
        %v4646 = vpack.c.b16 %v4639, %v4638
        %v4647 = vpack.c.b16 %v4641, %v4640
        %v4648 = vpack.c.b16 %v4643, %v4642
        %v4649 = vpack.c.b16 %v4645, %v4644
        %v4654 = vunpack.c.l.b16 %v4630
        %v4655 = vunpack.c.l.b16 %v4631
        %v4656 = vunpack.c.l.b16 %v4632
        %v4657 = vunpack.c.l.b16 %v4633
        %v4658 = vunpack.c.l.b16 %v4634
        %v4659 = vunpack.c.l.b16 %v4635
        %v4660 = vunpack.c.l.b16 %v4636
        %v4661 = vunpack.c.l.b16 %v4637
        %v4662 = vpack.c.b16 %v4655, %v4654
        %v4663 = vpack.c.b16 %v4657, %v4656
        %v4664 = vpack.c.b16 %v4659, %v4658
        %v4665 = vpack.c.b16 %v4661, %v4660
        %4670 = vmatpush.bf16.xpose.msra.mxu0 0
        %4671 = vmatpush.bf16.xpose.msra.mxu0 0
        %4672 = vmatpush.bf16.xpose.msra.mxu0 0
        %4673 = vmatpush.bf16.xpose.msra.mxu0 0
        %4674 = vmatpush.bf16.xpose.msra.mxu0 %v4665
        %4675 = vmatpush.bf16.xpose.msra.mxu0 %v4664
        %4676 = vmatpush.bf16.xpose.msra.mxu0 %v4663
        %4677 = vmatpush.bf16.xpose.msra.mxu0 %v4662
        %4678 = vmatmul.bf16.gmra.mxu0 %v4646
        %v4679 = vpop.f32.mrf.mxu0
        %v4680 = vadd.f32 %v4553, %v4679
        %v4681 = vpop.f32.mrf.mxu0
        %v4682 = vadd.f32 %v4554, %v4681
        %4683 = vmatmul.bf16.gmra.mxu0 %v4647
        %v4684 = vpop.f32.mrf.mxu0
        %v4685 = vadd.f32 %v4555, %v4684
        %v4686 = vpop.f32.mrf.mxu0
        %v4687 = vadd.f32 %v4556, %v4686
        %4688 = vmatmul.bf16.gmra.mxu0 %v4648
        %v4689 = vpop.f32.mrf.mxu0
        %v4690 = vadd.f32 %v4557, %v4689
        %v4691 = vpop.f32.mrf.mxu0
        %v4692 = vadd.f32 %v4558, %v4691
        %4693 = vmatmul.bf16.gmra.mxu0 %v4649
        %v4694 = vpop.f32.mrf.mxu0
        %v4695 = vadd.f32 %v4559, %v4694
        %v4696 = vpop.f32.mrf.mxu0
        %v4697 = vadd.f32 %v4560, %v4696
        %4698 = vdwg.mxu0
        %v4699 = vrot.slane %v1701, 4
        %v4700 = vrot.slane %v1706, 4
        %v4701 = vrot.slane %v1711, 4
        %v4702 = vrot.slane %v1716, 4
        %v4703 = vrot.slane %v1721, 4
        %v4704 = vrot.slane %v1726, 4
        %v4705 = vrot.slane %v1731, 4
        %v4706 = vrot.slane %v1736, 4
        %v4707 = vunpack.c.l.b16 %v1700
        %v4708 = vunpack.c.l.b16 %v1705
        %v4709 = vunpack.c.l.b16 %v1710
        %v4710 = vunpack.c.l.b16 %v1715
        %v4711 = vunpack.c.l.b16 %v1720
        %v4712 = vunpack.c.l.b16 %v1725
        %v4713 = vunpack.c.l.b16 %v1730
        %v4714 = vunpack.c.l.b16 %v1735
        %v4715 = vpack.c.b16 %v4708, %v4707
        %v4716 = vpack.c.b16 %v4710, %v4709
        %v4717 = vpack.c.b16 %v4712, %v4711
        %v4718 = vpack.c.b16 %v4714, %v4713
        %v4723 = vunpack.c.l.b16 %v4699
        %v4724 = vunpack.c.l.b16 %v4700
        %v4725 = vunpack.c.l.b16 %v4701
        %v4726 = vunpack.c.l.b16 %v4702
        %v4727 = vunpack.c.l.b16 %v4703
        %v4728 = vunpack.c.l.b16 %v4704
        %v4729 = vunpack.c.l.b16 %v4705
        %v4730 = vunpack.c.l.b16 %v4706
        %v4731 = vpack.c.b16 %v4724, %v4723
        %v4732 = vpack.c.b16 %v4726, %v4725
        %v4733 = vpack.c.b16 %v4728, %v4727
        %v4734 = vpack.c.b16 %v4730, %v4729
        %4739 = vmatpush.bf16.xpose.msra.mxu0 0
        %4740 = vmatpush.bf16.xpose.msra.mxu0 0
        %4741 = vmatpush.bf16.xpose.msra.mxu0 0
        %4742 = vmatpush.bf16.xpose.msra.mxu0 0
        %4743 = vmatpush.bf16.xpose.msra.mxu0 %v4734
        %4744 = vmatpush.bf16.xpose.msra.mxu0 %v4733
        %4745 = vmatpush.bf16.xpose.msra.mxu0 %v4732
        %4746 = vmatpush.bf16.xpose.msra.mxu0 %v4731
        %4747 = vmatmul.bf16.gmra.mxu0 %v4715
        %v4748 = vpop.f32.mrf.mxu0
        %v4749 = vadd.f32 %v4553, %v4748
        %v4750 = vpop.f32.mrf.mxu0
        %v4751 = vadd.f32 %v4554, %v4750
        %4752 = vmatmul.bf16.gmra.mxu0 %v4716
        %v4753 = vpop.f32.mrf.mxu0
        %v4754 = vadd.f32 %v4555, %v4753
        %v4755 = vpop.f32.mrf.mxu0
        %v4756 = vadd.f32 %v4556, %v4755
        %4757 = vmatmul.bf16.gmra.mxu0 %v4717
        %v4758 = vpop.f32.mrf.mxu0
        %v4759 = vadd.f32 %v4557, %v4758
        %v4760 = vpop.f32.mrf.mxu0
        %v4761 = vadd.f32 %v4558, %v4760
        %4762 = vmatmul.bf16.gmra.mxu0 %v4718
        %v4763 = vpop.f32.mrf.mxu0
        %v4764 = vadd.f32 %v4559, %v4763
        %v4765 = vpop.f32.mrf.mxu0
        %v4766 = vadd.f32 %v4560, %v4765
        %4767 = vdwg.mxu0
        %v4768 = vrot.slane %v1741, 4
        %v4769 = vrot.slane %v1746, 4
        %v4770 = vrot.slane %v1751, 4
        %v4771 = vrot.slane %v1756, 4
        %v4772 = vrot.slane %v1761, 4
        %v4773 = vrot.slane %v1766, 4
        %v4774 = vrot.slane %v1771, 4
        %v4775 = vrot.slane %v1776, 4
        %v4776 = vunpack.c.l.b16 %v1740
        %v4777 = vunpack.c.l.b16 %v1745
        %v4778 = vunpack.c.l.b16 %v1750
        %v4779 = vunpack.c.l.b16 %v1755
        %v4780 = vunpack.c.l.b16 %v1760
        %v4781 = vunpack.c.l.b16 %v1765
        %v4782 = vunpack.c.l.b16 %v1770
        %v4783 = vunpack.c.l.b16 %v1775
        %v4784 = vpack.c.b16 %v4777, %v4776
        %v4785 = vpack.c.b16 %v4779, %v4778
        %v4786 = vpack.c.b16 %v4781, %v4780
        %v4787 = vpack.c.b16 %v4783, %v4782
        %v4792 = vunpack.c.l.b16 %v4768
        %v4793 = vunpack.c.l.b16 %v4769
        %v4794 = vunpack.c.l.b16 %v4770
        %v4795 = vunpack.c.l.b16 %v4771
        %v4796 = vunpack.c.l.b16 %v4772
        %v4797 = vunpack.c.l.b16 %v4773
        %v4798 = vunpack.c.l.b16 %v4774
        %v4799 = vunpack.c.l.b16 %v4775
        %v4800 = vpack.c.b16 %v4793, %v4792
        %v4801 = vpack.c.b16 %v4795, %v4794
        %v4802 = vpack.c.b16 %v4797, %v4796
        %v4803 = vpack.c.b16 %v4799, %v4798
        %4808 = vmatpush.bf16.xpose.msra.mxu0 0
        %4809 = vmatpush.bf16.xpose.msra.mxu0 0
        %4810 = vmatpush.bf16.xpose.msra.mxu0 0
        %4811 = vmatpush.bf16.xpose.msra.mxu0 0
        %4812 = vmatpush.bf16.xpose.msra.mxu0 %v4803
        %4813 = vmatpush.bf16.xpose.msra.mxu0 %v4802
        %4814 = vmatpush.bf16.xpose.msra.mxu0 %v4801
        %4815 = vmatpush.bf16.xpose.msra.mxu0 %v4800
        %4816 = vmatmul.bf16.gmra.mxu0 %v4784
        %v4817 = vpop.f32.mrf.mxu0
        %v4818 = vadd.f32 %v4553, %v4817
        %v4819 = vpop.f32.mrf.mxu0
        %v4820 = vadd.f32 %v4554, %v4819
        %4821 = vmatmul.bf16.gmra.mxu0 %v4785
        %v4822 = vpop.f32.mrf.mxu0
        %v4823 = vadd.f32 %v4555, %v4822
        %v4824 = vpop.f32.mrf.mxu0
        %v4825 = vadd.f32 %v4556, %v4824
        %4826 = vmatmul.bf16.gmra.mxu0 %v4786
        %v4827 = vpop.f32.mrf.mxu0
        %v4828 = vadd.f32 %v4557, %v4827
        %v4829 = vpop.f32.mrf.mxu0
        %v4830 = vadd.f32 %v4558, %v4829
        %4831 = vmatmul.bf16.gmra.mxu0 %v4787
        %v4832 = vpop.f32.mrf.mxu0
        %v4833 = vadd.f32 %v4559, %v4832
        %v4834 = vpop.f32.mrf.mxu0
        %v4835 = vadd.f32 %v4560, %v4834
        %4836 = vdwg.mxu0
        %v4837 = vadd.f32 %v4611, %v1779
        %v4838 = vadd.f32 %v4613, %v1780
        %v4839 = vadd.f32 %v4616, %v1781
        %v4840 = vadd.f32 %v4618, %v1782
        %v4841 = vadd.f32 %v4621, %v1783
        %v4842 = vadd.f32 %v4623, %v1784
        %v4843 = vadd.f32 %v4626, %v1785
        %v4844 = vadd.f32 %v4628, %v1786
        %v4845 = vadd.f32 %v4680, %v1787
        %v4846 = vadd.f32 %v4682, %v1788
        %v4847 = vadd.f32 %v4685, %v1789
        %v4848 = vadd.f32 %v4687, %v1790
        %v4849 = vadd.f32 %v4690, %v1791
        %v4850 = vadd.f32 %v4692, %v1792
        %v4851 = vadd.f32 %v4695, %v1793
        %v4852 = vadd.f32 %v4697, %v1794
        %v4853 = vadd.f32 %v4749, %v1795
        %v4854 = vadd.f32 %v4751, %v1796
        %v4855 = vadd.f32 %v4754, %v1797
        %v4856 = vadd.f32 %v4756, %v1798
        %v4857 = vadd.f32 %v4759, %v1799
        %v4858 = vadd.f32 %v4761, %v1800
        %v4859 = vadd.f32 %v4764, %v1801
        %v4860 = vadd.f32 %v4766, %v1802
        %v4861 = vadd.f32 %v4818, %v1803
        %v4862 = vadd.f32 %v4820, %v1804
        %v4863 = vadd.f32 %v4823, %v1805
        %v4864 = vadd.f32 %v4825, %v1806
        %v4865 = vadd.f32 %v4828, %v1807
        %v4866 = vadd.f32 %v4830, %v1808
        %v4867 = vadd.f32 %v4833, %v1809
        %v4868 = vadd.f32 %v4835, %v1810
        %v4869 = vsel %vm2191, %v4837, -inf
        %4870 = vmax.xlane.f32.xlu0 %v4869
        %v4871 = vpop.xlane.xlu0 %4870
        %v4872 = vsel %vm2191, %v4838, -inf
        %4873 = vmax.xlane.f32.xlu0 %v4872
        %v4874 = vpop.xlane.xlu0 %4873
        %v4875 = vsel %vm2191, %v4839, -inf
        %4876 = vmax.xlane.f32.xlu0 %v4875
        %v4877 = vpop.xlane.xlu0 %4876
        %v4878 = vsel %vm2191, %v4840, -inf
        %4879 = vmax.xlane.f32.xlu0 %v4878
        %v4880 = vpop.xlane.xlu0 %4879
        %v4881 = vsel %vm2191, %v4841, -inf
        %4882 = vmax.xlane.f32.xlu0 %v4881
        %v4883 = vpop.xlane.xlu0 %4882
        %v4884 = vsel %vm2191, %v4842, -inf
        %4885 = vmax.xlane.f32.xlu0 %v4884
        %v4886 = vpop.xlane.xlu0 %4885
        %v4887 = vsel %vm2191, %v4843, -inf
        %4888 = vmax.xlane.f32.xlu0 %v4887
        %v4889 = vpop.xlane.xlu0 %4888
        %v4890 = vsel %vm2191, %v4844, -inf
        %4891 = vmax.xlane.f32.xlu0 %v4890
        %v4892 = vpop.xlane.xlu0 %4891
        %v4893 = vsel %vm2191, %v4845, -inf
        %4894 = vmax.xlane.f32.xlu0 %v4893
        %v4895 = vpop.xlane.xlu0 %4894
        %v4896 = vsel %vm2191, %v4846, -inf
        %4897 = vmax.xlane.f32.xlu0 %v4896
        %v4898 = vpop.xlane.xlu0 %4897
        %v4899 = vsel %vm2191, %v4847, -inf
        %4900 = vmax.xlane.f32.xlu0 %v4899
        %v4901 = vpop.xlane.xlu0 %4900
        %v4902 = vsel %vm2191, %v4848, -inf
        %4903 = vmax.xlane.f32.xlu0 %v4902
        %v4904 = vpop.xlane.xlu0 %4903
        %v4905 = vsel %vm2191, %v4849, -inf
        %4906 = vmax.xlane.f32.xlu0 %v4905
        %v4907 = vpop.xlane.xlu0 %4906
        %v4908 = vsel %vm2191, %v4850, -inf
        %4909 = vmax.xlane.f32.xlu0 %v4908
        %v4910 = vpop.xlane.xlu0 %4909
        %v4911 = vsel %vm2191, %v4851, -inf
        %4912 = vmax.xlane.f32.xlu0 %v4911
        %v4913 = vpop.xlane.xlu0 %4912
        %v4914 = vsel %vm2191, %v4852, -inf
        %4915 = vmax.xlane.f32.xlu0 %v4914
        %v4916 = vpop.xlane.xlu0 %4915
        %v4917 = vsel %vm2191, %v4853, -inf
        %4918 = vmax.xlane.f32.xlu0 %v4917
        %v4919 = vpop.xlane.xlu0 %4918
        %v4920 = vsel %vm2191, %v4854, -inf
        %4921 = vmax.xlane.f32.xlu0 %v4920
        %v4922 = vpop.xlane.xlu0 %4921
        %v4923 = vsel %vm2191, %v4855, -inf
        %4924 = vmax.xlane.f32.xlu0 %v4923
        %v4925 = vpop.xlane.xlu0 %4924
        %v4926 = vsel %vm2191, %v4856, -inf
        %4927 = vmax.xlane.f32.xlu0 %v4926
        %v4928 = vpop.xlane.xlu0 %4927
        %v4929 = vsel %vm2191, %v4857, -inf
        %4930 = vmax.xlane.f32.xlu0 %v4929
        %v4931 = vpop.xlane.xlu0 %4930
        %v4932 = vsel %vm2191, %v4858, -inf
        %4933 = vmax.xlane.f32.xlu0 %v4932
        %v4934 = vpop.xlane.xlu0 %4933
        %v4935 = vsel %vm2191, %v4859, -inf
        %4936 = vmax.xlane.f32.xlu0 %v4935
        %v4937 = vpop.xlane.xlu0 %4936
        %v4938 = vsel %vm2191, %v4860, -inf
        %4939 = vmax.xlane.f32.xlu0 %v4938
        %v4940 = vpop.xlane.xlu0 %4939
        %v4941 = vsel %vm2191, %v4861, -inf
        %4942 = vmax.xlane.f32.xlu0 %v4941
        %v4943 = vpop.xlane.xlu0 %4942
        %v4944 = vsel %vm2191, %v4862, -inf
        %4945 = vmax.xlane.f32.xlu0 %v4944
        %v4946 = vpop.xlane.xlu0 %4945
        %v4947 = vsel %vm2191, %v4863, -inf
        %4948 = vmax.xlane.f32.xlu0 %v4947
        %v4949 = vpop.xlane.xlu0 %4948
        %v4950 = vsel %vm2191, %v4864, -inf
        %4951 = vmax.xlane.f32.xlu0 %v4950
        %v4952 = vpop.xlane.xlu0 %4951
        %v4953 = vsel %vm2191, %v4865, -inf
        %4954 = vmax.xlane.f32.xlu0 %v4953
        %v4955 = vpop.xlane.xlu0 %4954
        %v4956 = vsel %vm2191, %v4866, -inf
        %4957 = vmax.xlane.f32.xlu0 %v4956
        %v4958 = vpop.xlane.xlu0 %4957
        %v4959 = vsel %vm2191, %v4867, -inf
        %4960 = vmax.xlane.f32.xlu0 %v4959
        %v4961 = vpop.xlane.xlu0 %4960
        %v4962 = vsel %vm2191, %v4868, -inf
        %4963 = vmax.xlane.f32.xlu0 %v4962
        %v4964 = vpop.xlane.xlu0 %4963
        %v4965 = vsub.f32 %v4837, %v4871
        %v4966 = vsub.f32 %v4838, %v4874
        %v4967 = vsub.f32 %v4839, %v4877
        %v4968 = vsub.f32 %v4840, %v4880
        %v4969 = vsub.f32 %v4841, %v4883
        %v4970 = vsub.f32 %v4842, %v4886
        %v4971 = vsub.f32 %v4843, %v4889
        %v4972 = vsub.f32 %v4844, %v4892
        %v4973 = vsub.f32 %v4845, %v4895
        %v4974 = vsub.f32 %v4846, %v4898
        %v4975 = vsub.f32 %v4847, %v4901
        %v4976 = vsub.f32 %v4848, %v4904
        %v4977 = vsub.f32 %v4849, %v4907
        %v4978 = vsub.f32 %v4850, %v4910
        %v4979 = vsub.f32 %v4851, %v4913
        %v4980 = vsub.f32 %v4852, %v4916
        %v4981 = vsub.f32 %v4853, %v4919
        %v4982 = vsub.f32 %v4854, %v4922
        %v4983 = vsub.f32 %v4855, %v4925
        %v4984 = vsub.f32 %v4856, %v4928
        %v4985 = vsub.f32 %v4857, %v4931
        %v4986 = vsub.f32 %v4858, %v4934
        %v4987 = vsub.f32 %v4859, %v4937
        %v4988 = vsub.f32 %v4860, %v4940
        %v4989 = vsub.f32 %v4861, %v4943
        %v4990 = vsub.f32 %v4862, %v4946
        %v4991 = vsub.f32 %v4863, %v4949
        %v4992 = vsub.f32 %v4864, %v4952
        %v4993 = vsub.f32 %v4865, %v4955
        %v4994 = vsub.f32 %v4866, %v4958
        %v4995 = vsub.f32 %v4867, %v4961
        %v4996 = vsub.f32 %v4868, %v4964
        %v4997 = vmul.f32 %v4965, 1.442695
        %v4998 = vpow.pop %v4997
        %v4999 = vmul.f32 %v4966, 1.442695
        %v5000 = vpow.pop %v4999
        %v5001 = vmul.f32 %v4967, 1.442695
        %v5002 = vpow.pop %v5001
        %v5003 = vmul.f32 %v4968, 1.442695
        %v5004 = vpow.pop %v5003
        %v5005 = vmul.f32 %v4969, 1.442695
        %v5006 = vpow.pop %v5005
        %v5007 = vmul.f32 %v4970, 1.442695
        %v5008 = vpow.pop %v5007
        %v5009 = vmul.f32 %v4971, 1.442695
        %v5010 = vpow.pop %v5009
        %v5011 = vmul.f32 %v4972, 1.442695
        %v5012 = vpow.pop %v5011
        %v5013 = vmul.f32 %v4973, 1.442695
        %v5014 = vpow.pop %v5013
        %v5015 = vmul.f32 %v4974, 1.442695
        %v5016 = vpow.pop %v5015
        %v5017 = vmul.f32 %v4975, 1.442695
        %v5018 = vpow.pop %v5017
        %v5019 = vmul.f32 %v4976, 1.442695
        %v5020 = vpow.pop %v5019
        %v5021 = vmul.f32 %v4977, 1.442695
        %v5022 = vpow.pop %v5021
        %v5023 = vmul.f32 %v4978, 1.442695
        %v5024 = vpow.pop %v5023
        %v5025 = vmul.f32 %v4979, 1.442695
        %v5026 = vpow.pop %v5025
        %v5027 = vmul.f32 %v4980, 1.442695
        %v5028 = vpow.pop %v5027
        %v5029 = vmul.f32 %v4981, 1.442695
        %v5030 = vpow.pop %v5029
        %v5031 = vmul.f32 %v4982, 1.442695
        %v5032 = vpow.pop %v5031
        %v5033 = vmul.f32 %v4983, 1.442695
        %v5034 = vpow.pop %v5033
        %v5035 = vmul.f32 %v4984, 1.442695
        %v5036 = vpow.pop %v5035
        %v5037 = vmul.f32 %v4985, 1.442695
        %v5038 = vpow.pop %v5037
        %v5039 = vmul.f32 %v4986, 1.442695
        %v5040 = vpow.pop %v5039
        %v5041 = vmul.f32 %v4987, 1.442695
        %v5042 = vpow.pop %v5041
        %v5043 = vmul.f32 %v4988, 1.442695
        %v5044 = vpow.pop %v5043
        %v5045 = vmul.f32 %v4989, 1.442695
        %v5046 = vpow.pop %v5045
        %v5047 = vmul.f32 %v4990, 1.442695
        %v5048 = vpow.pop %v5047
        %v5049 = vmul.f32 %v4991, 1.442695
        %v5050 = vpow.pop %v5049
        %v5051 = vmul.f32 %v4992, 1.442695
        %v5052 = vpow.pop %v5051
        %v5053 = vmul.f32 %v4993, 1.442695
        %v5054 = vpow.pop %v5053
        %v5055 = vmul.f32 %v4994, 1.442695
        %v5056 = vpow.pop %v5055
        %v5057 = vmul.f32 %v4995, 1.442695
        %v5058 = vpow.pop %v5057
        %v5059 = vmul.f32 %v4996, 1.442695
        %v5060 = vpow.pop %v5059
        %v5061 = vsel %vm2191, %v4998, 0.0
        %5062 = vadd.xlane.f32.xlu0 %v5061
        %v5063 = vpop.xlane.xlu0 %5062
        %v5064 = vsel %vm2191, %v5000, 0.0
        %5065 = vadd.xlane.f32.xlu0 %v5064
        %v5066 = vpop.xlane.xlu0 %5065
        %v5067 = vsel %vm2191, %v5002, 0.0
        %5068 = vadd.xlane.f32.xlu0 %v5067
        %v5069 = vpop.xlane.xlu0 %5068
        %v5070 = vsel %vm2191, %v5004, 0.0
        %5071 = vadd.xlane.f32.xlu0 %v5070
        %v5072 = vpop.xlane.xlu0 %5071
        %v5073 = vsel %vm2191, %v5006, 0.0
        %5074 = vadd.xlane.f32.xlu0 %v5073
        %v5075 = vpop.xlane.xlu0 %5074
        %v5076 = vsel %vm2191, %v5008, 0.0
        %5077 = vadd.xlane.f32.xlu0 %v5076
        %v5078 = vpop.xlane.xlu0 %5077
        %v5079 = vsel %vm2191, %v5010, 0.0
        %5080 = vadd.xlane.f32.xlu0 %v5079
        %v5081 = vpop.xlane.xlu0 %5080
        %v5082 = vsel %vm2191, %v5012, 0.0
        %5083 = vadd.xlane.f32.xlu0 %v5082
        %v5084 = vpop.xlane.xlu0 %5083
        %v5085 = vsel %vm2191, %v5014, 0.0
        %5086 = vadd.xlane.f32.xlu0 %v5085
        %v5087 = vpop.xlane.xlu0 %5086
        %v5088 = vsel %vm2191, %v5016, 0.0
        %5089 = vadd.xlane.f32.xlu0 %v5088
        %v5090 = vpop.xlane.xlu0 %5089
        %v5091 = vsel %vm2191, %v5018, 0.0
        %5092 = vadd.xlane.f32.xlu0 %v5091
        %v5093 = vpop.xlane.xlu0 %5092
        %v5094 = vsel %vm2191, %v5020, 0.0
        %5095 = vadd.xlane.f32.xlu0 %v5094
        %v5096 = vpop.xlane.xlu0 %5095
        %v5097 = vsel %vm2191, %v5022, 0.0
        %5098 = vadd.xlane.f32.xlu0 %v5097
        %v5099 = vpop.xlane.xlu0 %5098
        %v5100 = vsel %vm2191, %v5024, 0.0
        %5101 = vadd.xlane.f32.xlu0 %v5100
        %v5102 = vpop.xlane.xlu0 %5101
        %v5103 = vsel %vm2191, %v5026, 0.0
        %5104 = vadd.xlane.f32.xlu0 %v5103
        %v5105 = vpop.xlane.xlu0 %5104
        %v5106 = vsel %vm2191, %v5028, 0.0
        %5107 = vadd.xlane.f32.xlu0 %v5106
        %v5108 = vpop.xlane.xlu0 %5107
        %v5109 = vsel %vm2191, %v5030, 0.0
        %5110 = vadd.xlane.f32.xlu0 %v5109
        %v5111 = vpop.xlane.xlu0 %5110
        %v5112 = vsel %vm2191, %v5032, 0.0
        %5113 = vadd.xlane.f32.xlu0 %v5112
        %v5114 = vpop.xlane.xlu0 %5113
        %v5115 = vsel %vm2191, %v5034, 0.0
        %5116 = vadd.xlane.f32.xlu0 %v5115
        %v5117 = vpop.xlane.xlu0 %5116
        %v5118 = vsel %vm2191, %v5036, 0.0
        %5119 = vadd.xlane.f32.xlu0 %v5118
        %v5120 = vpop.xlane.xlu0 %5119
        %v5121 = vsel %vm2191, %v5038, 0.0
        %5122 = vadd.xlane.f32.xlu0 %v5121
        %v5123 = vpop.xlane.xlu0 %5122
        %v5124 = vsel %vm2191, %v5040, 0.0
        %5125 = vadd.xlane.f32.xlu0 %v5124
        %v5126 = vpop.xlane.xlu0 %5125
        %v5127 = vsel %vm2191, %v5042, 0.0
        %5128 = vadd.xlane.f32.xlu0 %v5127
        %v5129 = vpop.xlane.xlu0 %5128
        %v5130 = vsel %vm2191, %v5044, 0.0
        %5131 = vadd.xlane.f32.xlu0 %v5130
        %v5132 = vpop.xlane.xlu0 %5131
        %v5133 = vsel %vm2191, %v5046, 0.0
        %5134 = vadd.xlane.f32.xlu0 %v5133
        %v5135 = vpop.xlane.xlu0 %5134
        %v5136 = vsel %vm2191, %v5048, 0.0
        %5137 = vadd.xlane.f32.xlu0 %v5136
        %v5138 = vpop.xlane.xlu0 %5137
        %v5139 = vsel %vm2191, %v5050, 0.0
        %5140 = vadd.xlane.f32.xlu0 %v5139
        %v5141 = vpop.xlane.xlu0 %5140
        %v5142 = vsel %vm2191, %v5052, 0.0
        %5143 = vadd.xlane.f32.xlu0 %v5142
        %v5144 = vpop.xlane.xlu0 %5143
        %v5145 = vsel %vm2191, %v5054, 0.0
        %5146 = vadd.xlane.f32.xlu0 %v5145
        %v5147 = vpop.xlane.xlu0 %5146
        %v5148 = vsel %vm2191, %v5056, 0.0
        %5149 = vadd.xlane.f32.xlu0 %v5148
        %v5150 = vpop.xlane.xlu0 %5149
        %v5151 = vsel %vm2191, %v5058, 0.0
        %5152 = vadd.xlane.f32.xlu0 %v5151
        %v5153 = vpop.xlane.xlu0 %5152
        %v5154 = vsel %vm2191, %v5060, 0.0
        %5155 = vadd.xlane.f32.xlu0 %v5154
        %v5156 = vpop.xlane.xlu0 %5155
        %v5157 = vrcp.pop %v5063
        %v5158 = vrcp.pop %v5066
        %v5159 = vrcp.pop %v5069
        %v5160 = vrcp.pop %v5072
        %v5161 = vrcp.pop %v5075
        %v5162 = vrcp.pop %v5078
        %v5163 = vrcp.pop %v5081
        %v5164 = vrcp.pop %v5084
        %v5165 = vrcp.pop %v5087
        %v5166 = vrcp.pop %v5090
        %v5167 = vrcp.pop %v5093
        %v5168 = vrcp.pop %v5096
        %v5169 = vrcp.pop %v5099
        %v5170 = vrcp.pop %v5102
        %v5171 = vrcp.pop %v5105
        %v5172 = vrcp.pop %v5108
        %v5173 = vrcp.pop %v5111
        %v5174 = vrcp.pop %v5114
        %v5175 = vrcp.pop %v5117
        %v5176 = vrcp.pop %v5120
        %v5177 = vrcp.pop %v5123
        %v5178 = vrcp.pop %v5126
        %v5179 = vrcp.pop %v5129
        %v5180 = vrcp.pop %v5132
        %v5181 = vrcp.pop %v5135
        %v5182 = vrcp.pop %v5138
        %v5183 = vrcp.pop %v5141
        %v5184 = vrcp.pop %v5144
        %v5185 = vrcp.pop %v5147
        %v5186 = vrcp.pop %v5150
        %v5187 = vrcp.pop %v5153
        %v5188 = vrcp.pop %v5156
        %v5189 = vmul.f32 %v4998, %v5157
        %v5190 = vmul.f32 %v5000, %v5158
        %v5191 = vmul.f32 %v5002, %v5159
        %v5192 = vmul.f32 %v5004, %v5160
        %v5193 = vmul.f32 %v5006, %v5161
        %v5194 = vmul.f32 %v5008, %v5162
        %v5195 = vmul.f32 %v5010, %v5163
        %v5196 = vmul.f32 %v5012, %v5164
        %v5197 = vmul.f32 %v5014, %v5165
        %v5198 = vmul.f32 %v5016, %v5166
        %v5199 = vmul.f32 %v5018, %v5167
        %v5200 = vmul.f32 %v5020, %v5168
        %v5201 = vmul.f32 %v5022, %v5169
        %v5202 = vmul.f32 %v5024, %v5170
        %v5203 = vmul.f32 %v5026, %v5171
        %v5204 = vmul.f32 %v5028, %v5172
        %v5205 = vmul.f32 %v5030, %v5173
        %v5206 = vmul.f32 %v5032, %v5174
        %v5207 = vmul.f32 %v5034, %v5175
        %v5208 = vmul.f32 %v5036, %v5176
        %v5209 = vmul.f32 %v5038, %v5177
        %v5210 = vmul.f32 %v5040, %v5178
        %v5211 = vmul.f32 %v5042, %v5179
        %v5212 = vmul.f32 %v5044, %v5180
        %v5213 = vmul.f32 %v5046, %v5181
        %v5214 = vmul.f32 %v5048, %v5182
        %v5215 = vmul.f32 %v5050, %v5183
        %v5216 = vmul.f32 %v5052, %v5184
        %v5217 = vmul.f32 %v5054, %v5185
        %v5218 = vmul.f32 %v5056, %v5186
        %v5219 = vmul.f32 %v5058, %v5187
        %v5220 = vmul.f32 %v5060, %v5188
        %v5221 = vpack.c.bf16 %v5189, %v5189
        %v5222 = vpack.c.bf16 %v5190, %v5190
        %v5223 = vpack.c.bf16 %v5191, %v5191
        %v5224 = vpack.c.bf16 %v5192, %v5192
        %v5225 = vpack.c.bf16 %v5193, %v5193
        %v5226 = vpack.c.bf16 %v5194, %v5194
        %v5227 = vpack.c.bf16 %v5195, %v5195
        %v5228 = vpack.c.bf16 %v5196, %v5196
        %v5229 = vpack.c.bf16 %v5197, %v5197
        %v5230 = vpack.c.bf16 %v5198, %v5198
        %v5231 = vpack.c.bf16 %v5199, %v5199
        %v5232 = vpack.c.bf16 %v5200, %v5200
        %v5233 = vpack.c.bf16 %v5201, %v5201
        %v5234 = vpack.c.bf16 %v5202, %v5202
        %v5235 = vpack.c.bf16 %v5203, %v5203
        %v5236 = vpack.c.bf16 %v5204, %v5204
        %v5237 = vpack.c.bf16 %v5205, %v5205
        %v5238 = vpack.c.bf16 %v5206, %v5206
        %v5239 = vpack.c.bf16 %v5207, %v5207
        %v5240 = vpack.c.bf16 %v5208, %v5208
        %v5241 = vpack.c.bf16 %v5209, %v5209
        %v5242 = vpack.c.bf16 %v5210, %v5210
        %v5243 = vpack.c.bf16 %v5211, %v5211
        %v5244 = vpack.c.bf16 %v5212, %v5212
        %v5245 = vpack.c.bf16 %v5213, %v5213
        %v5246 = vpack.c.bf16 %v5214, %v5214
        %v5247 = vpack.c.bf16 %v5215, %v5215
        %v5248 = vpack.c.bf16 %v5216, %v5216
        %v5249 = vpack.c.bf16 %v5217, %v5217
        %v5250 = vpack.c.bf16 %v5218, %v5218
        %v5251 = vpack.c.bf16 %v5219, %v5219
        %v5252 = vpack.c.bf16 %v5220, %v5220
        %v5261 = vunpack.c.l.b16 %v5221
        %v5262 = vunpack.c.l.b16 %v5222
        %v5263 = vunpack.c.l.b16 %v5223
        %v5264 = vunpack.c.l.b16 %v5224
        %v5265 = vunpack.c.l.b16 %v5225
        %v5266 = vunpack.c.l.b16 %v5226
        %v5267 = vunpack.c.l.b16 %v5227
        %v5268 = vunpack.c.l.b16 %v5228
        %v5269 = vpack.c.b16 %v5262, %v5261
        %v5270 = vpack.c.b16 %v5264, %v5263
        %v5271 = vpack.c.b16 %v5266, %v5265
        %v5272 = vpack.c.b16 %v5268, %v5267
        %v5281 = vunpack.c.l.b16 %v1623
        %v5282 = vunpack.c.l.b16 %v1628
        %v5283 = vunpack.c.l.b16 %v1633
        %v5284 = vunpack.c.l.b16 %v1638
        %v5285 = vunpack.c.l.b16 %v1643
        %v5286 = vunpack.c.l.b16 %v1648
        %v5287 = vunpack.c.l.b16 %v1653
        %v5288 = vunpack.c.l.b16 %v1658
        %v5289 = vpack.c.b16 %v5282, %v5281
        %v5290 = vpack.c.b16 %v5284, %v5283
        %v5291 = vpack.c.b16 %v5286, %v5285
        %v5292 = vpack.c.b16 %v5288, %v5287
        %v5298 = vsel %vm2191, %v5269, 0
        %v5301 = vsel %vm2191, %v5270, 0
        %v5304 = vsel %vm2191, %v5271, 0
        %v5307 = vsel %vm2191, %v5272, 0
        %5309 = vmatpush.bf16.msra.mxu0 0
        %5310 = vmatpush.bf16.msra.mxu0 0
        %5311 = vmatpush.bf16.msra.mxu0 0
        %5312 = vmatpush.bf16.msra.mxu0 0
        %5313 = vmatpush.bf16.msra.mxu0 %v5292
        %5314 = vmatpush.bf16.msra.mxu0 %v5291
        %5315 = vmatpush.bf16.msra.mxu0 %v5290
        %5316 = vmatpush.bf16.msra.mxu0 %v5289
        %5317 = vmatmul.bf16.gmra.mxu0 %v5298
        %v5318 = vpop.f32.mrf.mxu0
        %v5319 = vadd.f32 0.0, %v5318
        %v5320 = vpop.f32.mrf.mxu0
        %v5321 = vadd.f32 0.0, %v5320
        %5322 = vmatmul.bf16.gmra.mxu0 %v5301
        %v5323 = vpop.f32.mrf.mxu0
        %v5324 = vadd.f32 0.0, %v5323
        %v5325 = vpop.f32.mrf.mxu0
        %v5326 = vadd.f32 0.0, %v5325
        %5327 = vmatmul.bf16.gmra.mxu0 %v5304
        %v5328 = vpop.f32.mrf.mxu0
        %v5329 = vadd.f32 0.0, %v5328
        %v5330 = vpop.f32.mrf.mxu0
        %v5331 = vadd.f32 0.0, %v5330
        %5332 = vmatmul.bf16.gmra.mxu0 %v5307
        %v5333 = vpop.f32.mrf.mxu0
        %v5334 = vadd.f32 0.0, %v5333
        %v5335 = vpop.f32.mrf.mxu0
        %v5336 = vadd.f32 0.0, %v5335
        %5337 = vdwg.mxu0
        %v5346 = vunpack.c.l.b16 %v5229
        %v5347 = vunpack.c.l.b16 %v5230
        %v5348 = vunpack.c.l.b16 %v5231
        %v5349 = vunpack.c.l.b16 %v5232
        %v5350 = vunpack.c.l.b16 %v5233
        %v5351 = vunpack.c.l.b16 %v5234
        %v5352 = vunpack.c.l.b16 %v5235
        %v5353 = vunpack.c.l.b16 %v5236
        %v5354 = vpack.c.b16 %v5347, %v5346
        %v5355 = vpack.c.b16 %v5349, %v5348
        %v5356 = vpack.c.b16 %v5351, %v5350
        %v5357 = vpack.c.b16 %v5353, %v5352
        %v5366 = vunpack.c.l.b16 %v1663
        %v5367 = vunpack.c.l.b16 %v1668
        %v5368 = vunpack.c.l.b16 %v1673
        %v5369 = vunpack.c.l.b16 %v1678
        %v5370 = vunpack.c.l.b16 %v1683
        %v5371 = vunpack.c.l.b16 %v1688
        %v5372 = vunpack.c.l.b16 %v1693
        %v5373 = vunpack.c.l.b16 %v1698
        %v5374 = vpack.c.b16 %v5367, %v5366
        %v5375 = vpack.c.b16 %v5369, %v5368
        %v5376 = vpack.c.b16 %v5371, %v5370
        %v5377 = vpack.c.b16 %v5373, %v5372
        %v5383 = vsel %vm2191, %v5354, 0
        %v5386 = vsel %vm2191, %v5355, 0
        %v5389 = vsel %vm2191, %v5356, 0
        %v5392 = vsel %vm2191, %v5357, 0
        %5394 = vmatpush.bf16.msra.mxu0 0
        %5395 = vmatpush.bf16.msra.mxu0 0
        %5396 = vmatpush.bf16.msra.mxu0 0
        %5397 = vmatpush.bf16.msra.mxu0 0
        %5398 = vmatpush.bf16.msra.mxu0 %v5377
        %5399 = vmatpush.bf16.msra.mxu0 %v5376
        %5400 = vmatpush.bf16.msra.mxu0 %v5375
        %5401 = vmatpush.bf16.msra.mxu0 %v5374
        %5402 = vmatmul.bf16.gmra.mxu0 %v5383
        %v5403 = vpop.f32.mrf.mxu0
        %v5404 = vadd.f32 0.0, %v5403
        %v5405 = vpop.f32.mrf.mxu0
        %v5406 = vadd.f32 0.0, %v5405
        %5407 = vmatmul.bf16.gmra.mxu0 %v5386
        %v5408 = vpop.f32.mrf.mxu0
        %v5409 = vadd.f32 0.0, %v5408
        %v5410 = vpop.f32.mrf.mxu0
        %v5411 = vadd.f32 0.0, %v5410
        %5412 = vmatmul.bf16.gmra.mxu0 %v5389
        %v5413 = vpop.f32.mrf.mxu0
        %v5414 = vadd.f32 0.0, %v5413
        %v5415 = vpop.f32.mrf.mxu0
        %v5416 = vadd.f32 0.0, %v5415
        %5417 = vmatmul.bf16.gmra.mxu0 %v5392
        %v5418 = vpop.f32.mrf.mxu0
        %v5419 = vadd.f32 0.0, %v5418
        %v5420 = vpop.f32.mrf.mxu0
        %v5421 = vadd.f32 0.0, %v5420
        %5422 = vdwg.mxu0
        %v5431 = vunpack.c.l.b16 %v5237
        %v5432 = vunpack.c.l.b16 %v5238
        %v5433 = vunpack.c.l.b16 %v5239
        %v5434 = vunpack.c.l.b16 %v5240
        %v5435 = vunpack.c.l.b16 %v5241
        %v5436 = vunpack.c.l.b16 %v5242
        %v5437 = vunpack.c.l.b16 %v5243
        %v5438 = vunpack.c.l.b16 %v5244
        %v5439 = vpack.c.b16 %v5432, %v5431
        %v5440 = vpack.c.b16 %v5434, %v5433
        %v5441 = vpack.c.b16 %v5436, %v5435
        %v5442 = vpack.c.b16 %v5438, %v5437
        %v5451 = vunpack.c.l.b16 %v1703
        %v5452 = vunpack.c.l.b16 %v1708
        %v5453 = vunpack.c.l.b16 %v1713
        %v5454 = vunpack.c.l.b16 %v1718
        %v5455 = vunpack.c.l.b16 %v1723
        %v5456 = vunpack.c.l.b16 %v1728
        %v5457 = vunpack.c.l.b16 %v1733
        %v5458 = vunpack.c.l.b16 %v1738
        %v5459 = vpack.c.b16 %v5452, %v5451
        %v5460 = vpack.c.b16 %v5454, %v5453
        %v5461 = vpack.c.b16 %v5456, %v5455
        %v5462 = vpack.c.b16 %v5458, %v5457
        %v5468 = vsel %vm2191, %v5439, 0
        %v5471 = vsel %vm2191, %v5440, 0
        %v5474 = vsel %vm2191, %v5441, 0
        %v5477 = vsel %vm2191, %v5442, 0
        %5479 = vmatpush.bf16.msra.mxu0 0
        %5480 = vmatpush.bf16.msra.mxu0 0
        %5481 = vmatpush.bf16.msra.mxu0 0
        %5482 = vmatpush.bf16.msra.mxu0 0
        %5483 = vmatpush.bf16.msra.mxu0 %v5462
        %5484 = vmatpush.bf16.msra.mxu0 %v5461
        %5485 = vmatpush.bf16.msra.mxu0 %v5460
        %5486 = vmatpush.bf16.msra.mxu0 %v5459
        %5487 = vmatmul.bf16.gmra.mxu0 %v5468
        %v5488 = vpop.f32.mrf.mxu0
        %v5489 = vadd.f32 0.0, %v5488
        %v5490 = vpop.f32.mrf.mxu0
        %v5491 = vadd.f32 0.0, %v5490
        %5492 = vmatmul.bf16.gmra.mxu0 %v5471
        %v5493 = vpop.f32.mrf.mxu0
        %v5494 = vadd.f32 0.0, %v5493
        %v5495 = vpop.f32.mrf.mxu0
        %v5496 = vadd.f32 0.0, %v5495
        %5497 = vmatmul.bf16.gmra.mxu0 %v5474
        %v5498 = vpop.f32.mrf.mxu0
        %v5499 = vadd.f32 0.0, %v5498
        %v5500 = vpop.f32.mrf.mxu0
        %v5501 = vadd.f32 0.0, %v5500
        %5502 = vmatmul.bf16.gmra.mxu0 %v5477
        %v5503 = vpop.f32.mrf.mxu0
        %v5504 = vadd.f32 0.0, %v5503
        %v5505 = vpop.f32.mrf.mxu0
        %v5506 = vadd.f32 0.0, %v5505
        %5507 = vdwg.mxu0
        %v5516 = vunpack.c.l.b16 %v5245
        %v5517 = vunpack.c.l.b16 %v5246
        %v5518 = vunpack.c.l.b16 %v5247
        %v5519 = vunpack.c.l.b16 %v5248
        %v5520 = vunpack.c.l.b16 %v5249
        %v5521 = vunpack.c.l.b16 %v5250
        %v5522 = vunpack.c.l.b16 %v5251
        %v5523 = vunpack.c.l.b16 %v5252
        %v5524 = vpack.c.b16 %v5517, %v5516
        %v5525 = vpack.c.b16 %v5519, %v5518
        %v5526 = vpack.c.b16 %v5521, %v5520
        %v5527 = vpack.c.b16 %v5523, %v5522
        %v5536 = vunpack.c.l.b16 %v1743
        %v5537 = vunpack.c.l.b16 %v1748
        %v5538 = vunpack.c.l.b16 %v1753
        %v5539 = vunpack.c.l.b16 %v1758
        %v5540 = vunpack.c.l.b16 %v1763
        %v5541 = vunpack.c.l.b16 %v1768
        %v5542 = vunpack.c.l.b16 %v1773
        %v5543 = vunpack.c.l.b16 %v1778
        %v5544 = vpack.c.b16 %v5537, %v5536
        %v5545 = vpack.c.b16 %v5539, %v5538
        %v5546 = vpack.c.b16 %v5541, %v5540
        %v5547 = vpack.c.b16 %v5543, %v5542
        %v5553 = vsel %vm2191, %v5524, 0
        %v5556 = vsel %vm2191, %v5525, 0
        %v5559 = vsel %vm2191, %v5526, 0
        %v5562 = vsel %vm2191, %v5527, 0
        %5564 = vmatpush.bf16.msra.mxu0 0
        %5565 = vmatpush.bf16.msra.mxu0 0
        %5566 = vmatpush.bf16.msra.mxu0 0
        %5567 = vmatpush.bf16.msra.mxu0 0
        %5568 = vmatpush.bf16.msra.mxu0 %v5547
        %5569 = vmatpush.bf16.msra.mxu0 %v5546
        %5570 = vmatpush.bf16.msra.mxu0 %v5545
        %5571 = vmatpush.bf16.msra.mxu0 %v5544
        %5572 = vmatmul.bf16.gmra.mxu0 %v5553
        %v5573 = vpop.f32.mrf.mxu0
        %v5574 = vadd.f32 0.0, %v5573
        %v5575 = vpop.f32.mrf.mxu0
        %v5576 = vadd.f32 0.0, %v5575
        %5577 = vmatmul.bf16.gmra.mxu0 %v5556
        %v5578 = vpop.f32.mrf.mxu0
        %v5579 = vadd.f32 0.0, %v5578
        %v5580 = vpop.f32.mrf.mxu0
        %v5581 = vadd.f32 0.0, %v5580
        %5582 = vmatmul.bf16.gmra.mxu0 %v5559
        %v5583 = vpop.f32.mrf.mxu0
        %v5584 = vadd.f32 0.0, %v5583
        %v5585 = vpop.f32.mrf.mxu0
        %v5586 = vadd.f32 0.0, %v5585
        %5587 = vmatmul.bf16.gmra.mxu0 %v5562
        %v5588 = vpop.f32.mrf.mxu0
        %v5589 = vadd.f32 0.0, %v5588
        %v5590 = vpop.f32.mrf.mxu0
        %v5591 = vadd.f32 0.0, %v5590
        %5592 = vdwg.mxu0
        %v5593 = vpack.c.bf16 %v5319, %v5319
        %v5594 = vpack.c.bf16 %v5321, %v5321
        %v5595 = vpack.c.bf16 %v5324, %v5324
        %v5596 = vpack.c.bf16 %v5326, %v5326
        %v5597 = vpack.c.bf16 %v5329, %v5329
        %v5598 = vpack.c.bf16 %v5331, %v5331
        %v5599 = vpack.c.bf16 %v5334, %v5334
        %v5600 = vpack.c.bf16 %v5336, %v5336
        %v5601 = vpack.c.bf16 %v5404, %v5404
        %v5602 = vpack.c.bf16 %v5406, %v5406
        %v5603 = vpack.c.bf16 %v5409, %v5409
        %v5604 = vpack.c.bf16 %v5411, %v5411
        %v5605 = vpack.c.bf16 %v5414, %v5414
        %v5606 = vpack.c.bf16 %v5416, %v5416
        %v5607 = vpack.c.bf16 %v5419, %v5419
        %v5608 = vpack.c.bf16 %v5421, %v5421
        %v5609 = vpack.c.bf16 %v5489, %v5489
        %v5610 = vpack.c.bf16 %v5491, %v5491
        %v5611 = vpack.c.bf16 %v5494, %v5494
        %v5612 = vpack.c.bf16 %v5496, %v5496
        %v5613 = vpack.c.bf16 %v5499, %v5499
        %v5614 = vpack.c.bf16 %v5501, %v5501
        %v5615 = vpack.c.bf16 %v5504, %v5504
        %v5616 = vpack.c.bf16 %v5506, %v5506
        %v5617 = vpack.c.bf16 %v5574, %v5574
        %v5618 = vpack.c.bf16 %v5576, %v5576
        %v5619 = vpack.c.bf16 %v5579, %v5579
        %v5620 = vpack.c.bf16 %v5581, %v5581
        %v5621 = vpack.c.bf16 %v5584, %v5584
        %v5622 = vpack.c.bf16 %v5586, %v5586
        %v5623 = vpack.c.bf16 %v5589, %v5589
        %v5624 = vpack.c.bf16 %v5591, %v5591
        %s5625 = scalar_lea.vmem %s4, 128
        %v5626 = vld [vmem:[%s5625] sm:$0xf]
        %v5627 = vld [vmem:[%s5625 + $0x4] sm:$0xf]
        %v5628 = vld [vmem:[%s5625 + $0x8] sm:$0xf]
        %v5629 = vld [vmem:[%s5625 + $0xc] sm:$0xf]
        %v5630 = vld [vmem:[%s5625 + $0x10] sm:$0xf]
        %v5631 = vld [vmem:[%s5625 + $0x14] sm:$0xf]
        %v5632 = vld [vmem:[%s5625 + $0x18] sm:$0xf]
        %v5633 = vld [vmem:[%s5625 + $0x1c] sm:$0xf]
        %v5634 = vld [vmem:[%s5625 + $0x20] sm:$0xf]
        %v5635 = vld [vmem:[%s5625 + $0x24] sm:$0xf]
        %v5636 = vld [vmem:[%s5625 + $0x28] sm:$0xf]
        %v5637 = vld [vmem:[%s5625 + $0x2c] sm:$0xf]
        %v5638 = vld [vmem:[%s5625 + $0x30] sm:$0xf]
        %v5639 = vld [vmem:[%s5625 + $0x34] sm:$0xf]
        %v5640 = vld [vmem:[%s5625 + $0x38] sm:$0xf]
        %v5641 = vld [vmem:[%s5625 + $0x3c] sm:$0xf]
        %v5674 = vunpack.c.l.b16 %v5593
        %v5675 = vunpack.c.l.b16 %v5594
        %v5676 = vunpack.c.l.b16 %v5595
        %v5677 = vunpack.c.l.b16 %v5596
        %v5678 = vunpack.c.l.b16 %v5597
        %v5679 = vunpack.c.l.b16 %v5598
        %v5680 = vunpack.c.l.b16 %v5599
        %v5681 = vunpack.c.l.b16 %v5600
        %v5682 = vunpack.c.l.b16 %v5601
        %v5683 = vunpack.c.l.b16 %v5602
        %v5684 = vunpack.c.l.b16 %v5603
        %v5685 = vunpack.c.l.b16 %v5604
        %v5686 = vunpack.c.l.b16 %v5605
        %v5687 = vunpack.c.l.b16 %v5606
        %v5688 = vunpack.c.l.b16 %v5607
        %v5689 = vunpack.c.l.b16 %v5608
        %v5690 = vunpack.c.l.b16 %v5609
        %v5691 = vunpack.c.l.b16 %v5610
        %v5692 = vunpack.c.l.b16 %v5611
        %v5693 = vunpack.c.l.b16 %v5612
        %v5694 = vunpack.c.l.b16 %v5613
        %v5695 = vunpack.c.l.b16 %v5614
        %v5696 = vunpack.c.l.b16 %v5615
        %v5697 = vunpack.c.l.b16 %v5616
        %v5698 = vunpack.c.l.b16 %v5617
        %v5699 = vunpack.c.l.b16 %v5618
        %v5700 = vunpack.c.l.b16 %v5619
        %v5701 = vunpack.c.l.b16 %v5620
        %v5702 = vunpack.c.l.b16 %v5621
        %v5703 = vunpack.c.l.b16 %v5622
        %v5704 = vunpack.c.l.b16 %v5623
        %v5705 = vunpack.c.l.b16 %v5624
        %v5706 = vpack.c.b16 %v5675, %v5674
        %v5707 = vpack.c.b16 %v5677, %v5676
        %v5708 = vpack.c.b16 %v5679, %v5678
        %v5709 = vpack.c.b16 %v5681, %v5680
        %v5710 = vpack.c.b16 %v5683, %v5682
        %v5711 = vpack.c.b16 %v5685, %v5684
        %v5712 = vpack.c.b16 %v5687, %v5686
        %v5713 = vpack.c.b16 %v5689, %v5688
        %v5714 = vpack.c.b16 %v5691, %v5690
        %v5715 = vpack.c.b16 %v5693, %v5692
        %v5716 = vpack.c.b16 %v5695, %v5694
        %v5717 = vpack.c.b16 %v5697, %v5696
        %v5718 = vpack.c.b16 %v5699, %v5698
        %v5719 = vpack.c.b16 %v5701, %v5700
        %v5720 = vpack.c.b16 %v5703, %v5702
        %v5721 = vpack.c.b16 %v5705, %v5704
        %v5754 = vunpack.c.l.b16 %v5626
        %v5755 = vunpack.c.l.b16 %v5627
        %v5756 = vunpack.c.l.b16 %v5628
        %v5757 = vunpack.c.l.b16 %v5629
        %v5758 = vunpack.c.l.b16 %v5630
        %v5759 = vunpack.c.l.b16 %v5631
        %v5760 = vunpack.c.l.b16 %v5632
        %v5761 = vunpack.c.l.b16 %v5633
        %v5762 = vunpack.c.l.b16 %v5634
        %v5763 = vunpack.c.l.b16 %v5635
        %v5764 = vunpack.c.l.b16 %v5636
        %v5765 = vunpack.c.l.b16 %v5637
        %v5766 = vunpack.c.l.b16 %v5638
        %v5767 = vunpack.c.l.b16 %v5639
        %v5768 = vunpack.c.l.b16 %v5640
        %v5769 = vunpack.c.l.b16 %v5641
        %v5770 = vpack.c.b16 %v5755, %v5754
        %v5771 = vpack.c.b16 %v5757, %v5756
        %v5772 = vpack.c.b16 %v5759, %v5758
        %v5773 = vpack.c.b16 %v5761, %v5760
        %v5774 = vpack.c.b16 %v5763, %v5762
        %v5775 = vpack.c.b16 %v5765, %v5764
        %v5776 = vpack.c.b16 %v5767, %v5766
        %v5777 = vpack.c.b16 %v5769, %v5768
        %5786 = vmatpush.bf16.msra.mxu0 %v5777
        %5787 = vmatpush.bf16.msra.mxu0 %v5776
        %5788 = vmatpush.bf16.msra.mxu0 %v5775
        %5789 = vmatpush.bf16.msra.mxu0 %v5774
        %5790 = vmatpush.bf16.msra.mxu0 %v5773
        %5791 = vmatpush.bf16.msra.mxu0 %v5772
        %5792 = vmatpush.bf16.msra.mxu0 %v5771
        %5793 = vmatpush.bf16.msra.mxu0 %v5770
        %5794 = vmatmul.bf16.gmra.mxu0 %v5706
        %v5795 = vpop.f32.mrf.mxu0
        %v5796 = vadd.f32 0.0, %v5795
        %v5797 = vpop.f32.mrf.mxu0
        %v5798 = vadd.f32 0.0, %v5797
        %5799 = vmatmul.bf16.gmra.mxu0 %v5707
        %v5800 = vpop.f32.mrf.mxu0
        %v5801 = vadd.f32 0.0, %v5800
        %v5802 = vpop.f32.mrf.mxu0
        %v5803 = vadd.f32 0.0, %v5802
        %5804 = vmatmul.bf16.gmra.mxu0 %v5708
        %v5805 = vpop.f32.mrf.mxu0
        %v5806 = vadd.f32 0.0, %v5805
        %v5807 = vpop.f32.mrf.mxu0
        %v5808 = vadd.f32 0.0, %v5807
        %5809 = vmatmul.bf16.gmra.mxu0 %v5709
        %v5810 = vpop.f32.mrf.mxu0
        %v5811 = vadd.f32 0.0, %v5810
        %v5812 = vpop.f32.mrf.mxu0
        %v5813 = vadd.f32 0.0, %v5812
        %5814 = vmatmul.bf16.gmra.mxu0 %v5710
        %v5815 = vpop.f32.mrf.mxu0
        %v5816 = vadd.f32 0.0, %v5815
        %v5817 = vpop.f32.mrf.mxu0
        %v5818 = vadd.f32 0.0, %v5817
        %5819 = vmatmul.bf16.gmra.mxu0 %v5711
        %v5820 = vpop.f32.mrf.mxu0
        %v5821 = vadd.f32 0.0, %v5820
        %v5822 = vpop.f32.mrf.mxu0
        %v5823 = vadd.f32 0.0, %v5822
        %5824 = vmatmul.bf16.gmra.mxu0 %v5712
        %v5825 = vpop.f32.mrf.mxu0
        %v5826 = vadd.f32 0.0, %v5825
        %v5827 = vpop.f32.mrf.mxu0
        %v5828 = vadd.f32 0.0, %v5827
        %5829 = vmatmul.bf16.gmra.mxu0 %v5713
        %v5830 = vpop.f32.mrf.mxu0
        %v5831 = vadd.f32 0.0, %v5830
        %v5832 = vpop.f32.mrf.mxu0
        %v5833 = vadd.f32 0.0, %v5832
        %5834 = vmatmul.bf16.gmra.mxu0 %v5714
        %v5835 = vpop.f32.mrf.mxu0
        %v5836 = vadd.f32 0.0, %v5835
        %v5837 = vpop.f32.mrf.mxu0
        %v5838 = vadd.f32 0.0, %v5837
        %5839 = vmatmul.bf16.gmra.mxu0 %v5715
        %v5840 = vpop.f32.mrf.mxu0
        %v5841 = vadd.f32 0.0, %v5840
        %v5842 = vpop.f32.mrf.mxu0
        %v5843 = vadd.f32 0.0, %v5842
        %5844 = vmatmul.bf16.gmra.mxu0 %v5716
        %v5845 = vpop.f32.mrf.mxu0
        %v5846 = vadd.f32 0.0, %v5845
        %v5847 = vpop.f32.mrf.mxu0
        %v5848 = vadd.f32 0.0, %v5847
        %5849 = vmatmul.bf16.gmra.mxu0 %v5717
        %v5850 = vpop.f32.mrf.mxu0
        %v5851 = vadd.f32 0.0, %v5850
        %v5852 = vpop.f32.mrf.mxu0
        %v5853 = vadd.f32 0.0, %v5852
        %5854 = vmatmul.bf16.gmra.mxu0 %v5718
        %v5855 = vpop.f32.mrf.mxu0
        %v5856 = vadd.f32 0.0, %v5855
        %v5857 = vpop.f32.mrf.mxu0
        %v5858 = vadd.f32 0.0, %v5857
        %5859 = vmatmul.bf16.gmra.mxu0 %v5719
        %v5860 = vpop.f32.mrf.mxu0
        %v5861 = vadd.f32 0.0, %v5860
        %v5862 = vpop.f32.mrf.mxu0
        %v5863 = vadd.f32 0.0, %v5862
        %5864 = vmatmul.bf16.gmra.mxu0 %v5720
        %v5865 = vpop.f32.mrf.mxu0
        %v5866 = vadd.f32 0.0, %v5865
        %v5867 = vpop.f32.mrf.mxu0
        %v5868 = vadd.f32 0.0, %v5867
        %5869 = vmatmul.bf16.gmra.mxu0 %v5721
        %v5870 = vpop.f32.mrf.mxu0
        %v5871 = vadd.f32 0.0, %v5870
        %v5872 = vpop.f32.mrf.mxu0
        %v5873 = vadd.f32 0.0, %v5872
        %5874 = vdwg.mxu0
        %v5875 = vadd.f32 %v4473, %v5796
        %v5876 = vadd.f32 %v4475, %v5798
        %v5877 = vadd.f32 %v4478, %v5801
        %v5878 = vadd.f32 %v4480, %v5803
        %v5879 = vadd.f32 %v4483, %v5806
        %v5880 = vadd.f32 %v4485, %v5808
        %v5881 = vadd.f32 %v4488, %v5811
        %v5882 = vadd.f32 %v4490, %v5813
        %v5883 = vadd.f32 %v4493, %v5816
        %v5884 = vadd.f32 %v4495, %v5818
        %v5885 = vadd.f32 %v4498, %v5821
        %v5886 = vadd.f32 %v4500, %v5823
        %v5887 = vadd.f32 %v4503, %v5826
        %v5888 = vadd.f32 %v4505, %v5828
        %v5889 = vadd.f32 %v4508, %v5831
        %v5890 = vadd.f32 %v4510, %v5833
        %v5891 = vadd.f32 %v4513, %v5836
        %v5892 = vadd.f32 %v4515, %v5838
        %v5893 = vadd.f32 %v4518, %v5841
        %v5894 = vadd.f32 %v4520, %v5843
        %v5895 = vadd.f32 %v4523, %v5846
        %v5896 = vadd.f32 %v4525, %v5848
        %v5897 = vadd.f32 %v4528, %v5851
        %v5898 = vadd.f32 %v4530, %v5853
        %v5899 = vadd.f32 %v4533, %v5856
        %v5900 = vadd.f32 %v4535, %v5858
        %v5901 = vadd.f32 %v4538, %v5861
        %v5902 = vadd.f32 %v4540, %v5863
        %v5903 = vadd.f32 %v4543, %v5866
        %v5904 = vadd.f32 %v4545, %v5868
        %v5905 = vadd.f32 %v4548, %v5871
        %v5906 = vadd.f32 %v4550, %v5873
        %v5907 = vld [vmem:[%s359] sm:$0xff]
        %v5908 = vld [vmem:[%s359 + $0x8] sm:$0xff]
        %v5909 = vld [vmem:[%s359 + $0x10] sm:$0xff]
        %v5910 = vld [vmem:[%s359 + $0x18] sm:$0xff]
        %v5911 = vld [vmem:[%s359 + $0x20] sm:$0xff]
        %v5912 = vld [vmem:[%s359 + $0x28] sm:$0xff]
        %v5913 = vld [vmem:[%s359 + $0x30] sm:$0xff]
        %v5914 = vld [vmem:[%s359 + $0x38] sm:$0xff]
        %v5915 = vld [vmem:[%s359 + $0x40] sm:$0xff]
        %v5916 = vld [vmem:[%s359 + $0x48] sm:$0xff]
        %v5917 = vld [vmem:[%s359 + $0x50] sm:$0xff]
        %v5918 = vld [vmem:[%s359 + $0x58] sm:$0xff]
        %v5919 = vld [vmem:[%s359 + $0x60] sm:$0xff]
        %v5920 = vld [vmem:[%s359 + $0x68] sm:$0xff]
        %v5921 = vld [vmem:[%s359 + $0x70] sm:$0xff]
        %v5922 = vld [vmem:[%s359 + $0x78] sm:$0xff]
        %v5923 = vld [vmem:[%s359 + $0x80] sm:$0xff]
        %v5924 = vld [vmem:[%s359 + $0x88] sm:$0xff]
        %v5925 = vld [vmem:[%s359 + $0x90] sm:$0xff]
        %v5926 = vld [vmem:[%s359 + $0x98] sm:$0xff]
        %v5927 = vld [vmem:[%s359 + $0xa0] sm:$0xff]
        %v5928 = vld [vmem:[%s359 + $0xa8] sm:$0xff]
        %v5929 = vld [vmem:[%s359 + $0xb0] sm:$0xff]
        %v5930 = vld [vmem:[%s359 + $0xb8] sm:$0xff]
        %v5931 = vld [vmem:[%s359 + $0xc0] sm:$0xff]
        %v5932 = vld [vmem:[%s359 + $0xc8] sm:$0xff]
        %v5933 = vld [vmem:[%s359 + $0xd0] sm:$0xff]
        %v5934 = vld [vmem:[%s359 + $0xd8] sm:$0xff]
        %v5935 = vld [vmem:[%s359 + $0xe0] sm:$0xff]
        %v5936 = vld [vmem:[%s359 + $0xe8] sm:$0xff]
        %v5937 = vld [vmem:[%s359 + $0xf0] sm:$0xff]
        %v5938 = vld [vmem:[%s359 + $0xf8] sm:$0xff]
        %v5939 = vpack.c.bf16 %v5908, %v5907
        %v5940 = vpack.c.bf16 %v5910, %v5909
        %v5941 = vpack.c.bf16 %v5912, %v5911
        %v5942 = vpack.c.bf16 %v5914, %v5913
        %v5943 = vpack.c.bf16 %v5916, %v5915
        %v5944 = vpack.c.bf16 %v5918, %v5917
        %v5945 = vpack.c.bf16 %v5920, %v5919
        %v5946 = vpack.c.bf16 %v5922, %v5921
        %v5947 = vpack.c.bf16 %v5924, %v5923
        %v5948 = vpack.c.bf16 %v5926, %v5925
        %v5949 = vpack.c.bf16 %v5928, %v5927
        %v5950 = vpack.c.bf16 %v5930, %v5929
        %v5951 = vpack.c.bf16 %v5932, %v5931
        %v5952 = vpack.c.bf16 %v5934, %v5933
        %v5953 = vpack.c.bf16 %v5936, %v5935
        %v5954 = vpack.c.bf16 %v5938, %v5937
        %v5955 = vld [vmem:[%s8] sm:$0xf]
        %v5956 = vld [vmem:[%s8 + $0x4] sm:$0xf]
        %v5957 = vld [vmem:[%s8 + $0x8] sm:$0xf]
        %v5958 = vld [vmem:[%s8 + $0xc] sm:$0xf]
        %v5959 = vld [vmem:[%s8 + $0x10] sm:$0xf]
        %v5960 = vld [vmem:[%s8 + $0x14] sm:$0xf]
        %v5961 = vld [vmem:[%s8 + $0x18] sm:$0xf]
        %v5962 = vld [vmem:[%s8 + $0x1c] sm:$0xf]
        %v5963 = vld [vmem:[%s8 + $0x20] sm:$0xf]
        %v5964 = vld [vmem:[%s8 + $0x24] sm:$0xf]
        %v5965 = vld [vmem:[%s8 + $0x28] sm:$0xf]
        %v5966 = vld [vmem:[%s8 + $0x2c] sm:$0xf]
        %v5979 = vunpack.c.l.b16 %v5955
        %v5980 = vunpack.c.l.b16 %v5956
        %v5981 = vunpack.c.l.b16 %v5957
        %v5982 = vunpack.c.l.b16 %v5958
        %v5983 = vunpack.c.l.b16 %v5959
        %v5984 = vunpack.c.l.b16 %v5960
        %v5985 = vunpack.c.l.b16 %v5961
        %v5986 = vunpack.c.l.b16 %v5962
        %v5987 = vunpack.c.l.b16 %v5963
        %v5988 = vunpack.c.l.b16 %v5964
        %v5989 = vunpack.c.l.b16 %v5965
        %v5990 = vunpack.c.l.b16 %v5966
        %v5991 = vpack.c.b16 %v5980, %v5979
        %v5992 = vpack.c.b16 %v5982, %v5981
        %v5993 = vpack.c.b16 %v5984, %v5983
        %v5994 = vpack.c.b16 %v5986, %v5985
        %v5995 = vpack.c.b16 %v5988, %v5987
        %v5996 = vpack.c.b16 %v5990, %v5989
        %v6004 = vsel %vm769, %v5939, 0
        %v6007 = vsel %vm769, %v5940, 0
        %v6010 = vsel %vm769, %v5941, 0
        %v6013 = vsel %vm769, %v5942, 0
        %v6016 = vsel %vm769, %v5943, 0
        %v6019 = vsel %vm769, %v5944, 0
        %v6022 = vsel %vm769, %v5945, 0
        %v6025 = vsel %vm769, %v5946, 0
        %v6028 = vsel %vm769, %v5947, 0
        %v6031 = vsel %vm769, %v5948, 0
        %v6034 = vsel %vm769, %v5949, 0
        %v6037 = vsel %vm769, %v5950, 0
        %v6040 = vsel %vm769, %v5951, 0
        %v6043 = vsel %vm769, %v5952, 0
        %v6046 = vsel %vm769, %v5953, 0
        %v6049 = vsel %vm769, %v5954, 0
        %6051 = vmatpush.bf16.msra.mxu0 0
        %6052 = vmatpush.bf16.msra.mxu0 0
        %6053 = vmatpush.bf16.msra.mxu0 %v5996
        %6054 = vmatpush.bf16.msra.mxu0 %v5995
        %6055 = vmatpush.bf16.msra.mxu0 %v5994
        %6056 = vmatpush.bf16.msra.mxu0 %v5993
        %6057 = vmatpush.bf16.msra.mxu0 %v5992
        %6058 = vmatpush.bf16.msra.mxu0 %v5991
        %6059 = vmatmul.bf16.gmra.mxu0 %v6004
        %v6060 = vpop.f32.mrf.mxu0
        %v6061 = vadd.f32 0.0, %v6060
        %v6062 = vpop.f32.mrf.mxu0
        %v6063 = vadd.f32 0.0, %v6062
        %6064 = vmatmul.bf16.gmra.mxu0 %v6007
        %v6065 = vpop.f32.mrf.mxu0
        %v6066 = vadd.f32 0.0, %v6065
        %v6067 = vpop.f32.mrf.mxu0
        %v6068 = vadd.f32 0.0, %v6067
        %6069 = vmatmul.bf16.gmra.mxu0 %v6010
        %v6070 = vpop.f32.mrf.mxu0
        %v6071 = vadd.f32 0.0, %v6070
        %v6072 = vpop.f32.mrf.mxu0
        %v6073 = vadd.f32 0.0, %v6072
        %6074 = vmatmul.bf16.gmra.mxu0 %v6013
        %v6075 = vpop.f32.mrf.mxu0
        %v6076 = vadd.f32 0.0, %v6075
        %v6077 = vpop.f32.mrf.mxu0
        %v6078 = vadd.f32 0.0, %v6077
        %6079 = vmatmul.bf16.gmra.mxu0 %v6016
        %v6080 = vpop.f32.mrf.mxu0
        %v6081 = vadd.f32 0.0, %v6080
        %v6082 = vpop.f32.mrf.mxu0
        %v6083 = vadd.f32 0.0, %v6082
        %6084 = vmatmul.bf16.gmra.mxu0 %v6019
        %v6085 = vpop.f32.mrf.mxu0
        %v6086 = vadd.f32 0.0, %v6085
        %v6087 = vpop.f32.mrf.mxu0
        %v6088 = vadd.f32 0.0, %v6087
        %6089 = vmatmul.bf16.gmra.mxu0 %v6022
        %v6090 = vpop.f32.mrf.mxu0
        %v6091 = vadd.f32 0.0, %v6090
        %v6092 = vpop.f32.mrf.mxu0
        %v6093 = vadd.f32 0.0, %v6092
        %6094 = vmatmul.bf16.gmra.mxu0 %v6025
        %v6095 = vpop.f32.mrf.mxu0
        %v6096 = vadd.f32 0.0, %v6095
        %v6097 = vpop.f32.mrf.mxu0
        %v6098 = vadd.f32 0.0, %v6097
        %6099 = vmatmul.bf16.gmra.mxu0 %v6028
        %v6100 = vpop.f32.mrf.mxu0
        %v6101 = vadd.f32 0.0, %v6100
        %v6102 = vpop.f32.mrf.mxu0
        %v6103 = vadd.f32 0.0, %v6102
        %6104 = vmatmul.bf16.gmra.mxu0 %v6031
        %v6105 = vpop.f32.mrf.mxu0
        %v6106 = vadd.f32 0.0, %v6105
        %v6107 = vpop.f32.mrf.mxu0
        %v6108 = vadd.f32 0.0, %v6107
        %6109 = vmatmul.bf16.gmra.mxu0 %v6034
        %v6110 = vpop.f32.mrf.mxu0
        %v6111 = vadd.f32 0.0, %v6110
        %v6112 = vpop.f32.mrf.mxu0
        %v6113 = vadd.f32 0.0, %v6112
        %6114 = vmatmul.bf16.gmra.mxu0 %v6037
        %v6115 = vpop.f32.mrf.mxu0
        %v6116 = vadd.f32 0.0, %v6115
        %v6117 = vpop.f32.mrf.mxu0
        %v6118 = vadd.f32 0.0, %v6117
        %6119 = vmatmul.bf16.gmra.mxu0 %v6040
        %v6120 = vpop.f32.mrf.mxu0
        %v6121 = vadd.f32 0.0, %v6120
        %v6122 = vpop.f32.mrf.mxu0
        %v6123 = vadd.f32 0.0, %v6122
        %6124 = vmatmul.bf16.gmra.mxu0 %v6043
        %v6125 = vpop.f32.mrf.mxu0
        %v6126 = vadd.f32 0.0, %v6125
        %v6127 = vpop.f32.mrf.mxu0
        %v6128 = vadd.f32 0.0, %v6127
        %6129 = vmatmul.bf16.gmra.mxu0 %v6046
        %v6130 = vpop.f32.mrf.mxu0
        %v6131 = vadd.f32 0.0, %v6130
        %v6132 = vpop.f32.mrf.mxu0
        %v6133 = vadd.f32 0.0, %v6132
        %6134 = vmatmul.bf16.gmra.mxu0 %v6049
        %v6135 = vpop.f32.mrf.mxu0
        %v6136 = vadd.f32 0.0, %v6135
        %v6137 = vpop.f32.mrf.mxu0
        %v6138 = vadd.f32 0.0, %v6137
        %6139 = vdwg.mxu0
        %v6140 = vadd.f32 %v5875, %v6061
        %v6141 = vadd.f32 %v5876, %v6063
        %v6142 = vadd.f32 %v5877, %v6066
        %v6143 = vadd.f32 %v5878, %v6068
        %v6144 = vadd.f32 %v5879, %v6071
        %v6145 = vadd.f32 %v5880, %v6073
        %v6146 = vadd.f32 %v5881, %v6076
        %v6147 = vadd.f32 %v5882, %v6078
        %v6148 = vadd.f32 %v5883, %v6081
        %v6149 = vadd.f32 %v5884, %v6083
        %v6150 = vadd.f32 %v5885, %v6086
        %v6151 = vadd.f32 %v5886, %v6088
        %v6152 = vadd.f32 %v5887, %v6091
        %v6153 = vadd.f32 %v5888, %v6093
        %v6154 = vadd.f32 %v5889, %v6096
        %v6155 = vadd.f32 %v5890, %v6098
        %v6156 = vadd.f32 %v5891, %v6101
        %v6157 = vadd.f32 %v5892, %v6103
        %v6158 = vadd.f32 %v5893, %v6106
        %v6159 = vadd.f32 %v5894, %v6108
        %v6160 = vadd.f32 %v5895, %v6111
        %v6161 = vadd.f32 %v5896, %v6113
        %v6162 = vadd.f32 %v5897, %v6116
        %v6163 = vadd.f32 %v5898, %v6118
        %v6164 = vadd.f32 %v5899, %v6121
        %v6165 = vadd.f32 %v5900, %v6123
        %v6166 = vadd.f32 %v5901, %v6126
        %v6167 = vadd.f32 %v5902, %v6128
        %v6168 = vadd.f32 %v5903, %v6131
        %v6169 = vadd.f32 %v5904, %v6133
        %v6170 = vadd.f32 %v5905, %v6136
        %v6171 = vadd.f32 %v5906, %v6138
        %v6172 = vld [vmem:[%s5] sm:$0x1]
        %v6174 = vperm.slane %v6172, 0
        %v6176 = vadd.f32 %v6140, %v6174
        %v6177 = vadd.f32 %v6141, %v6174
        %v6178 = vadd.f32 %v6142, %v6174
        %v6179 = vadd.f32 %v6143, %v6174
        %v6180 = vadd.f32 %v6144, %v6174
        %v6181 = vadd.f32 %v6145, %v6174
        %v6182 = vadd.f32 %v6146, %v6174
        %v6183 = vadd.f32 %v6147, %v6174
        %v6184 = vadd.f32 %v6148, %v6174
        %v6185 = vadd.f32 %v6149, %v6174
        %v6186 = vadd.f32 %v6150, %v6174
        %v6187 = vadd.f32 %v6151, %v6174
        %v6188 = vadd.f32 %v6152, %v6174
        %v6189 = vadd.f32 %v6153, %v6174
        %v6190 = vadd.f32 %v6154, %v6174
        %v6191 = vadd.f32 %v6155, %v6174
        %v6192 = vadd.f32 %v6156, %v6174
        %v6193 = vadd.f32 %v6157, %v6174
        %v6194 = vadd.f32 %v6158, %v6174
        %v6195 = vadd.f32 %v6159, %v6174
        %v6196 = vadd.f32 %v6160, %v6174
        %v6197 = vadd.f32 %v6161, %v6174
        %v6198 = vadd.f32 %v6162, %v6174
        %v6199 = vadd.f32 %v6163, %v6174
        %v6200 = vadd.f32 %v6164, %v6174
        %v6201 = vadd.f32 %v6165, %v6174
        %v6202 = vadd.f32 %v6166, %v6174
        %v6203 = vadd.f32 %v6167, %v6174
        %v6204 = vadd.f32 %v6168, %v6174
        %v6205 = vadd.f32 %v6169, %v6174
        %v6206 = vadd.f32 %v6170, %v6174
        %v6207 = vadd.f32 %v6171, %v6174
        %6208 = vst [vmem:[%s346] sm:$0xff] %v6176
        %6209 = vst [vmem:[%s346 + $0x8] sm:$0xff] %v6177
        %6210 = vst [vmem:[%s346 + $0x10] sm:$0xff] %v6178
        %6211 = vst [vmem:[%s346 + $0x18] sm:$0xff] %v6179
        %6212 = vst [vmem:[%s346 + $0x20] sm:$0xff] %v6180
        %6213 = vst [vmem:[%s346 + $0x28] sm:$0xff] %v6181
        %6214 = vst [vmem:[%s346 + $0x30] sm:$0xff] %v6182
        %6215 = vst [vmem:[%s346 + $0x38] sm:$0xff] %v6183
        %6216 = vst [vmem:[%s346 + $0x40] sm:$0xff] %v6184
        %6217 = vst [vmem:[%s346 + $0x48] sm:$0xff] %v6185
        %6218 = vst [vmem:[%s346 + $0x50] sm:$0xff] %v6186
        %6219 = vst [vmem:[%s346 + $0x58] sm:$0xff] %v6187
        %6220 = vst [vmem:[%s346 + $0x60] sm:$0xff] %v6188
        %6221 = vst [vmem:[%s346 + $0x68] sm:$0xff] %v6189
        %6222 = vst [vmem:[%s346 + $0x70] sm:$0xff] %v6190
        %6223 = vst [vmem:[%s346 + $0x78] sm:$0xff] %v6191
        %6224 = vst [vmem:[%s346 + $0x80] sm:$0xff] %v6192
        %6225 = vst [vmem:[%s346 + $0x88] sm:$0xff] %v6193
        %6226 = vst [vmem:[%s346 + $0x90] sm:$0xff] %v6194
        %6227 = vst [vmem:[%s346 + $0x98] sm:$0xff] %v6195
        %6228 = vst [vmem:[%s346 + $0xa0] sm:$0xff] %v6196
        %6229 = vst [vmem:[%s346 + $0xa8] sm:$0xff] %v6197
        %6230 = vst [vmem:[%s346 + $0xb0] sm:$0xff] %v6198
        %6231 = vst [vmem:[%s346 + $0xb8] sm:$0xff] %v6199
        %6232 = vst [vmem:[%s346 + $0xc0] sm:$0xff] %v6200
        %6233 = vst [vmem:[%s346 + $0xc8] sm:$0xff] %v6201
        %6234 = vst [vmem:[%s346 + $0xd0] sm:$0xff] %v6202
        %6235 = vst [vmem:[%s346 + $0xd8] sm:$0xff] %v6203
        %6236 = vst [vmem:[%s346 + $0xe0] sm:$0xff] %v6204
        %6237 = vst [vmem:[%s346 + $0xe8] sm:$0xff] %v6205
        %6238 = vst [vmem:[%s346 + $0xf0] sm:$0xff] %v6206
        %6239 = vst [vmem:[%s346 + $0xf8] sm:$0xff] %v6207
        %s6240 = sand.u32 %s230, 1
        %s6241 = scalar_lea.sflag [#allocation3], %s6240
        %s6242 = sand.u32 %s230, 1
        %s6243 = smul.addr %s6242, 256
        %s6244 = scalar_lea.vmem [#allocation2], %s6243
        // Predicated region
        $region57: #{window_attention.1} parent=55 // pred_check
          %p6245 = pneg %p240
        $region58: #{window_attention.1} parent=55 // pred_check_branch
          %6247 = sbr.rel (%p6245) target = $region60
        $region59: #{window_attention.1} parent=55 // pred_region
          %s6248 = smul.u32 4, %s23
          %6250 = vsyncadd %s6241, 0
          %s6251 = smul.addr %s6248, 8
          %s6252 = smul.addr %s6251, 8
          %s6253 = scalar_lea.hbm %s9, %s6252
          %s6254 = sshll.u32 %s6244, 4
          %s6255 = int_to_ptr.vmem [resolvable:$true] %s6254
          %s6256 = sshll.u32 %s6253, 4
          %s6257 = int_to_ptr.hbm [resolvable:$true] %s6256
          %6262 = dma.vmem_to_hbm [thread:$0]  %s6255, 4096, %s6257, %s6241, 128, 128, 8
        $region60: #{window_attention.1} parent=55 // pred_fallthru
          _
      $region56: #{window_attention.1} parent=5 // pred_fallthru
        _
      %p6263 = scmp.le.s32.totalorder 2, %s18
      // Predicated region
      $region61: #{window_attention.1} parent=5 // pred_check
        %p6264 = pneg %p6263
      $region62: #{window_attention.1} parent=5 // pred_check_branch
        %6266 = sbr.rel (%p6264) target = $region64
      $region63: #{window_attention.1} parent=5 // pred_region
        %s6267 = ssub.s32 %s18, 2
        // Predicated region
        $region65: #{window_attention.1} parent=63 // pred_check
          %p6268 = pneg %p246
        $region66: #{window_attention.1} parent=63 // pred_check_branch
          %6270 = sbr.rel (%p6268) target = $region68
        $region67: #{window_attention.1} parent=63 // pred_region
          %s6271 = sand.u32 %s231, 1
          %s6272 = scalar_lea.sflag [#allocation3], %s6271
          %s6273 = sand.u32 %s231, 1
          %s6274 = smul.addr %s6273, 256
          %s6275 = scalar_lea.vmem [#allocation2], %s6274
          %6277 = dma.done %s6272, 4096
        $region68: #{window_attention.1} parent=63 // pred_fallthru
          _
      $region64: #{window_attention.1} parent=5 // pred_fallthru
        _
    $region6: #{window_attention.1} parent=1 // loop_footer
      %s22 = sadd.s32 1, %s18
    $region7: #{window_attention.1} parent=1 // loop_footer_branch
      %17 = sbr.rel target = $region3
    $region8: #{window_attention.1} parent=1 // loop_exit
      _
    %6278 = vsyncpa [#allocation3], 1
    %s6279 = scalar_lea.sflag [#allocation3], 1
    %6280 = vsyncpa %s6279, 1

</llo_original>
